<compile_context>
chip_gen: v7x
topology: tpu7x:2x2x1
jax: 0.10.0
libtpu: 0.0.40
codegen_flags: <defaults>
</compile_context>

<pallas_src>
import math
import jax
import jax.numpy as jnp
from jax.experimental import pallas as pl
from jax.experimental.pallas import tpu as pltpu


# ----------------------------------------------------------------------------
# Fused kernel: y[b0:b0+bb] = fc_out( MHA( x[b0:b0+bb] @ Wqkv + bqkv ) )
# ----------------------------------------------------------------------------
def make_mha_kernel(num_heads, head_dim, model_dim, seq_len, batch_block):
    D = model_dim
    S = seq_len
    bb = batch_block
    hd = head_dim
    M = bb * S  # projection matmul M-dim (256 when bb=2, S=128)

    def mha_kernel(x_ref, wqkv_ref, bqkv_ref, wo_ref, bo_ref, o_ref,
                   qkv_ref, ctx_ref):
        # x_ref:    (bb, S, D) f32
        # wqkv_ref: (D, 3D)    bf16   columns = [Wq.T*scale | Wk.T | Wv.T]
        # bqkv_ref: (1, 3D)    f32    [bq*scale | bk | bv]
        # wo_ref:   (D, D)     bf16   (Wo.T)
        # bo_ref:   (1, D)     f32
        # o_ref:    (bb, S, D) f32    lane-dense output slab
        # qkv_ref:  VMEM scratch (M, 3D) bf16
        # ctx_ref:  VMEM scratch (M, D)  bf16

        # One big MXU matmul for Q, K, V of all bb batches (M x 3D), f32 acc,
        # bias added once, then cast to bf16 into the VMEM working copy.
        x = x_ref[...].reshape(M, D).astype(jnp.bfloat16)
        qkv_ref[...] = (
            jnp.dot(x, wqkv_ref[...], preferred_element_type=jnp.float32)
            + bqkv_ref[...]
        ).astype(jnp.bfloat16)

        for b in range(bb):                              # static unroll (small bb)
            row0 = b * S
            rows = pl.ds(row0, S)
            for h in range(num_heads):                   # static unroll
                # bf16 slices straight from the VMEM scratch (scale already folded).
                q = qkv_ref[rows, pl.ds(h * hd, hd)]
                k = qkv_ref[rows, pl.ds(D + h * hd, hd)]
                v = qkv_ref[rows, pl.ds(2 * D + h * hd, hd)]

                # scores (S, S): contract over head_dim (no explicit K^T).
                s = jnp.einsum("qd,kd->qk", q, k,
                               preferred_element_type=jnp.float32)

                # numerically-stable softmax; normalization deferred to post-PV.
                m = jnp.max(s, axis=-1, keepdims=True)
                e = jnp.exp(s - m)                                    # f32, <= 1
                l = jnp.sum(e, axis=-1, keepdims=True)                # (S, 1) f32

                # (S, S) @ (S, hd) on the MXU, then normalize the small tile.
                acc = jnp.dot(e.astype(jnp.bfloat16), v,
                              preferred_element_type=jnp.float32)      # (S, hd) f32
                out_h = acc * pl.reciprocal(l, approx=True)            # EUP slot

                ctx_ref[rows, pl.ds(h * hd, hd)] = out_h.astype(jnp.bfloat16)

        # Output projection at M = bb*S, f32 accumulation.
        out = jnp.dot(ctx_ref[...], wo_ref[...],
                      preferred_element_type=jnp.float32) + bo_ref[...]
        o_ref[...] = out.reshape(bb, S, D).astype(o_ref.dtype)

    return mha_kernel


# ----------------------------------------------------------------------------
# One-time parameter packing (hoisted out of the per-call path)
# ----------------------------------------------------------------------------
def pack_params(params, num_heads):
    """Pack nn.Linear-style params into the kernel layout.  Call ONCE at init."""
    D = params["wq"].shape[0]
    scale = 1.0 / math.sqrt(D // num_heads)      # 0.125 for hd=64 -> exact in bf16
    wqkv_t = jnp.concatenate(
        [(params["wq"].T * scale), params["wk"].T, params["wv"].T], axis=1
    ).astype(jnp.bfloat16)                                               # (D, 3D)
    bqkv = jnp.concatenate(
        [params["bq"] * scale, params["bk"], params["bv"]]
    ).reshape(1, 3 * D).astype(jnp.float32)                              # (1, 3D)
    wo_t = params["wo"].T.astype(jnp.bfloat16)                           # (D, D)
    bo = params["bo"].reshape(1, D).astype(jnp.float32)                  # (1, D)
    return {"wqkv_t": wqkv_t, "bqkv": bqkv, "wo_t": wo_t, "bo": bo}


def _pick_batch_block(B):
    # Fill M=256 on the projection matmuls (256-wide MXUs on v6e/v7x) while
    # keeping >= 2 parallel grid steps (v7x has 2 TensorCores per chip).
    if B % 2 == 0 and B >= 4:
        return 2
    return 1


def multihead_attention(x, packed, num_heads, batch_block=None):
    """x: (B, S, D) f32; packed: output of pack_params. Returns (B, S, D) f32."""
    B, S, D = x.shape
    assert D % num_heads == 0
    head_dim = D // num_heads

    bb = _pick_batch_block(B) if batch_block is None else batch_block
    assert B % bb == 0, "batch must be divisible by batch_block"

    kernel = make_mha_kernel(num_heads, head_dim, D, S, bb)

    return pl.pallas_call(
        kernel,
        out_shape=jax.ShapeDtypeStruct((B, S, D), jnp.float32),
        grid_spec=pltpu.PrefetchScalarGridSpec(
            num_scalar_prefetch=0,
            grid=(B // bb,),
            in_specs=[
                pl.BlockSpec((bb, S, D), lambda i: (i, 0, 0)),      # x block (f32)
                pl.BlockSpec((D, 3 * D), lambda i: (0, 0)),         # packed Wqkv.T
                pl.BlockSpec((1, 3 * D), lambda i: (0, 0)),         # packed bias
                pl.BlockSpec((D, D), lambda i: (0, 0)),             # Wo.T
                pl.BlockSpec((1, D), lambda i: (0, 0)),             # bo
            ],
            out_specs=pl.BlockSpec((bb, S, D), lambda i: (i, 0, 0)),
            scratch_shapes=[
                pltpu.VMEM((bb * S, 3 * D), jnp.bfloat16),          # qkv working copy
                pltpu.VMEM((bb * S, D), jnp.bfloat16),              # ctx (head merge)
            ],
        ),
        compiler_params=pltpu.CompilerParams(
            dimension_semantics=("parallel",)),
    )(x, packed["wqkv_t"], packed["bqkv"], packed["wo_t"], packed["bo"])


# ----------------------------------------------------------------------------
# Init + pure-JAX f32 reference (mirrors the PyTorch forward)
# ----------------------------------------------------------------------------
def init_params(key, model_dim):
    ks = jax.random.split(key, 8)
    scale = 1.0 / math.sqrt(model_dim)
    return {
        "wq": jax.random.normal(ks[0], (model_dim, model_dim), jnp.float32) * scale,
        "bq": jax.random.normal(ks[1], (model_dim,), jnp.float32) * 0.01,
        "wk": jax.random.normal(ks[2], (model_dim, model_dim), jnp.float32) * scale,
        "bk": jax.random.normal(ks[3], (model_dim,), jnp.float32) * 0.01,
        "wv": jax.random.normal(ks[4], (model_dim, model_dim), jnp.float32) * scale,
        "bv": jax.random.normal(ks[5], (model_dim,), jnp.float32) * 0.01,
        "wo": jax.random.normal(ks[6], (model_dim, model_dim), jnp.float32) * scale,
        "bo": jax.random.normal(ks[7], (model_dim,), jnp.float32) * 0.01,
    }


def reference_forward(x, params, num_heads):
    B, S, D = x.shape
    hd = D // num_heads
    q = x @ params["wq"].T + params["bq"]
    k = x @ params["wk"].T + params["bk"]
    v = x @ params["wv"].T + params["bv"]
    q = q.reshape(B, S, num_heads, hd).transpose(0, 2, 1, 3)
    k = k.reshape(B, S, num_heads, hd).transpose(0, 2, 1, 3)
    v = v.reshape(B, S, num_heads, hd).transpose(0, 2, 1, 3)
    s = jnp.einsum("bhqd,bhkd->bhqk", q, k) / math.sqrt(hd)
    p = jax.nn.softmax(s, axis=-1)
    o = jnp.einsum("bhqk,bhkd->bhqd", p, v)
    o = o.transpose(0, 2, 1, 3).reshape(B, S, D)
    return o @ params["wo"].T + params["bo"]


if __name__ == "__main__":
    # Small shapes consistent with the module (model_dim divisible by num_heads).
    # batch=4 exercises the batch_block=2 path (M=256 projections, grid=(2,)).
    batch, seq_len, model_dim, num_heads = 4, 128, 256, 4

    key = jax.random.PRNGKey(0)
    kx, kp = jax.random.split(key)
    x = jax.random.normal(kx, (batch, seq_len, model_dim), jnp.float32)
    params = init_params(kp, model_dim)
    packed = pack_params(params, num_heads)          # one-time packing

    out = multihead_attention(x, packed, num_heads)
    out = jax.block_until_ready(out)

    ref = reference_forward(x, params, num_heads)
    assert out.shape == (batch, seq_len, model_dim)
    # Tolerance reflects bf16 matmul operands (f32 accumulation) and the
    # approximate EUP reciprocal vs. a pure-f32 reference; a real bug would
    # produce O(1) errors.
    max_err = float(jnp.max(jnp.abs(out - ref)))
    assert jnp.allclose(out, ref, atol=3e-2, rtol=3e-2), (
        f"mismatch vs reference (max abs err {max_err:.4e})")

    print("KERNEL_OK")
</pallas_src>

<mosaic_0001>
module attributes {stable_mosaic.version = 11 : i64} {
  func.func @mha_kernel(%arg0: i32, %arg1: memref<2x128x256xf32, #tpu.memory_space<vmem>>, %arg2: memref<256x768xbf16, #tpu.memory_space<vmem>>, %arg3: memref<1x768xf32, #tpu.memory_space<vmem>>, %arg4: memref<256x256xbf16, #tpu.memory_space<vmem>>, %arg5: memref<1x256xf32, #tpu.memory_space<vmem>>, %arg6: memref<2x128x256xf32, #tpu.memory_space<vmem>>, %arg7: memref<256x768xbf16, #tpu.memory_space<vmem>>, %arg8: memref<256x256xbf16, #tpu.memory_space<vmem>>) attributes {dimension_semantics = [#tpu.dimension_semantics<parallel>], iteration_bounds = array<i64: 2>, scalar_prefetch = 0 : i64, scratch_operands = 2 : i64, tpu.core_type = #tpu.core_type<tc>, window_params = [{transform_indices = @transform_0, window_bounds = array<i64: 2, 128, 256>}, {pipeline_mode = #tpu.pipeline_mode<synchronous>, transform_indices = @transform_1, window_bounds = array<i64: 256, 768>}, {pipeline_mode = #tpu.pipeline_mode<synchronous>, transform_indices = @transform_2, window_bounds = array<i64: 1, 768>}, {pipeline_mode = #tpu.pipeline_mode<synchronous>, transform_indices = @transform_3, window_bounds = array<i64: 256, 256>}, {pipeline_mode = #tpu.pipeline_mode<synchronous>, transform_indices = @transform_4, window_bounds = array<i64: 1, 256>}, {transform_indices = @transform_5, window_bounds = array<i64: 2, 128, 256>}]} {
    %c0 = arith.constant 0 : index
    %c0_0 = arith.constant 0 : index
    %c0_1 = arith.constant 0 : index
    %0 = vector.load %arg1[%c0, %c0_0, %c0_1] : memref<2x128x256xf32, #tpu.memory_space<vmem>>, vector<2x128x256xf32>
    %1 = vector.shape_cast %0 : vector<2x128x256xf32> to vector<256x256xf32>
    %2 = arith.truncf %1 : vector<256x256xf32> to vector<256x256xbf16>
    %c0_2 = arith.constant 0 : index
    %c0_3 = arith.constant 0 : index
    %3 = vector.load %arg2[%c0_2, %c0_3] : memref<256x768xbf16, #tpu.memory_space<vmem>>, vector<256x768xbf16>
    %cst = arith.constant dense<0.000000e+00> : vector<256x768xf32>
    %4 = tpu.matmul %2, %3, %cst {dimension_numbers = #tpu.dot_dimension_numbers<[1], [0], [0], [1], [0, 0, 1, 1], [], []>} : vector<256x256xbf16>, vector<256x768xbf16>, vector<256x768xf32> -> vector<256x768xf32>
    %c0_4 = arith.constant 0 : index
    %c0_5 = arith.constant 0 : index
    %5 = vector.load %arg3[%c0_4, %c0_5] : memref<1x768xf32, #tpu.memory_space<vmem>>, vector<1x768xf32>
    %6 = vector.broadcast %5 : vector<1x768xf32> to vector<256x768xf32>
    %7 = arith.addf %4, %6 : vector<256x768xf32>
    %8 = arith.truncf %7 : vector<256x768xf32> to vector<256x768xbf16>
    %c0_6 = arith.constant 0 : index
    %c0_7 = arith.constant 0 : index
    %9 = vector.load %arg7[%c0_6, %c0_7] : memref<256x768xbf16, #tpu.memory_space<vmem>>, vector<256x768xbf16>
    tpu.vector_store %arg7[%c0_6, %c0_7], %8 {strides = array<i32>} : memref<256x768xbf16, #tpu.memory_space<vmem>>, vector<256x768xbf16>,
    %c0_8 = arith.constant 0 : index
    %c0_9 = arith.constant 0 : index
    %10 = vector.load %arg7[%c0_8, %c0_9] : memref<256x768xbf16, #tpu.memory_space<vmem>>, vector<128x64xbf16>
    %c0_10 = arith.constant 0 : index
    %c256 = arith.constant 256 : index
    %11 = vector.load %arg7[%c0_10, %c256] : memref<256x768xbf16, #tpu.memory_space<vmem>>, vector<128x64xbf16>
    %c0_11 = arith.constant 0 : index
    %c512 = arith.constant 512 : index
    %12 = vector.load %arg7[%c0_11, %c512] : memref<256x768xbf16, #tpu.memory_space<vmem>>, vector<128x64xbf16>
    "tpu.trace_start"() <{level = 10 : i32, message = "qd,kd->qk"}> : () -> ()
    %cst_12 = arith.constant dense<0.000000e+00> : vector<128x128xf32>
    %13 = tpu.matmul %10, %11, %cst_12 {dimension_numbers = #tpu.dot_dimension_numbers<[1], [1], [0], [0], [0, 0, 1, 0], [], []>} : vector<128x64xbf16>, vector<128x64xbf16>, vector<128x128xf32> -> vector<128x128xf32>
    "tpu.trace_stop"() : () -> ()
    %cst_13 = arith.constant dense<0xFF800000> : vector<128xf32>
    %14 = vector.multi_reduction <maximumf>, %13, %cst_13 [1] : vector<128x128xf32> to vector<128xf32>
    %15 = vector.shape_cast %14 : vector<128xf32> to vector<128x1xf32>
    %16 = vector.broadcast %15 : vector<128x1xf32> to vector<128x128xf32>
    %17 = arith.subf %13, %16 : vector<128x128xf32>
    %18 = math.exp %17 : vector<128x128xf32>
    %cst_14 = arith.constant dense<0.000000e+00> : vector<128xf32>
    %19 = vector.multi_reduction <add>, %18, %cst_14 [1] : vector<128x128xf32> to vector<128xf32>
    %20 = vector.shape_cast %19 : vector<128xf32> to vector<128x1xf32>
    %21 = arith.truncf %18 : vector<128x128xf32> to vector<128x128xbf16>
    %cst_15 = arith.constant dense<0.000000e+00> : vector<128x64xf32>
    %22 = tpu.matmul %21, %12, %cst_15 {dimension_numbers = #tpu.dot_dimension_numbers<[1], [0], [0], [1], [0, 0, 1, 1], [], []>} : vector<128x128xbf16>, vector<128x64xbf16>, vector<128x64xf32> -> vector<128x64xf32>
    %23 = tpu.reciprocal %20 {approx = true} : vector<128x1xf32> -> vector<128x1xf32>
    %24 = vector.broadcast %23 : vector<128x1xf32> to vector<128x64xf32>
    %25 = arith.mulf %22, %24 : vector<128x64xf32>
    %26 = arith.truncf %25 : vector<128x64xf32> to vector<128x64xbf16>
    %c0_16 = arith.constant 0 : index
    %c0_17 = arith.constant 0 : index
    %27 = vector.load %arg8[%c0_16, %c0_17] : memref<256x256xbf16, #tpu.memory_space<vmem>>, vector<128x64xbf16>
    tpu.vector_store %arg8[%c0_16, %c0_17], %26 {strides = array<i32>} : memref<256x256xbf16, #tpu.memory_space<vmem>>, vector<128x64xbf16>,
    %c0_18 = arith.constant 0 : index
    %c64 = arith.constant 64 : index
    %28 = vector.load %arg7[%c0_18, %c64] : memref<256x768xbf16, #tpu.memory_space<vmem>>, vector<128x64xbf16>
    %c0_19 = arith.constant 0 : index
    %c320 = arith.constant 320 : index
    %29 = vector.load %arg7[%c0_19, %c320] : memref<256x768xbf16, #tpu.memory_space<vmem>>, vector<128x64xbf16>
    %c0_20 = arith.constant 0 : index
    %c576 = arith.constant 576 : index
    %30 = vector.load %arg7[%c0_20, %c576] : memref<256x768xbf16, #tpu.memory_space<vmem>>, vector<128x64xbf16>
    "tpu.trace_start"() <{level = 10 : i32, message = "qd,kd->qk"}> : () -> ()
    %cst_21 = arith.constant dense<0.000000e+00> : vector<128x128xf32>
    %31 = tpu.matmul %28, %29, %cst_21 {dimension_numbers = #tpu.dot_dimension_numbers<[1], [1], [0], [0], [0, 0, 1, 0], [], []>} : vector<128x64xbf16>, vector<128x64xbf16>, vector<128x128xf32> -> vector<128x128xf32>
    "tpu.trace_stop"() : () -> ()
    %cst_22 = arith.constant dense<0xFF800000> : vector<128xf32>
    %32 = vector.multi_reduction <maximumf>, %31, %cst_22 [1] : vector<128x128xf32> to vector<128xf32>
    %33 = vector.shape_cast %32 : vector<128xf32> to vector<128x1xf32>
    %34 = vector.broadcast %33 : vector<128x1xf32> to vector<128x128xf32>
    %35 = arith.subf %31, %34 : vector<128x128xf32>
    %36 = math.exp %35 : vector<128x128xf32>
    %cst_23 = arith.constant dense<0.000000e+00> : vector<128xf32>
    %37 = vector.multi_reduction <add>, %36, %cst_23 [1] : vector<128x128xf32> to vector<128xf32>
    %38 = vector.shape_cast %37 : vector<128xf32> to vector<128x1xf32>
    %39 = arith.truncf %36 : vector<128x128xf32> to vector<128x128xbf16>
    %cst_24 = arith.constant dense<0.000000e+00> : vector<128x64xf32>
    %40 = tpu.matmul %39, %30, %cst_24 {dimension_numbers = #tpu.dot_dimension_numbers<[1], [0], [0], [1], [0, 0, 1, 1], [], []>} : vector<128x128xbf16>, vector<128x64xbf16>, vector<128x64xf32> -> vector<128x64xf32>
    %41 = tpu.reciprocal %38 {approx = true} : vector<128x1xf32> -> vector<128x1xf32>
    %42 = vector.broadcast %41 : vector<128x1xf32> to vector<128x64xf32>
    %43 = arith.mulf %40, %42 : vector<128x64xf32>
    %44 = arith.truncf %43 : vector<128x64xf32> to vector<128x64xbf16>
    %c0_25 = arith.constant 0 : index
    %c64_26 = arith.constant 64 : index
    %45 = vector.load %arg8[%c0_25, %c64_26] : memref<256x256xbf16, #tpu.memory_space<vmem>>, vector<128x64xbf16>
    tpu.vector_store %arg8[%c0_25, %c64_26], %44 {strides = array<i32>} : memref<256x256xbf16, #tpu.memory_space<vmem>>, vector<128x64xbf16>,
    %c0_27 = arith.constant 0 : index
    %c128 = arith.constant 128 : index
    %46 = vector.load %arg7[%c0_27, %c128] : memref<256x768xbf16, #tpu.memory_space<vmem>>, vector<128x64xbf16>
    %c0_28 = arith.constant 0 : index
    %c384 = arith.constant 384 : index
    %47 = vector.load %arg7[%c0_28, %c384] : memref<256x768xbf16, #tpu.memory_space<vmem>>, vector<128x64xbf16>
    %c0_29 = arith.constant 0 : index
    %c640 = arith.constant 640 : index
    %48 = vector.load %arg7[%c0_29, %c640] : memref<256x768xbf16, #tpu.memory_space<vmem>>, vector<128x64xbf16>
    "tpu.trace_start"() <{level = 10 : i32, message = "qd,kd->qk"}> : () -> ()
    %cst_30 = arith.constant dense<0.000000e+00> : vector<128x128xf32>
    %49 = tpu.matmul %46, %47, %cst_30 {dimension_numbers = #tpu.dot_dimension_numbers<[1], [1], [0], [0], [0, 0, 1, 0], [], []>} : vector<128x64xbf16>, vector<128x64xbf16>, vector<128x128xf32> -> vector<128x128xf32>
    "tpu.trace_stop"() : () -> ()
    %cst_31 = arith.constant dense<0xFF800000> : vector<128xf32>
    %50 = vector.multi_reduction <maximumf>, %49, %cst_31 [1] : vector<128x128xf32> to vector<128xf32>
    %51 = vector.shape_cast %50 : vector<128xf32> to vector<128x1xf32>
    %52 = vector.broadcast %51 : vector<128x1xf32> to vector<128x128xf32>
    %53 = arith.subf %49, %52 : vector<128x128xf32>
    %54 = math.exp %53 : vector<128x128xf32>
    %cst_32 = arith.constant dense<0.000000e+00> : vector<128xf32>
    %55 = vector.multi_reduction <add>, %54, %cst_32 [1] : vector<128x128xf32> to vector<128xf32>
    %56 = vector.shape_cast %55 : vector<128xf32> to vector<128x1xf32>
    %57 = arith.truncf %54 : vector<128x128xf32> to vector<128x128xbf16>
    %cst_33 = arith.constant dense<0.000000e+00> : vector<128x64xf32>
    %58 = tpu.matmul %57, %48, %cst_33 {dimension_numbers = #tpu.dot_dimension_numbers<[1], [0], [0], [1], [0, 0, 1, 1], [], []>} : vector<128x128xbf16>, vector<128x64xbf16>, vector<128x64xf32> -> vector<128x64xf32>
    %59 = tpu.reciprocal %56 {approx = true} : vector<128x1xf32> -> vector<128x1xf32>
    %60 = vector.broadcast %59 : vector<128x1xf32> to vector<128x64xf32>
    %61 = arith.mulf %58, %60 : vector<128x64xf32>
    %62 = arith.truncf %61 : vector<128x64xf32> to vector<128x64xbf16>
    %c0_34 = arith.constant 0 : index
    %c128_35 = arith.constant 128 : index
    %63 = vector.load %arg8[%c0_34, %c128_35] : memref<256x256xbf16, #tpu.memory_space<vmem>>, vector<128x64xbf16>
    tpu.vector_store %arg8[%c0_34, %c128_35], %62 {strides = array<i32>} : memref<256x256xbf16, #tpu.memory_space<vmem>>, vector<128x64xbf16>,
    %c0_36 = arith.constant 0 : index
    %c192 = arith.constant 192 : index
    %64 = vector.load %arg7[%c0_36, %c192] : memref<256x768xbf16, #tpu.memory_space<vmem>>, vector<128x64xbf16>
    %c0_37 = arith.constant 0 : index
    %c448 = arith.constant 448 : index
    %65 = vector.load %arg7[%c0_37, %c448] : memref<256x768xbf16, #tpu.memory_space<vmem>>, vector<128x64xbf16>
    %c0_38 = arith.constant 0 : index
    %c704 = arith.constant 704 : index
    %66 = vector.load %arg7[%c0_38, %c704] : memref<256x768xbf16, #tpu.memory_space<vmem>>, vector<128x64xbf16>
    "tpu.trace_start"() <{level = 10 : i32, message = "qd,kd->qk"}> : () -> ()
    %cst_39 = arith.constant dense<0.000000e+00> : vector<128x128xf32>
    %67 = tpu.matmul %64, %65, %cst_39 {dimension_numbers = #tpu.dot_dimension_numbers<[1], [1], [0], [0], [0, 0, 1, 0], [], []>} : vector<128x64xbf16>, vector<128x64xbf16>, vector<128x128xf32> -> vector<128x128xf32>
    "tpu.trace_stop"() : () -> ()
    %cst_40 = arith.constant dense<0xFF800000> : vector<128xf32>
    %68 = vector.multi_reduction <maximumf>, %67, %cst_40 [1] : vector<128x128xf32> to vector<128xf32>
    %69 = vector.shape_cast %68 : vector<128xf32> to vector<128x1xf32>
    %70 = vector.broadcast %69 : vector<128x1xf32> to vector<128x128xf32>
    %71 = arith.subf %67, %70 : vector<128x128xf32>
    %72 = math.exp %71 : vector<128x128xf32>
    %cst_41 = arith.constant dense<0.000000e+00> : vector<128xf32>
    %73 = vector.multi_reduction <add>, %72, %cst_41 [1] : vector<128x128xf32> to vector<128xf32>
    %74 = vector.shape_cast %73 : vector<128xf32> to vector<128x1xf32>
    %75 = arith.truncf %72 : vector<128x128xf32> to vector<128x128xbf16>
    %cst_42 = arith.constant dense<0.000000e+00> : vector<128x64xf32>
    %76 = tpu.matmul %75, %66, %cst_42 {dimension_numbers = #tpu.dot_dimension_numbers<[1], [0], [0], [1], [0, 0, 1, 1], [], []>} : vector<128x128xbf16>, vector<128x64xbf16>, vector<128x64xf32> -> vector<128x64xf32>
    %77 = tpu.reciprocal %74 {approx = true} : vector<128x1xf32> -> vector<128x1xf32>
    %78 = vector.broadcast %77 : vector<128x1xf32> to vector<128x64xf32>
    %79 = arith.mulf %76, %78 : vector<128x64xf32>
    %80 = arith.truncf %79 : vector<128x64xf32> to vector<128x64xbf16>
    %c0_43 = arith.constant 0 : index
    %c192_44 = arith.constant 192 : index
    %81 = vector.load %arg8[%c0_43, %c192_44] : memref<256x256xbf16, #tpu.memory_space<vmem>>, vector<128x64xbf16>
    tpu.vector_store %arg8[%c0_43, %c192_44], %80 {strides = array<i32>} : memref<256x256xbf16, #tpu.memory_space<vmem>>, vector<128x64xbf16>,
    %c128_45 = arith.constant 128 : index
    %c0_46 = arith.constant 0 : index
    %82 = vector.load %arg7[%c128_45, %c0_46] : memref<256x768xbf16, #tpu.memory_space<vmem>>, vector<128x64xbf16>
    %c128_47 = arith.constant 128 : index
    %c256_48 = arith.constant 256 : index
    %83 = vector.load %arg7[%c128_47, %c256_48] : memref<256x768xbf16, #tpu.memory_space<vmem>>, vector<128x64xbf16>
    %c128_49 = arith.constant 128 : index
    %c512_50 = arith.constant 512 : index
    %84 = vector.load %arg7[%c128_49, %c512_50] : memref<256x768xbf16, #tpu.memory_space<vmem>>, vector<128x64xbf16>
    "tpu.trace_start"() <{level = 10 : i32, message = "qd,kd->qk"}> : () -> ()
    %cst_51 = arith.constant dense<0.000000e+00> : vector<128x128xf32>
    %85 = tpu.matmul %82, %83, %cst_51 {dimension_numbers = #tpu.dot_dimension_numbers<[1], [1], [0], [0], [0, 0, 1, 0], [], []>} : vector<128x64xbf16>, vector<128x64xbf16>, vector<128x128xf32> -> vector<128x128xf32>
    "tpu.trace_stop"() : () -> ()
    %cst_52 = arith.constant dense<0xFF800000> : vector<128xf32>
    %86 = vector.multi_reduction <maximumf>, %85, %cst_52 [1] : vector<128x128xf32> to vector<128xf32>
    %87 = vector.shape_cast %86 : vector<128xf32> to vector<128x1xf32>
    %88 = vector.broadcast %87 : vector<128x1xf32> to vector<128x128xf32>
    %89 = arith.subf %85, %88 : vector<128x128xf32>
    %90 = math.exp %89 : vector<128x128xf32>
    %cst_53 = arith.constant dense<0.000000e+00> : vector<128xf32>
    %91 = vector.multi_reduction <add>, %90, %cst_53 [1] : vector<128x128xf32> to vector<128xf32>
    %92 = vector.shape_cast %91 : vector<128xf32> to vector<128x1xf32>
    %93 = arith.truncf %90 : vector<128x128xf32> to vector<128x128xbf16>
    %cst_54 = arith.constant dense<0.000000e+00> : vector<128x64xf32>
    %94 = tpu.matmul %93, %84, %cst_54 {dimension_numbers = #tpu.dot_dimension_numbers<[1], [0], [0], [1], [0, 0, 1, 1], [], []>} : vector<128x128xbf16>, vector<128x64xbf16>, vector<128x64xf32> -> vector<128x64xf32>
    %95 = tpu.reciprocal %92 {approx = true} : vector<128x1xf32> -> vector<128x1xf32>
    %96 = vector.broadcast %95 : vector<128x1xf32> to vector<128x64xf32>
    %97 = arith.mulf %94, %96 : vector<128x64xf32>
    %98 = arith.truncf %97 : vector<128x64xf32> to vector<128x64xbf16>
    %c128_55 = arith.constant 128 : index
    %c0_56 = arith.constant 0 : index
    %99 = vector.load %arg8[%c128_55, %c0_56] : memref<256x256xbf16, #tpu.memory_space<vmem>>, vector<128x64xbf16>
    tpu.vector_store %arg8[%c128_55, %c0_56], %98 {strides = array<i32>} : memref<256x256xbf16, #tpu.memory_space<vmem>>, vector<128x64xbf16>,
    %c128_57 = arith.constant 128 : index
    %c64_58 = arith.constant 64 : index
    %100 = vector.load %arg7[%c128_57, %c64_58] : memref<256x768xbf16, #tpu.memory_space<vmem>>, vector<128x64xbf16>
    %c128_59 = arith.constant 128 : index
    %c320_60 = arith.constant 320 : index
    %101 = vector.load %arg7[%c128_59, %c320_60] : memref<256x768xbf16, #tpu.memory_space<vmem>>, vector<128x64xbf16>
    %c128_61 = arith.constant 128 : index
    %c576_62 = arith.constant 576 : index
    %102 = vector.load %arg7[%c128_61, %c576_62] : memref<256x768xbf16, #tpu.memory_space<vmem>>, vector<128x64xbf16>
    "tpu.trace_start"() <{level = 10 : i32, message = "qd,kd->qk"}> : () -> ()
    %cst_63 = arith.constant dense<0.000000e+00> : vector<128x128xf32>
    %103 = tpu.matmul %100, %101, %cst_63 {dimension_numbers = #tpu.dot_dimension_numbers<[1], [1], [0], [0], [0, 0, 1, 0], [], []>} : vector<128x64xbf16>, vector<128x64xbf16>, vector<128x128xf32> -> vector<128x128xf32>
    "tpu.trace_stop"() : () -> ()
    %cst_64 = arith.constant dense<0xFF800000> : vector<128xf32>
    %104 = vector.multi_reduction <maximumf>, %103, %cst_64 [1] : vector<128x128xf32> to vector<128xf32>
    %105 = vector.shape_cast %104 : vector<128xf32> to vector<128x1xf32>
    %106 = vector.broadcast %105 : vector<128x1xf32> to vector<128x128xf32>
    %107 = arith.subf %103, %106 : vector<128x128xf32>
    %108 = math.exp %107 : vector<128x128xf32>
    %cst_65 = arith.constant dense<0.000000e+00> : vector<128xf32>
    %109 = vector.multi_reduction <add>, %108, %cst_65 [1] : vector<128x128xf32> to vector<128xf32>
    %110 = vector.shape_cast %109 : vector<128xf32> to vector<128x1xf32>
    %111 = arith.truncf %108 : vector<128x128xf32> to vector<128x128xbf16>
    %cst_66 = arith.constant dense<0.000000e+00> : vector<128x64xf32>
    %112 = tpu.matmul %111, %102, %cst_66 {dimension_numbers = #tpu.dot_dimension_numbers<[1], [0], [0], [1], [0, 0, 1, 1], [], []>} : vector<128x128xbf16>, vector<128x64xbf16>, vector<128x64xf32> -> vector<128x64xf32>
    %113 = tpu.reciprocal %110 {approx = true} : vector<128x1xf32> -> vector<128x1xf32>
    %114 = vector.broadcast %113 : vector<128x1xf32> to vector<128x64xf32>
    %115 = arith.mulf %112, %114 : vector<128x64xf32>
    %116 = arith.truncf %115 : vector<128x64xf32> to vector<128x64xbf16>
    %c128_67 = arith.constant 128 : index
    %c64_68 = arith.constant 64 : index
    %117 = vector.load %arg8[%c128_67, %c64_68] : memref<256x256xbf16, #tpu.memory_space<vmem>>, vector<128x64xbf16>
    tpu.vector_store %arg8[%c128_67, %c64_68], %116 {strides = array<i32>} : memref<256x256xbf16, #tpu.memory_space<vmem>>, vector<128x64xbf16>,
    %c128_69 = arith.constant 128 : index
    %c128_70 = arith.constant 128 : index
    %118 = vector.load %arg7[%c128_69, %c128_70] : memref<256x768xbf16, #tpu.memory_space<vmem>>, vector<128x64xbf16>
    %c128_71 = arith.constant 128 : index
    %c384_72 = arith.constant 384 : index
    %119 = vector.load %arg7[%c128_71, %c384_72] : memref<256x768xbf16, #tpu.memory_space<vmem>>, vector<128x64xbf16>
    %c128_73 = arith.constant 128 : index
    %c640_74 = arith.constant 640 : index
    %120 = vector.load %arg7[%c128_73, %c640_74] : memref<256x768xbf16, #tpu.memory_space<vmem>>, vector<128x64xbf16>
    "tpu.trace_start"() <{level = 10 : i32, message = "qd,kd->qk"}> : () -> ()
    %cst_75 = arith.constant dense<0.000000e+00> : vector<128x128xf32>
    %121 = tpu.matmul %118, %119, %cst_75 {dimension_numbers = #tpu.dot_dimension_numbers<[1], [1], [0], [0], [0, 0, 1, 0], [], []>} : vector<128x64xbf16>, vector<128x64xbf16>, vector<128x128xf32> -> vector<128x128xf32>
    "tpu.trace_stop"() : () -> ()
    %cst_76 = arith.constant dense<0xFF800000> : vector<128xf32>
    %122 = vector.multi_reduction <maximumf>, %121, %cst_76 [1] : vector<128x128xf32> to vector<128xf32>
    %123 = vector.shape_cast %122 : vector<128xf32> to vector<128x1xf32>
    %124 = vector.broadcast %123 : vector<128x1xf32> to vector<128x128xf32>
    %125 = arith.subf %121, %124 : vector<128x128xf32>
    %126 = math.exp %125 : vector<128x128xf32>
    %cst_77 = arith.constant dense<0.000000e+00> : vector<128xf32>
    %127 = vector.multi_reduction <add>, %126, %cst_77 [1] : vector<128x128xf32> to vector<128xf32>
    %128 = vector.shape_cast %127 : vector<128xf32> to vector<128x1xf32>
    %129 = arith.truncf %126 : vector<128x128xf32> to vector<128x128xbf16>
    %cst_78 = arith.constant dense<0.000000e+00> : vector<128x64xf32>
    %130 = tpu.matmul %129, %120, %cst_78 {dimension_numbers = #tpu.dot_dimension_numbers<[1], [0], [0], [1], [0, 0, 1, 1], [], []>} : vector<128x128xbf16>, vector<128x64xbf16>, vector<128x64xf32> -> vector<128x64xf32>
    %131 = tpu.reciprocal %128 {approx = true} : vector<128x1xf32> -> vector<128x1xf32>
    %132 = vector.broadcast %131 : vector<128x1xf32> to vector<128x64xf32>
    %133 = arith.mulf %130, %132 : vector<128x64xf32>
    %134 = arith.truncf %133 : vector<128x64xf32> to vector<128x64xbf16>
    %c128_79 = arith.constant 128 : index
    %c128_80 = arith.constant 128 : index
    %135 = vector.load %arg8[%c128_79, %c128_80] : memref<256x256xbf16, #tpu.memory_space<vmem>>, vector<128x64xbf16>
    tpu.vector_store %arg8[%c128_79, %c128_80], %134 {strides = array<i32>} : memref<256x256xbf16, #tpu.memory_space<vmem>>, vector<128x64xbf16>,
    %c128_81 = arith.constant 128 : index
    %c192_82 = arith.constant 192 : index
    %136 = vector.load %arg7[%c128_81, %c192_82] : memref<256x768xbf16, #tpu.memory_space<vmem>>, vector<128x64xbf16>
    %c128_83 = arith.constant 128 : index
    %c448_84 = arith.constant 448 : index
    %137 = vector.load %arg7[%c128_83, %c448_84] : memref<256x768xbf16, #tpu.memory_space<vmem>>, vector<128x64xbf16>
    %c128_85 = arith.constant 128 : index
    %c704_86 = arith.constant 704 : index
    %138 = vector.load %arg7[%c128_85, %c704_86] : memref<256x768xbf16, #tpu.memory_space<vmem>>, vector<128x64xbf16>
    "tpu.trace_start"() <{level = 10 : i32, message = "qd,kd->qk"}> : () -> ()
    %cst_87 = arith.constant dense<0.000000e+00> : vector<128x128xf32>
    %139 = tpu.matmul %136, %137, %cst_87 {dimension_numbers = #tpu.dot_dimension_numbers<[1], [1], [0], [0], [0, 0, 1, 0], [], []>} : vector<128x64xbf16>, vector<128x64xbf16>, vector<128x128xf32> -> vector<128x128xf32>
    "tpu.trace_stop"() : () -> ()
    %cst_88 = arith.constant dense<0xFF800000> : vector<128xf32>
    %140 = vector.multi_reduction <maximumf>, %139, %cst_88 [1] : vector<128x128xf32> to vector<128xf32>
    %141 = vector.shape_cast %140 : vector<128xf32> to vector<128x1xf32>
    %142 = vector.broadcast %141 : vector<128x1xf32> to vector<128x128xf32>
    %143 = arith.subf %139, %142 : vector<128x128xf32>
    %144 = math.exp %143 : vector<128x128xf32>
    %cst_89 = arith.constant dense<0.000000e+00> : vector<128xf32>
    %145 = vector.multi_reduction <add>, %144, %cst_89 [1] : vector<128x128xf32> to vector<128xf32>
    %146 = vector.shape_cast %145 : vector<128xf32> to vector<128x1xf32>
    %147 = arith.truncf %144 : vector<128x128xf32> to vector<128x128xbf16>
    %cst_90 = arith.constant dense<0.000000e+00> : vector<128x64xf32>
    %148 = tpu.matmul %147, %138, %cst_90 {dimension_numbers = #tpu.dot_dimension_numbers<[1], [0], [0], [1], [0, 0, 1, 1], [], []>} : vector<128x128xbf16>, vector<128x64xbf16>, vector<128x64xf32> -> vector<128x64xf32>
    %149 = tpu.reciprocal %146 {approx = true} : vector<128x1xf32> -> vector<128x1xf32>
    %150 = vector.broadcast %149 : vector<128x1xf32> to vector<128x64xf32>
    %151 = arith.mulf %148, %150 : vector<128x64xf32>
    %152 = arith.truncf %151 : vector<128x64xf32> to vector<128x64xbf16>
    %c128_91 = arith.constant 128 : index
    %c192_92 = arith.constant 192 : index
    %153 = vector.load %arg8[%c128_91, %c192_92] : memref<256x256xbf16, #tpu.memory_space<vmem>>, vector<128x64xbf16>
    tpu.vector_store %arg8[%c128_91, %c192_92], %152 {strides = array<i32>} : memref<256x256xbf16, #tpu.memory_space<vmem>>, vector<128x64xbf16>,
    %c0_93 = arith.constant 0 : index
    %c0_94 = arith.constant 0 : index
    %154 = vector.load %arg8[%c0_93, %c0_94] : memref<256x256xbf16, #tpu.memory_space<vmem>>, vector<256x256xbf16>
    %c0_95 = arith.constant 0 : index
    %c0_96 = arith.constant 0 : index
    %155 = vector.load %arg4[%c0_95, %c0_96] : memref<256x256xbf16, #tpu.memory_space<vmem>>, vector<256x256xbf16>
    %cst_97 = arith.constant dense<0.000000e+00> : vector<256x256xf32>
    %156 = tpu.matmul %154, %155, %cst_97 {dimension_numbers = #tpu.dot_dimension_numbers<[1], [0], [0], [1], [0, 0, 1, 1], [], []>} : vector<256x256xbf16>, vector<256x256xbf16>, vector<256x256xf32> -> vector<256x256xf32>
    %c0_98 = arith.constant 0 : index
    %c0_99 = arith.constant 0 : index
    %157 = vector.load %arg5[%c0_98, %c0_99] : memref<1x256xf32, #tpu.memory_space<vmem>>, vector<1x256xf32>
    %158 = vector.broadcast %157 : vector<1x256xf32> to vector<256x256xf32>
    %159 = arith.addf %156, %158 : vector<256x256xf32>
    %160 = vector.shape_cast %159 : vector<256x256xf32> to vector<2x128x256xf32>
    %c0_100 = arith.constant 0 : index
    %c0_101 = arith.constant 0 : index
    %c0_102 = arith.constant 0 : index
    %161 = vector.load %arg6[%c0_100, %c0_101, %c0_102] : memref<2x128x256xf32, #tpu.memory_space<vmem>>, vector<2x128x256xf32>
    tpu.vector_store %arg6[%c0_100, %c0_101, %c0_102], %160 {strides = array<i32>} : memref<2x128x256xf32, #tpu.memory_space<vmem>>, vector<2x128x256xf32>,
    return
  }
  func.func @transform_0(%arg0: i32) -> (i32, i32, i32) {
    %c0_i32 = arith.constant 0 : i32
    %c0_i32_0 = arith.constant 0 : i32
    %c0_i32_1 = arith.constant 0 : i32
    return %arg0, %c0_i32, %c0_i32_0 : i32, i32, i32
  }
  func.func @transform_1(%arg0: i32) -> (i32, i32) {
    %c0_i32 = arith.constant 0 : i32
    %c0_i32_0 = arith.constant 0 : i32
    %c0_i32_1 = arith.constant 0 : i32
    return %c0_i32, %c0_i32_0 : i32, i32
  }
  func.func @transform_2(%arg0: i32) -> (i32, i32) {
    %c0_i32 = arith.constant 0 : i32
    %c0_i32_0 = arith.constant 0 : i32
    %c0_i32_1 = arith.constant 0 : i32
    return %c0_i32, %c0_i32_0 : i32, i32
  }
  func.func @transform_3(%arg0: i32) -> (i32, i32) {
    %c0_i32 = arith.constant 0 : i32
    %c0_i32_0 = arith.constant 0 : i32
    %c0_i32_1 = arith.constant 0 : i32
    return %c0_i32, %c0_i32_0 : i32, i32
  }
  func.func @transform_4(%arg0: i32) -> (i32, i32) {
    %c0_i32 = arith.constant 0 : i32
    %c0_i32_0 = arith.constant 0 : i32
    %c0_i32_1 = arith.constant 0 : i32
    return %c0_i32, %c0_i32_0 : i32, i32
  }
  func.func @transform_5(%arg0: i32) -> (i32, i32, i32) {
    %c0_i32 = arith.constant 0 : i32
    %c0_i32_0 = arith.constant 0 : i32
    %c0_i32_1 = arith.constant 0 : i32
    return %arg0, %c0_i32, %c0_i32_0 : i32, i32, i32
  }
}

</mosaic_0001>

<llo_original>
// kernel: tpu_custom_call.1
$region0: #{tpu_custom_call.1}
  #allocation0 [shape = 'u32[]', space=smem, size = 0x4, offset = 0x4, fixed_abs, tag = 'smem constant byte address 0x4 - core index']
  #allocation1 [shape = 'u32[144,128]{1,0:T(1,128)}', space=vmem, size = 0x12000, scoped, tag = 'internal scratch']
  #allocation2 [shape = 'bf16[256,768]{1,0:T(16,128)(2,1)}', space=vmem, size = 0x60000, scoped, tag = 'scratch operand']
  #allocation3 [shape = 'bf16[256,256]{1,0:T(16,128)(2,1)}', space=vmem, size = 0x20000, scoped, tag = 'scratch operand']
  %s0 = inlined_call_operand.hbm [shape: f32[4,128,256], index: 0, kind: input, shape index: {}]
  %s1 = inlined_call_operand.hbm [shape: bf16[256,768], index: 1, kind: input, shape index: {}]
  %s2 = inlined_call_operand.vmem [shape: f32[1,768], index: 2, kind: input, shape index: {}]
  %s3 = inlined_call_operand.hbm [shape: bf16[256,256], index: 3, kind: input, shape index: {}]
  %s4 = inlined_call_operand.vmem [shape: f32[1,256], index: 4, kind: input, shape index: {}]
  %s5 = inlined_call_operand.hbm [shape: f32[4,128,256], index: 5, kind: output, shape index: {}]
  %s6 = sld [smem:[#allocation0]]
  $region65: #{tpu_custom_call.1} parent=0
    _
  %s8 = ssub.s32 1, %s6
  %s9 = scalar_select 0, %s8, %s6
  $region1: #{tpu_custom_call.1} parent=0
    #allocation4 [shape = 'u8[524288]{0}', space=vmem, size = 0x80000, scoped, tag = 'input window, operand 0']
    #allocation5 [shape = 's32[2]{0}', space=sflag, size = 0x8, scoped, tag = 'scoped memory for tpu_custom_call.1']
    #allocation6 [shape = 's32[2]{0}', space=sflag, size = 0x8, scoped, tag = 'scoped memory for tpu_custom_call.1']
    #allocation7 [shape = 'u8[393216]{0}', space=vmem, size = 0x60000, scoped, tag = 'input window, operand 1, single buffered']
    #allocation8 [shape = 's32[1]{0}', space=sflag, size = 0x4, scoped, tag = 'scoped memory for tpu_custom_call.1']
    #allocation9 [shape = 'u8[131072]{0}', space=vmem, size = 0x20000, scoped, tag = 'input window, operand 3, single buffered']
    #allocation10 [shape = 'u8[524288]{0}', space=vmem, size = 0x80000, scoped, tag = 'output window, operand 0']
    %10 = vsyncpa [#allocation5], 0
    %s11 = scalar_lea.sflag [#allocation5], 1
    %12 = vsyncpa %s11, 0
    %13 = vsyncpa [#allocation8], 0
    %14 = vsyncpa [#allocation6], 0
    %s15 = scalar_lea.sflag [#allocation6], 1
    %16 = vsyncpa %s15, 0
    loop: start=0, step=1, limit=4
    $region2: #{tpu_custom_call.1} parent=1 // loop_pre_header
      _
    $region3: #{tpu_custom_call.1} parent=1 // loop_header
      %s18 = sphi 0, %s22
      %p19 = scmp.ge.s32.totalorder %s18, 4
      %s28 = sphi 0, %s30
      %s31 = sphi 0, %s28
      %s32 = sphi 0, %s31
      %s48 = sphi 0, %s32
      %s52 = sphi 0, %s52
      %s54 = sphi 0, %s52
      %s55 = sphi 0, %s54
      %s69 = sphi 0, %s55
      %s73 = sphi 0, %s73
      %s75 = sphi 0, %s73
      %s76 = sphi 0, %s75
      %s90 = sphi 0, %s76
      %s94 = sphi 0, %s94
      %s96 = sphi 0, %s94
      %s97 = sphi 0, %s96
      %s111 = sphi 0, %s97
      %s115 = sphi 0, %s115
      %s117 = sphi 0, %s115
      %s118 = sphi 0, %s117
      %s132 = sphi 0, %s118
      %s138 = sphi 0, %s140
      %s141 = sphi 0, %s138
      %s142 = sphi 0, %s141
      %s158 = sphi 0, %s142
    $region4: #{tpu_custom_call.1} parent=1 // loop_header_branch
      %21 = sbr.rel (%p19) target = $region8
    $region5: #{tpu_custom_call.1} parent=1 // loop_body
      %s23 = ssub.s32 %s18, 1
      %s24 = ssub.s32 %s18, 2
      %s25 = sadd.s32 %s18, 1
      %s26 = ssub.s32 %s18, %s25
      %p27 = scmp.eq.s32.totalorder %s26, 0
      %s29 = sadd.s32 %s28, 1
      %s30 = scalar_select %p27, %s28, %s29
      %p33 = pneg %p27
      %p34 = scmp.eq.s32.totalorder %s18, 1
      %p35 = por %p33, %p34
      %p36 = scmp.ne.s32.totalorder %s28, %s31
      %p37 = scmp.eq.s32.totalorder %s18, 0
      %p38 = por %p36, %p37
      %p39 = scmp.ne.s32.totalorder %s28, %s31
      %p40 = scmp.eq.s32.totalorder %s23, 1
      %p41 = por %p39, %p40
      %p42 = scmp.ne.s32.totalorder %s31, %s32
      %p43 = scmp.eq.s32.totalorder %s23, 0
      %p44 = por %p42, %p43
      %p45 = scmp.ne.s32.totalorder %s31, %s32
      %p46 = scmp.eq.s32.totalorder %s24, 1
      %p47 = por %p45, %p46
      %p49 = scmp.ne.s32.totalorder %s32, %s48
      %p50 = scmp.eq.s32.totalorder %s24, 0
      %p51 = por %p49, %p50
      %s53 = sadd.s32 %s52, 1
      %p56 = scmp.eq.s32.totalorder %s18, 1
      %p57 = scmp.ne.s32.totalorder %s52, %s54
      %p58 = scmp.eq.s32.totalorder %s18, 0
      %p59 = por %p57, %p58
      %p60 = scmp.ne.s32.totalorder %s52, %s54
      %p61 = scmp.eq.s32.totalorder %s23, 1
      %p62 = por %p60, %p61
      %p63 = scmp.ne.s32.totalorder %s54, %s55
      %p64 = scmp.eq.s32.totalorder %s23, 0
      %p65 = por %p63, %p64
      %p66 = scmp.ne.s32.totalorder %s54, %s55
      %p67 = scmp.eq.s32.totalorder %s24, 1
      %p68 = por %p66, %p67
      %p70 = scmp.ne.s32.totalorder %s55, %s69
      %p71 = scmp.eq.s32.totalorder %s24, 0
      %p72 = por %p70, %p71
      %s74 = sadd.s32 %s73, 1
      %p77 = scmp.eq.s32.totalorder %s18, 1
      %p78 = scmp.ne.s32.totalorder %s73, %s75
      %p79 = scmp.eq.s32.totalorder %s18, 0
      %p80 = por %p78, %p79
      %p81 = scmp.ne.s32.totalorder %s73, %s75
      %p82 = scmp.eq.s32.totalorder %s23, 1
      %p83 = por %p81, %p82
      %p84 = scmp.ne.s32.totalorder %s75, %s76
      %p85 = scmp.eq.s32.totalorder %s23, 0
      %p86 = por %p84, %p85
      %p87 = scmp.ne.s32.totalorder %s75, %s76
      %p88 = scmp.eq.s32.totalorder %s24, 1
      %p89 = por %p87, %p88
      %p91 = scmp.ne.s32.totalorder %s76, %s90
      %p92 = scmp.eq.s32.totalorder %s24, 0
      %p93 = por %p91, %p92
      %s95 = sadd.s32 %s94, 1
      %p98 = scmp.eq.s32.totalorder %s18, 1
      %p99 = scmp.ne.s32.totalorder %s94, %s96
      %p100 = scmp.eq.s32.totalorder %s18, 0
      %p101 = por %p99, %p100
      %p102 = scmp.ne.s32.totalorder %s94, %s96
      %p103 = scmp.eq.s32.totalorder %s23, 1
      %p104 = por %p102, %p103
      %p105 = scmp.ne.s32.totalorder %s96, %s97
      %p106 = scmp.eq.s32.totalorder %s23, 0
      %p107 = por %p105, %p106
      %p108 = scmp.ne.s32.totalorder %s96, %s97
      %p109 = scmp.eq.s32.totalorder %s24, 1
      %p110 = por %p108, %p109
      %p112 = scmp.ne.s32.totalorder %s97, %s111
      %p113 = scmp.eq.s32.totalorder %s24, 0
      %p114 = por %p112, %p113
      %s116 = sadd.s32 %s115, 1
      %p119 = scmp.eq.s32.totalorder %s18, 1
      %p120 = scmp.ne.s32.totalorder %s115, %s117
      %p121 = scmp.eq.s32.totalorder %s18, 0
      %p122 = por %p120, %p121
      %p123 = scmp.ne.s32.totalorder %s115, %s117
      %p124 = scmp.eq.s32.totalorder %s23, 1
      %p125 = por %p123, %p124
      %p126 = scmp.ne.s32.totalorder %s117, %s118
      %p127 = scmp.eq.s32.totalorder %s23, 0
      %p128 = por %p126, %p127
      %p129 = scmp.ne.s32.totalorder %s117, %s118
      %p130 = scmp.eq.s32.totalorder %s24, 1
      %p131 = por %p129, %p130
      %p133 = scmp.ne.s32.totalorder %s118, %s132
      %p134 = scmp.eq.s32.totalorder %s24, 0
      %p135 = por %p133, %p134
      %s136 = ssub.s32 %s18, %s25
      %p137 = scmp.eq.s32.totalorder %s136, 0
      %s139 = sadd.s32 %s138, 1
      %s140 = scalar_select %p137, %s138, %s139
      %p143 = pneg %p137
      %p144 = scmp.eq.s32.totalorder %s18, 1
      %p145 = por %p143, %p144
      %p146 = scmp.ne.s32.totalorder %s138, %s141
      %p147 = scmp.eq.s32.totalorder %s18, 0
      %p148 = por %p146, %p147
      %p149 = scmp.ne.s32.totalorder %s138, %s141
      %p150 = scmp.eq.s32.totalorder %s23, 1
      %p151 = por %p149, %p150
      %p152 = scmp.ne.s32.totalorder %s141, %s142
      %p153 = scmp.eq.s32.totalorder %s23, 0
      %p154 = por %p152, %p153
      %p155 = scmp.ne.s32.totalorder %s141, %s142
      %p156 = scmp.eq.s32.totalorder %s24, 1
      %p157 = por %p155, %p156
      %p159 = scmp.ne.s32.totalorder %s142, %s158
      %p160 = scmp.eq.s32.totalorder %s24, 0
      %p161 = por %p159, %p160
      %p162 = scmp.le.s32.totalorder 1, %s18
      %p163 = scmp.lt.s32.totalorder %s18, 3
      %p164 = pnand %p162, %p163
      %p165 = pneg %p164
      // Predicated region
      $region9: #{tpu_custom_call.1} parent=5 // pred_check
        _
      $region10: #{tpu_custom_call.1} parent=5 // pred_check_branch
        %167 = sbr.rel (%p164) target = $region12
      $region11: #{tpu_custom_call.1} parent=5 // pred_region
        %s168 = ssub.s32 %s18, 1
        // Predicated region
        $region13: #{tpu_custom_call.1} parent=11 // pred_check
          %p169 = pneg %p65
        $region14: #{tpu_custom_call.1} parent=11 // pred_check_branch
          %171 = sbr.rel (%p169) target = $region16
        $region15: #{tpu_custom_call.1} parent=11 // pred_region
          %s173 = ssub.s32 12288, 12288
          %174 = vsyncadd [#allocation8], %s173
          %s175 = sshll.u32 [#allocation7], 4
          %s176 = int_to_ptr.vmem [resolvable:$true] %s175
          %181 = dma.hbm_to_vmem [thread:$0]  %s1, 12288, %s176, [#allocation8], 384, 384, 24
        $region16: #{tpu_custom_call.1} parent=11 // pred_fallthru
          _
        // Predicated region
        $region17: #{tpu_custom_call.1} parent=11 // pred_check
          %p182 = pneg %p86
        $region18: #{tpu_custom_call.1} parent=11 // pred_check_branch
          %184 = sbr.rel (%p182) target = $region20
        $region19: #{tpu_custom_call.1} parent=11 // pred_region
          _
        $region20: #{tpu_custom_call.1} parent=11 // pred_fallthru
          _
        // Predicated region
        $region21: #{tpu_custom_call.1} parent=11 // pred_check
          %p185 = pneg %p107
        $region22: #{tpu_custom_call.1} parent=11 // pred_check_branch
          %187 = sbr.rel (%p185) target = $region24
        $region23: #{tpu_custom_call.1} parent=11 // pred_region
          %s189 = ssub.s32 4096, 4096
          %190 = vsyncadd [#allocation8], %s189
          %s191 = sshll.u32 [#allocation9], 4
          %s192 = int_to_ptr.vmem [resolvable:$true] %s191
          %197 = dma.hbm_to_vmem [thread:$0]  %s3, 4096, %s192, [#allocation8], 128, 128, 8
        $region24: #{tpu_custom_call.1} parent=11 // pred_fallthru
          _
        // Predicated region
        $region25: #{tpu_custom_call.1} parent=11 // pred_check
          %p198 = pneg %p128
        $region26: #{tpu_custom_call.1} parent=11 // pred_check_branch
          %200 = sbr.rel (%p198) target = $region28
        $region27: #{tpu_custom_call.1} parent=11 // pred_region
          _
        $region28: #{tpu_custom_call.1} parent=11 // pred_fallthru
          _
      $region12: #{tpu_custom_call.1} parent=5 // pred_fallthru
        _
      %p201 = scmp.lt.s32.totalorder %s18, 2
      // Predicated region
      $region29: #{tpu_custom_call.1} parent=5 // pred_check
        %p202 = pneg %p201
      $region30: #{tpu_custom_call.1} parent=5 // pred_check_branch
        %204 = sbr.rel (%p202) target = $region32
      $region31: #{tpu_custom_call.1} parent=5 // pred_region
        // Predicated region
        $region33: #{tpu_custom_call.1} parent=31 // pred_check
          %p205 = pneg %p38
        $region34: #{tpu_custom_call.1} parent=31 // pred_check_branch
          %207 = sbr.rel (%p205) target = $region36
        $region35: #{tpu_custom_call.1} parent=31 // pred_region
          %s208 = sand.u32 %s28, 1
          %s209 = scalar_lea.sflag [#allocation5], %s208
          %s210 = sand.u32 %s28, 1
          %s211 = smul.addr %s210, 512
          %s212 = scalar_lea.vmem [#allocation4], %s211
          %s213 = smul.u32 2, %s18
          %s215 = ssub.s32 8192, 8192
          %216 = vsyncadd %s209, %s215
          %s217 = smul.addr %s213, 32
          %s218 = smul.addr %s217, 128
          %s219 = scalar_lea.hbm %s0, %s218
          %s220 = sshll.u32 %s212, 4
          %s221 = int_to_ptr.vmem [resolvable:$true] %s220
          %226 = dma.hbm_to_vmem [thread:$0]  %s219, 8192, %s221, %s209, 256, 256, 16
        $region36: #{tpu_custom_call.1} parent=31 // pred_fallthru
          _
      $region32: #{tpu_custom_call.1} parent=5 // pred_fallthru
        _
      %p227 = scmp.le.s32.totalorder 1, %s18
      %p228 = scmp.lt.s32.totalorder %s18, 3
      %p229 = pnand %p227, %p228
      %p230 = pneg %p229
      // Predicated region
      $region37: #{tpu_custom_call.1} parent=5 // pred_check
        _
      $region38: #{tpu_custom_call.1} parent=5 // pred_check_branch
        %232 = sbr.rel (%p229) target = $region40
      $region39: #{tpu_custom_call.1} parent=5 // pred_region
        %s233 = ssub.s32 %s18, 1
        %s234 = sand.u32 %s31, 1
        %s235 = scalar_lea.sflag [#allocation5], %s234
        %s236 = sand.u32 %s31, 1
        %s237 = smul.addr %s236, 512
        %s238 = scalar_lea.vmem [#allocation4], %s237
        // Predicated region
        $region41: #{tpu_custom_call.1} parent=39 // pred_check
          %p239 = pneg %p44
        $region42: #{tpu_custom_call.1} parent=39 // pred_check_branch
          %241 = sbr.rel (%p239) target = $region44
        $region43: #{tpu_custom_call.1} parent=39 // pred_region
          %242 = dma.done %s235, 8192
        $region44: #{tpu_custom_call.1} parent=39 // pred_fallthru
          _
        // Predicated region
        $region45: #{tpu_custom_call.1} parent=39 // pred_check
          %p243 = pneg %p65
        $region46: #{tpu_custom_call.1} parent=39 // pred_check_branch
          %245 = sbr.rel (%p243) target = $region48
        $region47: #{tpu_custom_call.1} parent=39 // pred_region
          %246 = dma.done [#allocation8], 12288
        $region48: #{tpu_custom_call.1} parent=39 // pred_fallthru
          _
        // Predicated region
        $region49: #{tpu_custom_call.1} parent=39 // pred_check
          %p247 = pneg %p107
        $region50: #{tpu_custom_call.1} parent=39 // pred_check_branch
          %249 = sbr.rel (%p247) target = $region52
        $region51: #{tpu_custom_call.1} parent=39 // pred_region
          %250 = dma.done [#allocation8], 4096
        $region52: #{tpu_custom_call.1} parent=39 // pred_fallthru
          _
        %s251 = sand.u32 %s31, 1
        %s252 = scalar_lea.sflag [#allocation5], %s251
        %s253 = sand.u32 %s31, 1
        %s254 = smul.addr %s253, 512
        %s255 = scalar_lea.vmem [#allocation4], %s254
        %p256 = pneg %p44
        %p257 = pneg %p41
        %p258 = pneg %p65
        %p259 = pneg %p62
        %p260 = pneg %p86
        %p261 = pneg %p83
        %p262 = pneg %p107
        %p263 = pneg %p104
        %p264 = pneg %p128
        %p265 = pneg %p125
        %p266 = pneg %p154
        %p267 = pneg %p151
        %s268 = sand.u32 %s141, 1
        %s269 = scalar_lea.sflag [#allocation6], %s268
        %s270 = sand.u32 %s141, 1
        %s271 = smul.addr %s270, 512
        %s272 = scalar_lea.vmem [#allocation10], %s271
        %s273 = smul.u32 2, %s23
        %s274 = smul.u32 2, %s23
        %v276 = vld [vmem:[%s238] sm:$0xff]
        %v277 = vld [vmem:[%s238 + $0x8] sm:$0xff]
        %v278 = vld [vmem:[%s238 + $0x10] sm:$0xff]
        %v279 = vld [vmem:[%s238 + $0x18] sm:$0xff]
        %v280 = vld [vmem:[%s238 + $0x20] sm:$0xff]
        %v281 = vld [vmem:[%s238 + $0x28] sm:$0xff]
        %v282 = vld [vmem:[%s238 + $0x30] sm:$0xff]
        %v283 = vld [vmem:[%s238 + $0x38] sm:$0xff]
        %v284 = vld [vmem:[%s238 + $0x40] sm:$0xff]
        %v285 = vld [vmem:[%s238 + $0x48] sm:$0xff]
        %v286 = vld [vmem:[%s238 + $0x50] sm:$0xff]
        %v287 = vld [vmem:[%s238 + $0x58] sm:$0xff]
        %v288 = vld [vmem:[%s238 + $0x60] sm:$0xff]
        %v289 = vld [vmem:[%s238 + $0x68] sm:$0xff]
        %v290 = vld [vmem:[%s238 + $0x70] sm:$0xff]
        %v291 = vld [vmem:[%s238 + $0x78] sm:$0xff]
        %v292 = vld [vmem:[%s238 + $0x80] sm:$0xff]
        %v293 = vld [vmem:[%s238 + $0x88] sm:$0xff]
        %v294 = vld [vmem:[%s238 + $0x90] sm:$0xff]
        %v295 = vld [vmem:[%s238 + $0x98] sm:$0xff]
        %v296 = vld [vmem:[%s238 + $0xa0] sm:$0xff]
        %v297 = vld [vmem:[%s238 + $0xa8] sm:$0xff]
        %v298 = vld [vmem:[%s238 + $0xb0] sm:$0xff]
        %v299 = vld [vmem:[%s238 + $0xb8] sm:$0xff]
        %v300 = vld [vmem:[%s238 + $0xc0] sm:$0xff]
        %v301 = vld [vmem:[%s238 + $0xc8] sm:$0xff]
        %v302 = vld [vmem:[%s238 + $0xd0] sm:$0xff]
        %v303 = vld [vmem:[%s238 + $0xd8] sm:$0xff]
        %v304 = vld [vmem:[%s238 + $0xe0] sm:$0xff]
        %v305 = vld [vmem:[%s238 + $0xe8] sm:$0xff]
        %v306 = vld [vmem:[%s238 + $0xf0] sm:$0xff]
        %v307 = vld [vmem:[%s238 + $0xf8] sm:$0xff]
        %v308 = vld [vmem:[%s238 + $0x100] sm:$0xff]
        %v309 = vld [vmem:[%s238 + $0x108] sm:$0xff]
        %v310 = vld [vmem:[%s238 + $0x110] sm:$0xff]
        %v311 = vld [vmem:[%s238 + $0x118] sm:$0xff]
        %v312 = vld [vmem:[%s238 + $0x120] sm:$0xff]
        %v313 = vld [vmem:[%s238 + $0x128] sm:$0xff]
        %v314 = vld [vmem:[%s238 + $0x130] sm:$0xff]
        %v315 = vld [vmem:[%s238 + $0x138] sm:$0xff]
        %v316 = vld [vmem:[%s238 + $0x140] sm:$0xff]
        %v317 = vld [vmem:[%s238 + $0x148] sm:$0xff]
        %v318 = vld [vmem:[%s238 + $0x150] sm:$0xff]
        %v319 = vld [vmem:[%s238 + $0x158] sm:$0xff]
        %v320 = vld [vmem:[%s238 + $0x160] sm:$0xff]
        %v321 = vld [vmem:[%s238 + $0x168] sm:$0xff]
        %v322 = vld [vmem:[%s238 + $0x170] sm:$0xff]
        %v323 = vld [vmem:[%s238 + $0x178] sm:$0xff]
        %v324 = vld [vmem:[%s238 + $0x180] sm:$0xff]
        %v325 = vld [vmem:[%s238 + $0x188] sm:$0xff]
        %v326 = vld [vmem:[%s238 + $0x190] sm:$0xff]
        %v327 = vld [vmem:[%s238 + $0x198] sm:$0xff]
        %v328 = vld [vmem:[%s238 + $0x1a0] sm:$0xff]
        %v329 = vld [vmem:[%s238 + $0x1a8] sm:$0xff]
        %v330 = vld [vmem:[%s238 + $0x1b0] sm:$0xff]
        %v331 = vld [vmem:[%s238 + $0x1b8] sm:$0xff]
        %v332 = vld [vmem:[%s238 + $0x1c0] sm:$0xff]
        %v333 = vld [vmem:[%s238 + $0x1c8] sm:$0xff]
        %v334 = vld [vmem:[%s238 + $0x1d0] sm:$0xff]
        %v335 = vld [vmem:[%s238 + $0x1d8] sm:$0xff]
        %v336 = vld [vmem:[%s238 + $0x1e0] sm:$0xff]
        %v337 = vld [vmem:[%s238 + $0x1e8] sm:$0xff]
        %v338 = vld [vmem:[%s238 + $0x1f0] sm:$0xff]
        %v339 = vld [vmem:[%s238 + $0x1f8] sm:$0xff]
        %v340 = vpack.c.bf16 %v278, %v276
        %v341 = vpack.c.bf16 %v279, %v277
        %v342 = vpack.c.bf16 %v282, %v280
        %v343 = vpack.c.bf16 %v283, %v281
        %v344 = vpack.c.bf16 %v286, %v284
        %v345 = vpack.c.bf16 %v287, %v285
        %v346 = vpack.c.bf16 %v290, %v288
        %v347 = vpack.c.bf16 %v291, %v289
        %v348 = vpack.c.bf16 %v294, %v292
        %v349 = vpack.c.bf16 %v295, %v293
        %v350 = vpack.c.bf16 %v298, %v296
        %v351 = vpack.c.bf16 %v299, %v297
        %v352 = vpack.c.bf16 %v302, %v300
        %v353 = vpack.c.bf16 %v303, %v301
        %v354 = vpack.c.bf16 %v306, %v304
        %v355 = vpack.c.bf16 %v307, %v305
        %v356 = vpack.c.bf16 %v310, %v308
        %v357 = vpack.c.bf16 %v311, %v309
        %v358 = vpack.c.bf16 %v314, %v312
        %v359 = vpack.c.bf16 %v315, %v313
        %v360 = vpack.c.bf16 %v318, %v316
        %v361 = vpack.c.bf16 %v319, %v317
        %v362 = vpack.c.bf16 %v322, %v320
        %v363 = vpack.c.bf16 %v323, %v321
        %v364 = vpack.c.bf16 %v326, %v324
        %v365 = vpack.c.bf16 %v327, %v325
        %v366 = vpack.c.bf16 %v330, %v328
        %v367 = vpack.c.bf16 %v331, %v329
        %v368 = vpack.c.bf16 %v334, %v332
        %v369 = vpack.c.bf16 %v335, %v333
        %v370 = vpack.c.bf16 %v338, %v336
        %v371 = vpack.c.bf16 %v339, %v337
        %v372 = vld [vmem:[#allocation7] sm:$0xff]
        %v373 = vld [vmem:[#allocation7 + $0x8] sm:$0xff]
        %v374 = vld [vmem:[#allocation7 + $0x10] sm:$0xff]
        %v375 = vld [vmem:[#allocation7 + $0x18] sm:$0xff]
        %v376 = vld [vmem:[#allocation7 + $0x20] sm:$0xff]
        %v377 = vld [vmem:[#allocation7 + $0x28] sm:$0xff]
        %v378 = vld [vmem:[#allocation7 + $0x30] sm:$0xff]
        %v379 = vld [vmem:[#allocation7 + $0x38] sm:$0xff]
        %v380 = vld [vmem:[#allocation7 + $0x40] sm:$0xff]
        %v381 = vld [vmem:[#allocation7 + $0x48] sm:$0xff]
        %v382 = vld [vmem:[#allocation7 + $0x50] sm:$0xff]
        %v383 = vld [vmem:[#allocation7 + $0x58] sm:$0xff]
        %v384 = vld [vmem:[#allocation7 + $0x60] sm:$0xff]
        %v385 = vld [vmem:[#allocation7 + $0x68] sm:$0xff]
        %v386 = vld [vmem:[#allocation7 + $0x70] sm:$0xff]
        %v387 = vld [vmem:[#allocation7 + $0x78] sm:$0xff]
        %v388 = vld [vmem:[#allocation7 + $0x80] sm:$0xff]
        %v389 = vld [vmem:[#allocation7 + $0x88] sm:$0xff]
        %v390 = vld [vmem:[#allocation7 + $0x90] sm:$0xff]
        %v391 = vld [vmem:[#allocation7 + $0x98] sm:$0xff]
        %v392 = vld [vmem:[#allocation7 + $0xa0] sm:$0xff]
        %v393 = vld [vmem:[#allocation7 + $0xa8] sm:$0xff]
        %v394 = vld [vmem:[#allocation7 + $0xb0] sm:$0xff]
        %v395 = vld [vmem:[#allocation7 + $0xb8] sm:$0xff]
        %v396 = vld [vmem:[#allocation7 + $0xc0] sm:$0xff]
        %v397 = vld [vmem:[#allocation7 + $0xc8] sm:$0xff]
        %v398 = vld [vmem:[#allocation7 + $0xd0] sm:$0xff]
        %v399 = vld [vmem:[#allocation7 + $0xd8] sm:$0xff]
        %v400 = vld [vmem:[#allocation7 + $0xe0] sm:$0xff]
        %v401 = vld [vmem:[#allocation7 + $0xe8] sm:$0xff]
        %v402 = vld [vmem:[#allocation7 + $0xf0] sm:$0xff]
        %v403 = vld [vmem:[#allocation7 + $0xf8] sm:$0xff]
        %v404 = vld [vmem:[#allocation7 + $0x100] sm:$0xff]
        %v405 = vld [vmem:[#allocation7 + $0x108] sm:$0xff]
        %v406 = vld [vmem:[#allocation7 + $0x110] sm:$0xff]
        %v407 = vld [vmem:[#allocation7 + $0x118] sm:$0xff]
        %v408 = vld [vmem:[#allocation7 + $0x120] sm:$0xff]
        %v409 = vld [vmem:[#allocation7 + $0x128] sm:$0xff]
        %v410 = vld [vmem:[#allocation7 + $0x130] sm:$0xff]
        %v411 = vld [vmem:[#allocation7 + $0x138] sm:$0xff]
        %v412 = vld [vmem:[#allocation7 + $0x140] sm:$0xff]
        %v413 = vld [vmem:[#allocation7 + $0x148] sm:$0xff]
        %v414 = vld [vmem:[#allocation7 + $0x150] sm:$0xff]
        %v415 = vld [vmem:[#allocation7 + $0x158] sm:$0xff]
        %v416 = vld [vmem:[#allocation7 + $0x160] sm:$0xff]
        %v417 = vld [vmem:[#allocation7 + $0x168] sm:$0xff]
        %v418 = vld [vmem:[#allocation7 + $0x170] sm:$0xff]
        %v419 = vld [vmem:[#allocation7 + $0x178] sm:$0xff]
        %v420 = vld [vmem:[#allocation7 + $0x180] sm:$0xff]
        %v421 = vld [vmem:[#allocation7 + $0x188] sm:$0xff]
        %v422 = vld [vmem:[#allocation7 + $0x190] sm:$0xff]
        %v423 = vld [vmem:[#allocation7 + $0x198] sm:$0xff]
        %v424 = vld [vmem:[#allocation7 + $0x1a0] sm:$0xff]
        %v425 = vld [vmem:[#allocation7 + $0x1a8] sm:$0xff]
        %v426 = vld [vmem:[#allocation7 + $0x1b0] sm:$0xff]
        %v427 = vld [vmem:[#allocation7 + $0x1b8] sm:$0xff]
        %v428 = vld [vmem:[#allocation7 + $0x1c0] sm:$0xff]
        %v429 = vld [vmem:[#allocation7 + $0x1c8] sm:$0xff]
        %v430 = vld [vmem:[#allocation7 + $0x1d0] sm:$0xff]
        %v431 = vld [vmem:[#allocation7 + $0x1d8] sm:$0xff]
        %v432 = vld [vmem:[#allocation7 + $0x1e0] sm:$0xff]
        %v433 = vld [vmem:[#allocation7 + $0x1e8] sm:$0xff]
        %v434 = vld [vmem:[#allocation7 + $0x1f0] sm:$0xff]
        %v435 = vld [vmem:[#allocation7 + $0x1f8] sm:$0xff]
        %v436 = vld [vmem:[#allocation7 + $0x200] sm:$0xff]
        %v437 = vld [vmem:[#allocation7 + $0x208] sm:$0xff]
        %v438 = vld [vmem:[#allocation7 + $0x210] sm:$0xff]
        %v439 = vld [vmem:[#allocation7 + $0x218] sm:$0xff]
        %v440 = vld [vmem:[#allocation7 + $0x220] sm:$0xff]
        %v441 = vld [vmem:[#allocation7 + $0x228] sm:$0xff]
        %v442 = vld [vmem:[#allocation7 + $0x230] sm:$0xff]
        %v443 = vld [vmem:[#allocation7 + $0x238] sm:$0xff]
        %v444 = vld [vmem:[#allocation7 + $0x240] sm:$0xff]
        %v445 = vld [vmem:[#allocation7 + $0x248] sm:$0xff]
        %v446 = vld [vmem:[#allocation7 + $0x250] sm:$0xff]
        %v447 = vld [vmem:[#allocation7 + $0x258] sm:$0xff]
        %v448 = vld [vmem:[#allocation7 + $0x260] sm:$0xff]
        %v449 = vld [vmem:[#allocation7 + $0x268] sm:$0xff]
        %v450 = vld [vmem:[#allocation7 + $0x270] sm:$0xff]
        %v451 = vld [vmem:[#allocation7 + $0x278] sm:$0xff]
        %v452 = vld [vmem:[#allocation7 + $0x280] sm:$0xff]
        %v453 = vld [vmem:[#allocation7 + $0x288] sm:$0xff]
        %v454 = vld [vmem:[#allocation7 + $0x290] sm:$0xff]
        %v455 = vld [vmem:[#allocation7 + $0x298] sm:$0xff]
        %v456 = vld [vmem:[#allocation7 + $0x2a0] sm:$0xff]
        %v457 = vld [vmem:[#allocation7 + $0x2a8] sm:$0xff]
        %v458 = vld [vmem:[#allocation7 + $0x2b0] sm:$0xff]
        %v459 = vld [vmem:[#allocation7 + $0x2b8] sm:$0xff]
        %v460 = vld [vmem:[#allocation7 + $0x2c0] sm:$0xff]
        %v461 = vld [vmem:[#allocation7 + $0x2c8] sm:$0xff]
        %v462 = vld [vmem:[#allocation7 + $0x2d0] sm:$0xff]
        %v463 = vld [vmem:[#allocation7 + $0x2d8] sm:$0xff]
        %v464 = vld [vmem:[#allocation7 + $0x2e0] sm:$0xff]
        %v465 = vld [vmem:[#allocation7 + $0x2e8] sm:$0xff]
        %v466 = vld [vmem:[#allocation7 + $0x2f0] sm:$0xff]
        %v467 = vld [vmem:[#allocation7 + $0x2f8] sm:$0xff]
        %v468 = vld [vmem:[%s2] sm:$0x3f]
        %v470 = vlaneseq
        %v471 = vshrl.u32 %v470, 7
        %v472 = vsub.s32 0, %v471
        %v473 = vrot.slane %v468, %v472
        %v474 = vlaneseq
        %v475 = vshrl.u32 %v474, 7
        %v476 = vsub.s32 1, %v475
        %v477 = vrot.slane %v468, %v476
        %v478 = vlaneseq
        %v479 = vshrl.u32 %v478, 7
        %v480 = vsub.s32 2, %v479
        %v481 = vrot.slane %v468, %v480
        %v482 = vlaneseq
        %v483 = vshrl.u32 %v482, 7
        %v484 = vsub.s32 3, %v483
        %v485 = vrot.slane %v468, %v484
        %v486 = vlaneseq
        %v487 = vshrl.u32 %v486, 7
        %v488 = vsub.s32 4, %v487
        %v489 = vrot.slane %v468, %v488
        %v490 = vlaneseq
        %v491 = vshrl.u32 %v490, 7
        %v492 = vsub.s32 5, %v491
        %v493 = vrot.slane %v468, %v492
        %v596 = vunpack.c.l.b16 %v372
        %v597 = vunpack.c.h.b16 %v372
        %v598 = vunpack.c.l.b16 %v373
        %v599 = vunpack.c.h.b16 %v373
        %v600 = vunpack.c.l.b16 %v374
        %v601 = vunpack.c.h.b16 %v374
        %v602 = vunpack.c.l.b16 %v375
        %v603 = vunpack.c.h.b16 %v375
        %v604 = vunpack.c.l.b16 %v376
        %v605 = vunpack.c.h.b16 %v376
        %v606 = vunpack.c.l.b16 %v377
        %v607 = vunpack.c.h.b16 %v377
        %v608 = vunpack.c.l.b16 %v378
        %v609 = vunpack.c.h.b16 %v378
        %v610 = vunpack.c.l.b16 %v379
        %v611 = vunpack.c.h.b16 %v379
        %v612 = vunpack.c.l.b16 %v380
        %v613 = vunpack.c.h.b16 %v380
        %v614 = vunpack.c.l.b16 %v381
        %v615 = vunpack.c.h.b16 %v381
        %v616 = vunpack.c.l.b16 %v382
        %v617 = vunpack.c.h.b16 %v382
        %v618 = vunpack.c.l.b16 %v383
        %v619 = vunpack.c.h.b16 %v383
        %v620 = vunpack.c.l.b16 %v384
        %v621 = vunpack.c.h.b16 %v384
        %v622 = vunpack.c.l.b16 %v385
        %v623 = vunpack.c.h.b16 %v385
        %v624 = vunpack.c.l.b16 %v386
        %v625 = vunpack.c.h.b16 %v386
        %v626 = vunpack.c.l.b16 %v387
        %v627 = vunpack.c.h.b16 %v387
        %v628 = vunpack.c.l.b16 %v388
        %v629 = vunpack.c.h.b16 %v388
        %v630 = vunpack.c.l.b16 %v389
        %v631 = vunpack.c.h.b16 %v389
        %v632 = vunpack.c.l.b16 %v390
        %v633 = vunpack.c.h.b16 %v390
        %v634 = vunpack.c.l.b16 %v391
        %v635 = vunpack.c.h.b16 %v391
        %v636 = vunpack.c.l.b16 %v392
        %v637 = vunpack.c.h.b16 %v392
        %v638 = vunpack.c.l.b16 %v393
        %v639 = vunpack.c.h.b16 %v393
        %v640 = vunpack.c.l.b16 %v394
        %v641 = vunpack.c.h.b16 %v394
        %v642 = vunpack.c.l.b16 %v395
        %v643 = vunpack.c.h.b16 %v395
        %v644 = vunpack.c.l.b16 %v396
        %v645 = vunpack.c.h.b16 %v396
        %v646 = vunpack.c.l.b16 %v397
        %v647 = vunpack.c.h.b16 %v397
        %v648 = vunpack.c.l.b16 %v398
        %v649 = vunpack.c.h.b16 %v398
        %v650 = vunpack.c.l.b16 %v399
        %v651 = vunpack.c.h.b16 %v399
        %v652 = vunpack.c.l.b16 %v400
        %v653 = vunpack.c.h.b16 %v400
        %v654 = vunpack.c.l.b16 %v401
        %v655 = vunpack.c.h.b16 %v401
        %v656 = vunpack.c.l.b16 %v402
        %v657 = vunpack.c.h.b16 %v402
        %v658 = vunpack.c.l.b16 %v403
        %v659 = vunpack.c.h.b16 %v403
        %v660 = vunpack.c.l.b16 %v404
        %v661 = vunpack.c.h.b16 %v404
        %v662 = vunpack.c.l.b16 %v405
        %v663 = vunpack.c.h.b16 %v405
        %v664 = vunpack.c.l.b16 %v406
        %v665 = vunpack.c.h.b16 %v406
        %v666 = vunpack.c.l.b16 %v407
        %v667 = vunpack.c.h.b16 %v407
        %v668 = vunpack.c.l.b16 %v408
        %v669 = vunpack.c.h.b16 %v408
        %v670 = vunpack.c.l.b16 %v409
        %v671 = vunpack.c.h.b16 %v409
        %v672 = vunpack.c.l.b16 %v410
        %v673 = vunpack.c.h.b16 %v410
        %v674 = vunpack.c.l.b16 %v411
        %v675 = vunpack.c.h.b16 %v411
        %v676 = vunpack.c.l.b16 %v412
        %v677 = vunpack.c.h.b16 %v412
        %v678 = vunpack.c.l.b16 %v413
        %v679 = vunpack.c.h.b16 %v413
        %v680 = vunpack.c.l.b16 %v414
        %v681 = vunpack.c.h.b16 %v414
        %v682 = vunpack.c.l.b16 %v415
        %v683 = vunpack.c.h.b16 %v415
        %v684 = vunpack.c.l.b16 %v416
        %v685 = vunpack.c.h.b16 %v416
        %v686 = vunpack.c.l.b16 %v417
        %v687 = vunpack.c.h.b16 %v417
        %v688 = vunpack.c.l.b16 %v418
        %v689 = vunpack.c.h.b16 %v418
        %v690 = vunpack.c.l.b16 %v419
        %v691 = vunpack.c.h.b16 %v419
        %v692 = vunpack.c.l.b16 %v420
        %v693 = vunpack.c.h.b16 %v420
        %v694 = vunpack.c.l.b16 %v421
        %v695 = vunpack.c.h.b16 %v421
        %v696 = vunpack.c.l.b16 %v422
        %v697 = vunpack.c.h.b16 %v422
        %v698 = vunpack.c.l.b16 %v423
        %v699 = vunpack.c.h.b16 %v423
        %v700 = vunpack.c.l.b16 %v424
        %v701 = vunpack.c.h.b16 %v424
        %v702 = vunpack.c.l.b16 %v425
        %v703 = vunpack.c.h.b16 %v425
        %v704 = vunpack.c.l.b16 %v426
        %v705 = vunpack.c.h.b16 %v426
        %v706 = vunpack.c.l.b16 %v427
        %v707 = vunpack.c.h.b16 %v427
        %v708 = vunpack.c.l.b16 %v428
        %v709 = vunpack.c.h.b16 %v428
        %v710 = vunpack.c.l.b16 %v429
        %v711 = vunpack.c.h.b16 %v429
        %v712 = vunpack.c.l.b16 %v430
        %v713 = vunpack.c.h.b16 %v430
        %v714 = vunpack.c.l.b16 %v431
        %v715 = vunpack.c.h.b16 %v431
        %v716 = vunpack.c.l.b16 %v432
        %v717 = vunpack.c.h.b16 %v432
        %v718 = vunpack.c.l.b16 %v433
        %v719 = vunpack.c.h.b16 %v433
        %v720 = vunpack.c.l.b16 %v434
        %v721 = vunpack.c.h.b16 %v434
        %v722 = vunpack.c.l.b16 %v435
        %v723 = vunpack.c.h.b16 %v435
        %v724 = vunpack.c.l.b16 %v436
        %v725 = vunpack.c.h.b16 %v436
        %v726 = vunpack.c.l.b16 %v437
        %v727 = vunpack.c.h.b16 %v437
        %v728 = vunpack.c.l.b16 %v438
        %v729 = vunpack.c.h.b16 %v438
        %v730 = vunpack.c.l.b16 %v439
        %v731 = vunpack.c.h.b16 %v439
        %v732 = vunpack.c.l.b16 %v440
        %v733 = vunpack.c.h.b16 %v440
        %v734 = vunpack.c.l.b16 %v441
        %v735 = vunpack.c.h.b16 %v441
        %v736 = vunpack.c.l.b16 %v442
        %v737 = vunpack.c.h.b16 %v442
        %v738 = vunpack.c.l.b16 %v443
        %v739 = vunpack.c.h.b16 %v443
        %v740 = vunpack.c.l.b16 %v444
        %v741 = vunpack.c.h.b16 %v444
        %v742 = vunpack.c.l.b16 %v445
        %v743 = vunpack.c.h.b16 %v445
        %v744 = vunpack.c.l.b16 %v446
        %v745 = vunpack.c.h.b16 %v446
        %v746 = vunpack.c.l.b16 %v447
        %v747 = vunpack.c.h.b16 %v447
        %v748 = vunpack.c.l.b16 %v448
        %v749 = vunpack.c.h.b16 %v448
        %v750 = vunpack.c.l.b16 %v449
        %v751 = vunpack.c.h.b16 %v449
        %v752 = vunpack.c.l.b16 %v450
        %v753 = vunpack.c.h.b16 %v450
        %v754 = vunpack.c.l.b16 %v451
        %v755 = vunpack.c.h.b16 %v451
        %v756 = vunpack.c.l.b16 %v452
        %v757 = vunpack.c.h.b16 %v452
        %v758 = vunpack.c.l.b16 %v453
        %v759 = vunpack.c.h.b16 %v453
        %v760 = vunpack.c.l.b16 %v454
        %v761 = vunpack.c.h.b16 %v454
        %v762 = vunpack.c.l.b16 %v455
        %v763 = vunpack.c.h.b16 %v455
        %v764 = vunpack.c.l.b16 %v456
        %v765 = vunpack.c.h.b16 %v456
        %v766 = vunpack.c.l.b16 %v457
        %v767 = vunpack.c.h.b16 %v457
        %v768 = vunpack.c.l.b16 %v458
        %v769 = vunpack.c.h.b16 %v458
        %v770 = vunpack.c.l.b16 %v459
        %v771 = vunpack.c.h.b16 %v459
        %v772 = vunpack.c.l.b16 %v460
        %v773 = vunpack.c.h.b16 %v460
        %v774 = vunpack.c.l.b16 %v461
        %v775 = vunpack.c.h.b16 %v461
        %v776 = vunpack.c.l.b16 %v462
        %v777 = vunpack.c.h.b16 %v462
        %v778 = vunpack.c.l.b16 %v463
        %v779 = vunpack.c.h.b16 %v463
        %v780 = vunpack.c.l.b16 %v464
        %v781 = vunpack.c.h.b16 %v464
        %v782 = vunpack.c.l.b16 %v465
        %v783 = vunpack.c.h.b16 %v465
        %v784 = vunpack.c.l.b16 %v466
        %v785 = vunpack.c.h.b16 %v466
        %v786 = vunpack.c.l.b16 %v467
        %v787 = vunpack.c.h.b16 %v467
        %v788 = vpack.c.b16 %v602, %v596
        %v789 = vpack.c.b16 %v603, %v597
        %v790 = vpack.c.b16 %v604, %v598
        %v791 = vpack.c.b16 %v605, %v599
        %v792 = vpack.c.b16 %v606, %v600
        %v793 = vpack.c.b16 %v607, %v601
        %v794 = vpack.c.b16 %v614, %v608
        %v795 = vpack.c.b16 %v615, %v609
        %v796 = vpack.c.b16 %v616, %v610
        %v797 = vpack.c.b16 %v617, %v611
        %v798 = vpack.c.b16 %v618, %v612
        %v799 = vpack.c.b16 %v619, %v613
        %v800 = vpack.c.b16 %v626, %v620
        %v801 = vpack.c.b16 %v627, %v621
        %v802 = vpack.c.b16 %v628, %v622
        %v803 = vpack.c.b16 %v629, %v623
        %v804 = vpack.c.b16 %v630, %v624
        %v805 = vpack.c.b16 %v631, %v625
        %v806 = vpack.c.b16 %v638, %v632
        %v807 = vpack.c.b16 %v639, %v633
        %v808 = vpack.c.b16 %v640, %v634
        %v809 = vpack.c.b16 %v641, %v635
        %v810 = vpack.c.b16 %v642, %v636
        %v811 = vpack.c.b16 %v643, %v637
        %v812 = vpack.c.b16 %v650, %v644
        %v813 = vpack.c.b16 %v651, %v645
        %v814 = vpack.c.b16 %v652, %v646
        %v815 = vpack.c.b16 %v653, %v647
        %v816 = vpack.c.b16 %v654, %v648
        %v817 = vpack.c.b16 %v655, %v649
        %v818 = vpack.c.b16 %v662, %v656
        %v819 = vpack.c.b16 %v663, %v657
        %v820 = vpack.c.b16 %v664, %v658
        %v821 = vpack.c.b16 %v665, %v659
        %v822 = vpack.c.b16 %v666, %v660
        %v823 = vpack.c.b16 %v667, %v661
        %v824 = vpack.c.b16 %v674, %v668
        %v825 = vpack.c.b16 %v675, %v669
        %v826 = vpack.c.b16 %v676, %v670
        %v827 = vpack.c.b16 %v677, %v671
        %v828 = vpack.c.b16 %v678, %v672
        %v829 = vpack.c.b16 %v679, %v673
        %v830 = vpack.c.b16 %v686, %v680
        %v831 = vpack.c.b16 %v687, %v681
        %v832 = vpack.c.b16 %v688, %v682
        %v833 = vpack.c.b16 %v689, %v683
        %v834 = vpack.c.b16 %v690, %v684
        %v835 = vpack.c.b16 %v691, %v685
        %v836 = vpack.c.b16 %v698, %v692
        %v837 = vpack.c.b16 %v699, %v693
        %v838 = vpack.c.b16 %v700, %v694
        %v839 = vpack.c.b16 %v701, %v695
        %v840 = vpack.c.b16 %v702, %v696
        %v841 = vpack.c.b16 %v703, %v697
        %v842 = vpack.c.b16 %v710, %v704
        %v843 = vpack.c.b16 %v711, %v705
        %v844 = vpack.c.b16 %v712, %v706
        %v845 = vpack.c.b16 %v713, %v707
        %v846 = vpack.c.b16 %v714, %v708
        %v847 = vpack.c.b16 %v715, %v709
        %v848 = vpack.c.b16 %v722, %v716
        %v849 = vpack.c.b16 %v723, %v717
        %v850 = vpack.c.b16 %v724, %v718
        %v851 = vpack.c.b16 %v725, %v719
        %v852 = vpack.c.b16 %v726, %v720
        %v853 = vpack.c.b16 %v727, %v721
        %v854 = vpack.c.b16 %v734, %v728
        %v855 = vpack.c.b16 %v735, %v729
        %v856 = vpack.c.b16 %v736, %v730
        %v857 = vpack.c.b16 %v737, %v731
        %v858 = vpack.c.b16 %v738, %v732
        %v859 = vpack.c.b16 %v739, %v733
        %v860 = vpack.c.b16 %v746, %v740
        %v861 = vpack.c.b16 %v747, %v741
        %v862 = vpack.c.b16 %v748, %v742
        %v863 = vpack.c.b16 %v749, %v743
        %v864 = vpack.c.b16 %v750, %v744
        %v865 = vpack.c.b16 %v751, %v745
        %v866 = vpack.c.b16 %v758, %v752
        %v867 = vpack.c.b16 %v759, %v753
        %v868 = vpack.c.b16 %v760, %v754
        %v869 = vpack.c.b16 %v761, %v755
        %v870 = vpack.c.b16 %v762, %v756
        %v871 = vpack.c.b16 %v763, %v757
        %v872 = vpack.c.b16 %v770, %v764
        %v873 = vpack.c.b16 %v771, %v765
        %v874 = vpack.c.b16 %v772, %v766
        %v875 = vpack.c.b16 %v773, %v767
        %v876 = vpack.c.b16 %v774, %v768
        %v877 = vpack.c.b16 %v775, %v769
        %v878 = vpack.c.b16 %v782, %v776
        %v879 = vpack.c.b16 %v783, %v777
        %v880 = vpack.c.b16 %v784, %v778
        %v881 = vpack.c.b16 %v785, %v779
        %v882 = vpack.c.b16 %v786, %v780
        %v883 = vpack.c.b16 %v787, %v781
        %980 = vmatprep.subr.bf16.mxu0 %v789
        %981 = vmatpush1.bf16.msra.mxu0 %v788
        %982 = vmatprep.subr.bf16.mxu0 %v795
        %983 = vmatpush1.bf16.msra.mxu0 %v794
        %984 = vmatprep.subr.bf16.mxu0 %v801
        %985 = vmatpush1.bf16.msra.mxu0 %v800
        %986 = vmatprep.subr.bf16.mxu0 %v807
        %987 = vmatpush1.bf16.msra.mxu0 %v806
        %988 = vmatprep.subr.bf16.mxu0 %v813
        %989 = vmatpush1.bf16.msra.mxu0 %v812
        %990 = vmatprep.subr.bf16.mxu0 %v819
        %991 = vmatpush1.bf16.msra.mxu0 %v818
        %992 = vmatprep.subr.bf16.mxu0 %v825
        %993 = vmatpush1.bf16.msra.mxu0 %v824
        %994 = vmatprep.subr.bf16.mxu0 %v831
        %995 = vmatpush1.bf16.msra.mxu0 %v830
        %996 = vmatprep.subr.bf16.mxu0 %v837
        %997 = vmatpush1.bf16.msra.mxu0 %v836
        %998 = vmatprep.subr.bf16.mxu0 %v843
        %999 = vmatpush1.bf16.msra.mxu0 %v842
        %1000 = vmatprep.subr.bf16.mxu0 %v849
        %1001 = vmatpush1.bf16.msra.mxu0 %v848
        %1002 = vmatprep.subr.bf16.mxu0 %v855
        %1003 = vmatpush1.bf16.msra.mxu0 %v854
        %1004 = vmatprep.subr.bf16.mxu0 %v861
        %1005 = vmatpush1.bf16.msra.mxu0 %v860
        %1006 = vmatprep.subr.bf16.mxu0 %v867
        %1007 = vmatpush1.bf16.msra.mxu0 %v866
        %1008 = vmatprep.subr.bf16.mxu0 %v873
        %1009 = vmatpush1.bf16.msra.mxu0 %v872
        %1010 = vmatprep.subr.bf16.mxu0 %v879
        %1011 = vmatpush1.bf16.msra.mxu0 %v878
        %1012 = vmatprep.mubr.bf16.mxu0 %v341
        %1013 = vmatmul.mubr.bf16.gmra.mrb[0].mxu0 %v340
        %v1014 = vpop.f32.mrb[0].mxu0
        %v1015 = vadd.f32 %v473, %v1014
        %v1016 = vpop.f32.mrb[0].mxu0
        %v1017 = vadd.f32 %v477, %v1016
        %v1018 = vpop.f32.mrb[0].mxu0
        %v1019 = vadd.f32 %v473, %v1018
        %v1020 = vpop.f32.mrb[0].mxu0
        %v1021 = vadd.f32 %v477, %v1020
        %1022 = vmatprep.mubr.bf16.mxu0 %v343
        %1023 = vmatmul.mubr.bf16.gmra.mrb[0].mxu0 %v342
        %v1024 = vpop.f32.mrb[0].mxu0
        %v1025 = vadd.f32 %v473, %v1024
        %v1026 = vpop.f32.mrb[0].mxu0
        %v1027 = vadd.f32 %v477, %v1026
        %v1028 = vpop.f32.mrb[0].mxu0
        %v1029 = vadd.f32 %v473, %v1028
        %v1030 = vpop.f32.mrb[0].mxu0
        %v1031 = vadd.f32 %v477, %v1030
        %1032 = vmatprep.mubr.bf16.mxu0 %v345
        %1033 = vmatmul.mubr.bf16.gmra.mrb[0].mxu0 %v344
        %v1034 = vpop.f32.mrb[0].mxu0
        %v1035 = vadd.f32 %v473, %v1034
        %v1036 = vpop.f32.mrb[0].mxu0
        %v1037 = vadd.f32 %v477, %v1036
        %v1038 = vpop.f32.mrb[0].mxu0
        %v1039 = vadd.f32 %v473, %v1038
        %v1040 = vpop.f32.mrb[0].mxu0
        %v1041 = vadd.f32 %v477, %v1040
        %1042 = vmatprep.mubr.bf16.mxu0 %v347
        %1043 = vmatmul.mubr.bf16.gmra.mrb[0].mxu0 %v346
        %v1044 = vpop.f32.mrb[0].mxu0
        %v1045 = vadd.f32 %v473, %v1044
        %v1046 = vpop.f32.mrb[0].mxu0
        %v1047 = vadd.f32 %v477, %v1046
        %v1048 = vpop.f32.mrb[0].mxu0
        %v1049 = vadd.f32 %v473, %v1048
        %v1050 = vpop.f32.mrb[0].mxu0
        %v1051 = vadd.f32 %v477, %v1050
        %1052 = vmatprep.mubr.bf16.mxu0 %v349
        %1053 = vmatmul.mubr.bf16.gmra.mrb[0].mxu0 %v348
        %v1054 = vpop.f32.mrb[0].mxu0
        %v1055 = vadd.f32 %v473, %v1054
        %v1056 = vpop.f32.mrb[0].mxu0
        %v1057 = vadd.f32 %v477, %v1056
        %v1058 = vpop.f32.mrb[0].mxu0
        %v1059 = vadd.f32 %v473, %v1058
        %v1060 = vpop.f32.mrb[0].mxu0
        %v1061 = vadd.f32 %v477, %v1060
        %1062 = vmatprep.mubr.bf16.mxu0 %v351
        %1063 = vmatmul.mubr.bf16.gmra.mrb[0].mxu0 %v350
        %v1064 = vpop.f32.mrb[0].mxu0
        %v1065 = vadd.f32 %v473, %v1064
        %v1066 = vpop.f32.mrb[0].mxu0
        %v1067 = vadd.f32 %v477, %v1066
        %v1068 = vpop.f32.mrb[0].mxu0
        %v1069 = vadd.f32 %v473, %v1068
        %v1070 = vpop.f32.mrb[0].mxu0
        %v1071 = vadd.f32 %v477, %v1070
        %1072 = vmatprep.mubr.bf16.mxu0 %v353
        %1073 = vmatmul.mubr.bf16.gmra.mrb[0].mxu0 %v352
        %v1074 = vpop.f32.mrb[0].mxu0
        %v1075 = vadd.f32 %v473, %v1074
        %v1076 = vpop.f32.mrb[0].mxu0
        %v1077 = vadd.f32 %v477, %v1076
        %v1078 = vpop.f32.mrb[0].mxu0
        %v1079 = vadd.f32 %v473, %v1078
        %v1080 = vpop.f32.mrb[0].mxu0
        %v1081 = vadd.f32 %v477, %v1080
        %1082 = vmatprep.mubr.bf16.mxu0 %v355
        %1083 = vmatmul.mubr.bf16.gmra.mrb[0].mxu0 %v354
        %v1084 = vpop.f32.mrb[0].mxu0
        %v1085 = vadd.f32 %v473, %v1084
        %v1086 = vpop.f32.mrb[0].mxu0
        %v1087 = vadd.f32 %v477, %v1086
        %v1088 = vpop.f32.mrb[0].mxu0
        %v1089 = vadd.f32 %v473, %v1088
        %v1090 = vpop.f32.mrb[0].mxu0
        %v1091 = vadd.f32 %v477, %v1090
        %1092 = vmatprep.mubr.bf16.mxu0 %v357
        %1093 = vmatmul.mubr.bf16.gmra.mrb[0].mxu0 %v356
        %v1094 = vpop.f32.mrb[0].mxu0
        %v1095 = vadd.f32 %v473, %v1094
        %v1096 = vpop.f32.mrb[0].mxu0
        %v1097 = vadd.f32 %v477, %v1096
        %v1098 = vpop.f32.mrb[0].mxu0
        %v1099 = vadd.f32 %v473, %v1098
        %v1100 = vpop.f32.mrb[0].mxu0
        %v1101 = vadd.f32 %v477, %v1100
        %1102 = vmatprep.mubr.bf16.mxu0 %v359
        %1103 = vmatmul.mubr.bf16.gmra.mrb[0].mxu0 %v358
        %v1104 = vpop.f32.mrb[0].mxu0
        %v1105 = vadd.f32 %v473, %v1104
        %v1106 = vpop.f32.mrb[0].mxu0
        %v1107 = vadd.f32 %v477, %v1106
        %v1108 = vpop.f32.mrb[0].mxu0
        %v1109 = vadd.f32 %v473, %v1108
        %v1110 = vpop.f32.mrb[0].mxu0
        %v1111 = vadd.f32 %v477, %v1110
        %1112 = vmatprep.mubr.bf16.mxu0 %v361
        %1113 = vmatmul.mubr.bf16.gmra.mrb[0].mxu0 %v360
        %v1114 = vpop.f32.mrb[0].mxu0
        %v1115 = vadd.f32 %v473, %v1114
        %v1116 = vpop.f32.mrb[0].mxu0
        %v1117 = vadd.f32 %v477, %v1116
        %v1118 = vpop.f32.mrb[0].mxu0
        %v1119 = vadd.f32 %v473, %v1118
        %v1120 = vpop.f32.mrb[0].mxu0
        %v1121 = vadd.f32 %v477, %v1120
        %1122 = vmatprep.mubr.bf16.mxu0 %v363
        %1123 = vmatmul.mubr.bf16.gmra.mrb[0].mxu0 %v362
        %v1124 = vpop.f32.mrb[0].mxu0
        %v1125 = vadd.f32 %v473, %v1124
        %v1126 = vpop.f32.mrb[0].mxu0
        %v1127 = vadd.f32 %v477, %v1126
        %v1128 = vpop.f32.mrb[0].mxu0
        %v1129 = vadd.f32 %v473, %v1128
        %v1130 = vpop.f32.mrb[0].mxu0
        %v1131 = vadd.f32 %v477, %v1130
        %1132 = vmatprep.mubr.bf16.mxu0 %v365
        %1133 = vmatmul.mubr.bf16.gmra.mrb[0].mxu0 %v364
        %v1134 = vpop.f32.mrb[0].mxu0
        %v1135 = vadd.f32 %v473, %v1134
        %v1136 = vpop.f32.mrb[0].mxu0
        %v1137 = vadd.f32 %v477, %v1136
        %v1138 = vpop.f32.mrb[0].mxu0
        %v1139 = vadd.f32 %v473, %v1138
        %v1140 = vpop.f32.mrb[0].mxu0
        %v1141 = vadd.f32 %v477, %v1140
        %1142 = vmatprep.mubr.bf16.mxu0 %v367
        %1143 = vmatmul.mubr.bf16.gmra.mrb[0].mxu0 %v366
        %v1144 = vpop.f32.mrb[0].mxu0
        %v1145 = vadd.f32 %v473, %v1144
        %v1146 = vpop.f32.mrb[0].mxu0
        %v1147 = vadd.f32 %v477, %v1146
        %v1148 = vpop.f32.mrb[0].mxu0
        %v1149 = vadd.f32 %v473, %v1148
        %v1150 = vpop.f32.mrb[0].mxu0
        %v1151 = vadd.f32 %v477, %v1150
        %1152 = vmatprep.mubr.bf16.mxu0 %v369
        %1153 = vmatmul.mubr.bf16.gmra.mrb[0].mxu0 %v368
        %v1154 = vpop.f32.mrb[0].mxu0
        %v1155 = vadd.f32 %v473, %v1154
        %v1156 = vpop.f32.mrb[0].mxu0
        %v1157 = vadd.f32 %v477, %v1156
        %v1158 = vpop.f32.mrb[0].mxu0
        %v1159 = vadd.f32 %v473, %v1158
        %v1160 = vpop.f32.mrb[0].mxu0
        %v1161 = vadd.f32 %v477, %v1160
        %1162 = vmatprep.mubr.bf16.mxu0 %v371
        %1163 = vmatmul.mubr.bf16.gmra.mrb[0].mxu0 %v370
        %v1164 = vpop.f32.mrb[0].mxu0
        %v1165 = vadd.f32 %v473, %v1164
        %v1166 = vpop.f32.mrb[0].mxu0
        %v1167 = vadd.f32 %v477, %v1166
        %v1168 = vpop.f32.mrb[0].mxu0
        %v1169 = vadd.f32 %v473, %v1168
        %v1170 = vpop.f32.mrb[0].mxu0
        %v1171 = vadd.f32 %v477, %v1170
        %1172 = vdwg.mxu0
        %1173 = vmatprep.subr.bf16.mxu0 %v791
        %1174 = vmatpush1.bf16.msra.mxu0 %v790
        %1175 = vmatprep.subr.bf16.mxu0 %v797
        %1176 = vmatpush1.bf16.msra.mxu0 %v796
        %1177 = vmatprep.subr.bf16.mxu0 %v803
        %1178 = vmatpush1.bf16.msra.mxu0 %v802
        %1179 = vmatprep.subr.bf16.mxu0 %v809
        %1180 = vmatpush1.bf16.msra.mxu0 %v808
        %1181 = vmatprep.subr.bf16.mxu0 %v815
        %1182 = vmatpush1.bf16.msra.mxu0 %v814
        %1183 = vmatprep.subr.bf16.mxu0 %v821
        %1184 = vmatpush1.bf16.msra.mxu0 %v820
        %1185 = vmatprep.subr.bf16.mxu0 %v827
        %1186 = vmatpush1.bf16.msra.mxu0 %v826
        %1187 = vmatprep.subr.bf16.mxu0 %v833
        %1188 = vmatpush1.bf16.msra.mxu0 %v832
        %1189 = vmatprep.subr.bf16.mxu0 %v839
        %1190 = vmatpush1.bf16.msra.mxu0 %v838
        %1191 = vmatprep.subr.bf16.mxu0 %v845
        %1192 = vmatpush1.bf16.msra.mxu0 %v844
        %1193 = vmatprep.subr.bf16.mxu0 %v851
        %1194 = vmatpush1.bf16.msra.mxu0 %v850
        %1195 = vmatprep.subr.bf16.mxu0 %v857
        %1196 = vmatpush1.bf16.msra.mxu0 %v856
        %1197 = vmatprep.subr.bf16.mxu0 %v863
        %1198 = vmatpush1.bf16.msra.mxu0 %v862
        %1199 = vmatprep.subr.bf16.mxu0 %v869
        %1200 = vmatpush1.bf16.msra.mxu0 %v868
        %1201 = vmatprep.subr.bf16.mxu0 %v875
        %1202 = vmatpush1.bf16.msra.mxu0 %v874
        %1203 = vmatprep.subr.bf16.mxu0 %v881
        %1204 = vmatpush1.bf16.msra.mxu0 %v880
        %1205 = vmatprep.mubr.bf16.mxu0 %v341
        %1206 = vmatmul.mubr.bf16.gmra.mrb[0].mxu0 %v340
        %v1207 = vpop.f32.mrb[0].mxu0
        %v1208 = vadd.f32 %v481, %v1207
        %v1209 = vpop.f32.mrb[0].mxu0
        %v1210 = vadd.f32 %v485, %v1209
        %v1211 = vpop.f32.mrb[0].mxu0
        %v1212 = vadd.f32 %v481, %v1211
        %v1213 = vpop.f32.mrb[0].mxu0
        %v1214 = vadd.f32 %v485, %v1213
        %1215 = vmatprep.mubr.bf16.mxu0 %v343
        %1216 = vmatmul.mubr.bf16.gmra.mrb[0].mxu0 %v342
        %v1217 = vpop.f32.mrb[0].mxu0
        %v1218 = vadd.f32 %v481, %v1217
        %v1219 = vpop.f32.mrb[0].mxu0
        %v1220 = vadd.f32 %v485, %v1219
        %v1221 = vpop.f32.mrb[0].mxu0
        %v1222 = vadd.f32 %v481, %v1221
        %v1223 = vpop.f32.mrb[0].mxu0
        %v1224 = vadd.f32 %v485, %v1223
        %1225 = vmatprep.mubr.bf16.mxu0 %v345
        %1226 = vmatmul.mubr.bf16.gmra.mrb[0].mxu0 %v344
        %v1227 = vpop.f32.mrb[0].mxu0
        %v1228 = vadd.f32 %v481, %v1227
        %v1229 = vpop.f32.mrb[0].mxu0
        %v1230 = vadd.f32 %v485, %v1229
        %v1231 = vpop.f32.mrb[0].mxu0
        %v1232 = vadd.f32 %v481, %v1231
        %v1233 = vpop.f32.mrb[0].mxu0
        %v1234 = vadd.f32 %v485, %v1233
        %1235 = vmatprep.mubr.bf16.mxu0 %v347
        %1236 = vmatmul.mubr.bf16.gmra.mrb[0].mxu0 %v346
        %v1237 = vpop.f32.mrb[0].mxu0
        %v1238 = vadd.f32 %v481, %v1237
        %v1239 = vpop.f32.mrb[0].mxu0
        %v1240 = vadd.f32 %v485, %v1239
        %v1241 = vpop.f32.mrb[0].mxu0
        %v1242 = vadd.f32 %v481, %v1241
        %v1243 = vpop.f32.mrb[0].mxu0
        %v1244 = vadd.f32 %v485, %v1243
        %1245 = vmatprep.mubr.bf16.mxu0 %v349
        %1246 = vmatmul.mubr.bf16.gmra.mrb[0].mxu0 %v348
        %v1247 = vpop.f32.mrb[0].mxu0
        %v1248 = vadd.f32 %v481, %v1247
        %v1249 = vpop.f32.mrb[0].mxu0
        %v1250 = vadd.f32 %v485, %v1249
        %v1251 = vpop.f32.mrb[0].mxu0
        %v1252 = vadd.f32 %v481, %v1251
        %v1253 = vpop.f32.mrb[0].mxu0
        %v1254 = vadd.f32 %v485, %v1253
        %1255 = vmatprep.mubr.bf16.mxu0 %v351
        %1256 = vmatmul.mubr.bf16.gmra.mrb[0].mxu0 %v350
        %v1257 = vpop.f32.mrb[0].mxu0
        %v1258 = vadd.f32 %v481, %v1257
        %v1259 = vpop.f32.mrb[0].mxu0
        %v1260 = vadd.f32 %v485, %v1259
        %v1261 = vpop.f32.mrb[0].mxu0
        %v1262 = vadd.f32 %v481, %v1261
        %v1263 = vpop.f32.mrb[0].mxu0
        %v1264 = vadd.f32 %v485, %v1263
        %1265 = vmatprep.mubr.bf16.mxu0 %v353
        %1266 = vmatmul.mubr.bf16.gmra.mrb[0].mxu0 %v352
        %v1267 = vpop.f32.mrb[0].mxu0
        %v1268 = vadd.f32 %v481, %v1267
        %v1269 = vpop.f32.mrb[0].mxu0
        %v1270 = vadd.f32 %v485, %v1269
        %v1271 = vpop.f32.mrb[0].mxu0
        %v1272 = vadd.f32 %v481, %v1271
        %v1273 = vpop.f32.mrb[0].mxu0
        %v1274 = vadd.f32 %v485, %v1273
        %1275 = vmatprep.mubr.bf16.mxu0 %v355
        %1276 = vmatmul.mubr.bf16.gmra.mrb[0].mxu0 %v354
        %v1277 = vpop.f32.mrb[0].mxu0
        %v1278 = vadd.f32 %v481, %v1277
        %v1279 = vpop.f32.mrb[0].mxu0
        %v1280 = vadd.f32 %v485, %v1279
        %v1281 = vpop.f32.mrb[0].mxu0
        %v1282 = vadd.f32 %v481, %v1281
        %v1283 = vpop.f32.mrb[0].mxu0
        %v1284 = vadd.f32 %v485, %v1283
        %1285 = vmatprep.mubr.bf16.mxu0 %v357
        %1286 = vmatmul.mubr.bf16.gmra.mrb[0].mxu0 %v356
        %v1287 = vpop.f32.mrb[0].mxu0
        %v1288 = vadd.f32 %v481, %v1287
        %v1289 = vpop.f32.mrb[0].mxu0
        %v1290 = vadd.f32 %v485, %v1289
        %v1291 = vpop.f32.mrb[0].mxu0
        %v1292 = vadd.f32 %v481, %v1291
        %v1293 = vpop.f32.mrb[0].mxu0
        %v1294 = vadd.f32 %v485, %v1293
        %1295 = vmatprep.mubr.bf16.mxu0 %v359
        %1296 = vmatmul.mubr.bf16.gmra.mrb[0].mxu0 %v358
        %v1297 = vpop.f32.mrb[0].mxu0
        %v1298 = vadd.f32 %v481, %v1297
        %v1299 = vpop.f32.mrb[0].mxu0
        %v1300 = vadd.f32 %v485, %v1299
        %v1301 = vpop.f32.mrb[0].mxu0
        %v1302 = vadd.f32 %v481, %v1301
        %v1303 = vpop.f32.mrb[0].mxu0
        %v1304 = vadd.f32 %v485, %v1303
        %1305 = vmatprep.mubr.bf16.mxu0 %v361
        %1306 = vmatmul.mubr.bf16.gmra.mrb[0].mxu0 %v360
        %v1307 = vpop.f32.mrb[0].mxu0
        %v1308 = vadd.f32 %v481, %v1307
        %v1309 = vpop.f32.mrb[0].mxu0
        %v1310 = vadd.f32 %v485, %v1309
        %v1311 = vpop.f32.mrb[0].mxu0
        %v1312 = vadd.f32 %v481, %v1311
        %v1313 = vpop.f32.mrb[0].mxu0
        %v1314 = vadd.f32 %v485, %v1313
        %1315 = vmatprep.mubr.bf16.mxu0 %v363
        %1316 = vmatmul.mubr.bf16.gmra.mrb[0].mxu0 %v362
        %v1317 = vpop.f32.mrb[0].mxu0
        %v1318 = vadd.f32 %v481, %v1317
        %v1319 = vpop.f32.mrb[0].mxu0
        %v1320 = vadd.f32 %v485, %v1319
        %v1321 = vpop.f32.mrb[0].mxu0
        %v1322 = vadd.f32 %v481, %v1321
        %v1323 = vpop.f32.mrb[0].mxu0
        %v1324 = vadd.f32 %v485, %v1323
        %1325 = vmatprep.mubr.bf16.mxu0 %v365
        %1326 = vmatmul.mubr.bf16.gmra.mrb[0].mxu0 %v364
        %v1327 = vpop.f32.mrb[0].mxu0
        %v1328 = vadd.f32 %v481, %v1327
        %v1329 = vpop.f32.mrb[0].mxu0
        %v1330 = vadd.f32 %v485, %v1329
        %v1331 = vpop.f32.mrb[0].mxu0
        %v1332 = vadd.f32 %v481, %v1331
        %v1333 = vpop.f32.mrb[0].mxu0
        %v1334 = vadd.f32 %v485, %v1333
        %1335 = vmatprep.mubr.bf16.mxu0 %v367
        %1336 = vmatmul.mubr.bf16.gmra.mrb[0].mxu0 %v366
        %v1337 = vpop.f32.mrb[0].mxu0
        %v1338 = vadd.f32 %v481, %v1337
        %v1339 = vpop.f32.mrb[0].mxu0
        %v1340 = vadd.f32 %v485, %v1339
        %v1341 = vpop.f32.mrb[0].mxu0
        %v1342 = vadd.f32 %v481, %v1341
        %v1343 = vpop.f32.mrb[0].mxu0
        %v1344 = vadd.f32 %v485, %v1343
        %1345 = vmatprep.mubr.bf16.mxu0 %v369
        %1346 = vmatmul.mubr.bf16.gmra.mrb[0].mxu0 %v368
        %v1347 = vpop.f32.mrb[0].mxu0
        %v1348 = vadd.f32 %v481, %v1347
        %v1349 = vpop.f32.mrb[0].mxu0
        %v1350 = vadd.f32 %v485, %v1349
        %v1351 = vpop.f32.mrb[0].mxu0
        %v1352 = vadd.f32 %v481, %v1351
        %v1353 = vpop.f32.mrb[0].mxu0
        %v1354 = vadd.f32 %v485, %v1353
        %1355 = vmatprep.mubr.bf16.mxu0 %v371
        %1356 = vmatmul.mubr.bf16.gmra.mrb[0].mxu0 %v370
        %v1357 = vpop.f32.mrb[0].mxu0
        %v1358 = vadd.f32 %v481, %v1357
        %v1359 = vpop.f32.mrb[0].mxu0
        %v1360 = vadd.f32 %v485, %v1359
        %v1361 = vpop.f32.mrb[0].mxu0
        %v1362 = vadd.f32 %v481, %v1361
        %v1363 = vpop.f32.mrb[0].mxu0
        %v1364 = vadd.f32 %v485, %v1363
        %1365 = vdwg.mxu0
        %1366 = vmatprep.subr.bf16.mxu0 %v793
        %1367 = vmatpush1.bf16.msra.mxu0 %v792
        %1368 = vmatprep.subr.bf16.mxu0 %v799
        %1369 = vmatpush1.bf16.msra.mxu0 %v798
        %1370 = vmatprep.subr.bf16.mxu0 %v805
        %1371 = vmatpush1.bf16.msra.mxu0 %v804
        %1372 = vmatprep.subr.bf16.mxu0 %v811
        %1373 = vmatpush1.bf16.msra.mxu0 %v810
        %1374 = vmatprep.subr.bf16.mxu0 %v817
        %1375 = vmatpush1.bf16.msra.mxu0 %v816
        %1376 = vmatprep.subr.bf16.mxu0 %v823
        %1377 = vmatpush1.bf16.msra.mxu0 %v822
        %1378 = vmatprep.subr.bf16.mxu0 %v829
        %1379 = vmatpush1.bf16.msra.mxu0 %v828
        %1380 = vmatprep.subr.bf16.mxu0 %v835
        %1381 = vmatpush1.bf16.msra.mxu0 %v834
        %1382 = vmatprep.subr.bf16.mxu0 %v841
        %1383 = vmatpush1.bf16.msra.mxu0 %v840
        %1384 = vmatprep.subr.bf16.mxu0 %v847
        %1385 = vmatpush1.bf16.msra.mxu0 %v846
        %1386 = vmatprep.subr.bf16.mxu0 %v853
        %1387 = vmatpush1.bf16.msra.mxu0 %v852
        %1388 = vmatprep.subr.bf16.mxu0 %v859
        %1389 = vmatpush1.bf16.msra.mxu0 %v858
        %1390 = vmatprep.subr.bf16.mxu0 %v865
        %1391 = vmatpush1.bf16.msra.mxu0 %v864
        %1392 = vmatprep.subr.bf16.mxu0 %v871
        %1393 = vmatpush1.bf16.msra.mxu0 %v870
        %1394 = vmatprep.subr.bf16.mxu0 %v877
        %1395 = vmatpush1.bf16.msra.mxu0 %v876
        %1396 = vmatprep.subr.bf16.mxu0 %v883
        %1397 = vmatpush1.bf16.msra.mxu0 %v882
        %1398 = vmatprep.mubr.bf16.mxu0 %v341
        %1399 = vmatmul.mubr.bf16.gmra.mrb[0].mxu0 %v340
        %v1400 = vpop.f32.mrb[0].mxu0
        %v1401 = vadd.f32 %v489, %v1400
        %v1402 = vpop.f32.mrb[0].mxu0
        %v1403 = vadd.f32 %v493, %v1402
        %v1404 = vpop.f32.mrb[0].mxu0
        %v1405 = vadd.f32 %v489, %v1404
        %v1406 = vpop.f32.mrb[0].mxu0
        %v1407 = vadd.f32 %v493, %v1406
        %1408 = vmatprep.mubr.bf16.mxu0 %v343
        %1409 = vmatmul.mubr.bf16.gmra.mrb[0].mxu0 %v342
        %v1410 = vpop.f32.mrb[0].mxu0
        %v1411 = vadd.f32 %v489, %v1410
        %v1412 = vpop.f32.mrb[0].mxu0
        %v1413 = vadd.f32 %v493, %v1412
        %v1414 = vpop.f32.mrb[0].mxu0
        %v1415 = vadd.f32 %v489, %v1414
        %v1416 = vpop.f32.mrb[0].mxu0
        %v1417 = vadd.f32 %v493, %v1416
        %1418 = vmatprep.mubr.bf16.mxu0 %v345
        %1419 = vmatmul.mubr.bf16.gmra.mrb[0].mxu0 %v344
        %v1420 = vpop.f32.mrb[0].mxu0
        %v1421 = vadd.f32 %v489, %v1420
        %v1422 = vpop.f32.mrb[0].mxu0
        %v1423 = vadd.f32 %v493, %v1422
        %v1424 = vpop.f32.mrb[0].mxu0
        %v1425 = vadd.f32 %v489, %v1424
        %v1426 = vpop.f32.mrb[0].mxu0
        %v1427 = vadd.f32 %v493, %v1426
        %1428 = vmatprep.mubr.bf16.mxu0 %v347
        %1429 = vmatmul.mubr.bf16.gmra.mrb[0].mxu0 %v346
        %v1430 = vpop.f32.mrb[0].mxu0
        %v1431 = vadd.f32 %v489, %v1430
        %v1432 = vpop.f32.mrb[0].mxu0
        %v1433 = vadd.f32 %v493, %v1432
        %v1434 = vpop.f32.mrb[0].mxu0
        %v1435 = vadd.f32 %v489, %v1434
        %v1436 = vpop.f32.mrb[0].mxu0
        %v1437 = vadd.f32 %v493, %v1436
        %1438 = vmatprep.mubr.bf16.mxu0 %v349
        %1439 = vmatmul.mubr.bf16.gmra.mrb[0].mxu0 %v348
        %v1440 = vpop.f32.mrb[0].mxu0
        %v1441 = vadd.f32 %v489, %v1440
        %v1442 = vpop.f32.mrb[0].mxu0
        %v1443 = vadd.f32 %v493, %v1442
        %v1444 = vpop.f32.mrb[0].mxu0
        %v1445 = vadd.f32 %v489, %v1444
        %v1446 = vpop.f32.mrb[0].mxu0
        %v1447 = vadd.f32 %v493, %v1446
        %1448 = vmatprep.mubr.bf16.mxu0 %v351
        %1449 = vmatmul.mubr.bf16.gmra.mrb[0].mxu0 %v350
        %v1450 = vpop.f32.mrb[0].mxu0
        %v1451 = vadd.f32 %v489, %v1450
        %v1452 = vpop.f32.mrb[0].mxu0
        %v1453 = vadd.f32 %v493, %v1452
        %v1454 = vpop.f32.mrb[0].mxu0
        %v1455 = vadd.f32 %v489, %v1454
        %v1456 = vpop.f32.mrb[0].mxu0
        %v1457 = vadd.f32 %v493, %v1456
        %1458 = vmatprep.mubr.bf16.mxu0 %v353
        %1459 = vmatmul.mubr.bf16.gmra.mrb[0].mxu0 %v352
        %v1460 = vpop.f32.mrb[0].mxu0
        %v1461 = vadd.f32 %v489, %v1460
        %v1462 = vpop.f32.mrb[0].mxu0
        %v1463 = vadd.f32 %v493, %v1462
        %v1464 = vpop.f32.mrb[0].mxu0
        %v1465 = vadd.f32 %v489, %v1464
        %v1466 = vpop.f32.mrb[0].mxu0
        %v1467 = vadd.f32 %v493, %v1466
        %1468 = vmatprep.mubr.bf16.mxu0 %v355
        %1469 = vmatmul.mubr.bf16.gmra.mrb[0].mxu0 %v354
        %v1470 = vpop.f32.mrb[0].mxu0
        %v1471 = vadd.f32 %v489, %v1470
        %v1472 = vpop.f32.mrb[0].mxu0
        %v1473 = vadd.f32 %v493, %v1472
        %v1474 = vpop.f32.mrb[0].mxu0
        %v1475 = vadd.f32 %v489, %v1474
        %v1476 = vpop.f32.mrb[0].mxu0
        %v1477 = vadd.f32 %v493, %v1476
        %1478 = vmatprep.mubr.bf16.mxu0 %v357
        %1479 = vmatmul.mubr.bf16.gmra.mrb[0].mxu0 %v356
        %v1480 = vpop.f32.mrb[0].mxu0
        %v1481 = vadd.f32 %v489, %v1480
        %v1482 = vpop.f32.mrb[0].mxu0
        %v1483 = vadd.f32 %v493, %v1482
        %v1484 = vpop.f32.mrb[0].mxu0
        %v1485 = vadd.f32 %v489, %v1484
        %v1486 = vpop.f32.mrb[0].mxu0
        %v1487 = vadd.f32 %v493, %v1486
        %1488 = vmatprep.mubr.bf16.mxu0 %v359
        %1489 = vmatmul.mubr.bf16.gmra.mrb[0].mxu0 %v358
        %v1490 = vpop.f32.mrb[0].mxu0
        %v1491 = vadd.f32 %v489, %v1490
        %v1492 = vpop.f32.mrb[0].mxu0
        %v1493 = vadd.f32 %v493, %v1492
        %v1494 = vpop.f32.mrb[0].mxu0
        %v1495 = vadd.f32 %v489, %v1494
        %v1496 = vpop.f32.mrb[0].mxu0
        %v1497 = vadd.f32 %v493, %v1496
        %1498 = vmatprep.mubr.bf16.mxu0 %v361
        %1499 = vmatmul.mubr.bf16.gmra.mrb[0].mxu0 %v360
        %v1500 = vpop.f32.mrb[0].mxu0
        %v1501 = vadd.f32 %v489, %v1500
        %v1502 = vpop.f32.mrb[0].mxu0
        %v1503 = vadd.f32 %v493, %v1502
        %v1504 = vpop.f32.mrb[0].mxu0
        %v1505 = vadd.f32 %v489, %v1504
        %v1506 = vpop.f32.mrb[0].mxu0
        %v1507 = vadd.f32 %v493, %v1506
        %1508 = vmatprep.mubr.bf16.mxu0 %v363
        %1509 = vmatmul.mubr.bf16.gmra.mrb[0].mxu0 %v362
        %v1510 = vpop.f32.mrb[0].mxu0
        %v1511 = vadd.f32 %v489, %v1510
        %v1512 = vpop.f32.mrb[0].mxu0
        %v1513 = vadd.f32 %v493, %v1512
        %v1514 = vpop.f32.mrb[0].mxu0
        %v1515 = vadd.f32 %v489, %v1514
        %v1516 = vpop.f32.mrb[0].mxu0
        %v1517 = vadd.f32 %v493, %v1516
        %1518 = vmatprep.mubr.bf16.mxu0 %v365
        %1519 = vmatmul.mubr.bf16.gmra.mrb[0].mxu0 %v364
        %v1520 = vpop.f32.mrb[0].mxu0
        %v1521 = vadd.f32 %v489, %v1520
        %v1522 = vpop.f32.mrb[0].mxu0
        %v1523 = vadd.f32 %v493, %v1522
        %v1524 = vpop.f32.mrb[0].mxu0
        %v1525 = vadd.f32 %v489, %v1524
        %v1526 = vpop.f32.mrb[0].mxu0
        %v1527 = vadd.f32 %v493, %v1526
        %1528 = vmatprep.mubr.bf16.mxu0 %v367
        %1529 = vmatmul.mubr.bf16.gmra.mrb[0].mxu0 %v366
        %v1530 = vpop.f32.mrb[0].mxu0
        %v1531 = vadd.f32 %v489, %v1530
        %v1532 = vpop.f32.mrb[0].mxu0
        %v1533 = vadd.f32 %v493, %v1532
        %v1534 = vpop.f32.mrb[0].mxu0
        %v1535 = vadd.f32 %v489, %v1534
        %v1536 = vpop.f32.mrb[0].mxu0
        %v1537 = vadd.f32 %v493, %v1536
        %1538 = vmatprep.mubr.bf16.mxu0 %v369
        %1539 = vmatmul.mubr.bf16.gmra.mrb[0].mxu0 %v368
        %v1540 = vpop.f32.mrb[0].mxu0
        %v1541 = vadd.f32 %v489, %v1540
        %v1542 = vpop.f32.mrb[0].mxu0
        %v1543 = vadd.f32 %v493, %v1542
        %v1544 = vpop.f32.mrb[0].mxu0
        %v1545 = vadd.f32 %v489, %v1544
        %v1546 = vpop.f32.mrb[0].mxu0
        %v1547 = vadd.f32 %v493, %v1546
        %1548 = vmatprep.mubr.bf16.mxu0 %v371
        %1549 = vmatmul.mubr.bf16.gmra.mrb[0].mxu0 %v370
        %v1550 = vpop.f32.mrb[0].mxu0
        %v1551 = vadd.f32 %v489, %v1550
        %v1552 = vpop.f32.mrb[0].mxu0
        %v1553 = vadd.f32 %v493, %v1552
        %v1554 = vpop.f32.mrb[0].mxu0
        %v1555 = vadd.f32 %v489, %v1554
        %v1556 = vpop.f32.mrb[0].mxu0
        %v1557 = vadd.f32 %v493, %v1556
        %1558 = vdwg.mxu0
        %v1559 = vpack.c.bf16 %v1019, %v1015
        %v1560 = vpack.c.bf16 %v1021, %v1017
        %v1561 = vpack.c.bf16 %v1212, %v1208
        %v1562 = vpack.c.bf16 %v1214, %v1210
        %v1563 = vpack.c.bf16 %v1405, %v1401
        %v1564 = vpack.c.bf16 %v1407, %v1403
        %v1565 = vpack.c.bf16 %v1029, %v1025
        %v1566 = vpack.c.bf16 %v1031, %v1027
        %v1567 = vpack.c.bf16 %v1222, %v1218
        %v1568 = vpack.c.bf16 %v1224, %v1220
        %v1569 = vpack.c.bf16 %v1415, %v1411
        %v1570 = vpack.c.bf16 %v1417, %v1413
        %v1571 = vpack.c.bf16 %v1039, %v1035
        %v1572 = vpack.c.bf16 %v1041, %v1037
        %v1573 = vpack.c.bf16 %v1232, %v1228
        %v1574 = vpack.c.bf16 %v1234, %v1230
        %v1575 = vpack.c.bf16 %v1425, %v1421
        %v1576 = vpack.c.bf16 %v1427, %v1423
        %v1577 = vpack.c.bf16 %v1049, %v1045
        %v1578 = vpack.c.bf16 %v1051, %v1047
        %v1579 = vpack.c.bf16 %v1242, %v1238
        %v1580 = vpack.c.bf16 %v1244, %v1240
        %v1581 = vpack.c.bf16 %v1435, %v1431
        %v1582 = vpack.c.bf16 %v1437, %v1433
        %v1583 = vpack.c.bf16 %v1059, %v1055
        %v1584 = vpack.c.bf16 %v1061, %v1057
        %v1585 = vpack.c.bf16 %v1252, %v1248
        %v1586 = vpack.c.bf16 %v1254, %v1250
        %v1587 = vpack.c.bf16 %v1445, %v1441
        %v1588 = vpack.c.bf16 %v1447, %v1443
        %v1589 = vpack.c.bf16 %v1069, %v1065
        %v1590 = vpack.c.bf16 %v1071, %v1067
        %v1591 = vpack.c.bf16 %v1262, %v1258
        %v1592 = vpack.c.bf16 %v1264, %v1260
        %v1593 = vpack.c.bf16 %v1455, %v1451
        %v1594 = vpack.c.bf16 %v1457, %v1453
        %v1595 = vpack.c.bf16 %v1079, %v1075
        %v1596 = vpack.c.bf16 %v1081, %v1077
        %v1597 = vpack.c.bf16 %v1272, %v1268
        %v1598 = vpack.c.bf16 %v1274, %v1270
        %v1599 = vpack.c.bf16 %v1465, %v1461
        %v1600 = vpack.c.bf16 %v1467, %v1463
        %v1601 = vpack.c.bf16 %v1089, %v1085
        %v1602 = vpack.c.bf16 %v1091, %v1087
        %v1603 = vpack.c.bf16 %v1282, %v1278
        %v1604 = vpack.c.bf16 %v1284, %v1280
        %v1605 = vpack.c.bf16 %v1475, %v1471
        %v1606 = vpack.c.bf16 %v1477, %v1473
        %v1607 = vpack.c.bf16 %v1099, %v1095
        %v1608 = vpack.c.bf16 %v1101, %v1097
        %v1609 = vpack.c.bf16 %v1292, %v1288
        %v1610 = vpack.c.bf16 %v1294, %v1290
        %v1611 = vpack.c.bf16 %v1485, %v1481
        %v1612 = vpack.c.bf16 %v1487, %v1483
        %v1613 = vpack.c.bf16 %v1109, %v1105
        %v1614 = vpack.c.bf16 %v1111, %v1107
        %v1615 = vpack.c.bf16 %v1302, %v1298
        %v1616 = vpack.c.bf16 %v1304, %v1300
        %v1617 = vpack.c.bf16 %v1495, %v1491
        %v1618 = vpack.c.bf16 %v1497, %v1493
        %v1619 = vpack.c.bf16 %v1119, %v1115
        %v1620 = vpack.c.bf16 %v1121, %v1117
        %v1621 = vpack.c.bf16 %v1312, %v1308
        %v1622 = vpack.c.bf16 %v1314, %v1310
        %v1623 = vpack.c.bf16 %v1505, %v1501
        %v1624 = vpack.c.bf16 %v1507, %v1503
        %v1625 = vpack.c.bf16 %v1129, %v1125
        %v1626 = vpack.c.bf16 %v1131, %v1127
        %v1627 = vpack.c.bf16 %v1322, %v1318
        %v1628 = vpack.c.bf16 %v1324, %v1320
        %v1629 = vpack.c.bf16 %v1515, %v1511
        %v1630 = vpack.c.bf16 %v1517, %v1513
        %v1631 = vpack.c.bf16 %v1139, %v1135
        %v1632 = vpack.c.bf16 %v1141, %v1137
        %v1633 = vpack.c.bf16 %v1332, %v1328
        %v1634 = vpack.c.bf16 %v1334, %v1330
        %v1635 = vpack.c.bf16 %v1525, %v1521
        %v1636 = vpack.c.bf16 %v1527, %v1523
        %v1637 = vpack.c.bf16 %v1149, %v1145
        %v1638 = vpack.c.bf16 %v1151, %v1147
        %v1639 = vpack.c.bf16 %v1342, %v1338
        %v1640 = vpack.c.bf16 %v1344, %v1340
        %v1641 = vpack.c.bf16 %v1535, %v1531
        %v1642 = vpack.c.bf16 %v1537, %v1533
        %v1643 = vpack.c.bf16 %v1159, %v1155
        %v1644 = vpack.c.bf16 %v1161, %v1157
        %v1645 = vpack.c.bf16 %v1352, %v1348
        %v1646 = vpack.c.bf16 %v1354, %v1350
        %v1647 = vpack.c.bf16 %v1545, %v1541
        %v1648 = vpack.c.bf16 %v1547, %v1543
        %v1649 = vpack.c.bf16 %v1169, %v1165
        %v1650 = vpack.c.bf16 %v1171, %v1167
        %v1651 = vpack.c.bf16 %v1362, %v1358
        %v1652 = vpack.c.bf16 %v1364, %v1360
        %v1653 = vpack.c.bf16 %v1555, %v1551
        %v1654 = vpack.c.bf16 %v1557, %v1553
        %1655 = vst [vmem:[#allocation2] sm:$0xff] %v1559
        %1656 = vst [vmem:[#allocation2 + $0x8] sm:$0xff] %v1560
        %1657 = vst [vmem:[#allocation2 + $0x10] sm:$0xff] %v1561
        %1658 = vst [vmem:[#allocation2 + $0x18] sm:$0xff] %v1562
        %1659 = vst [vmem:[#allocation2 + $0x20] sm:$0xff] %v1563
        %1660 = vst [vmem:[#allocation2 + $0x28] sm:$0xff] %v1564
        %1661 = vst [vmem:[#allocation2 + $0x30] sm:$0xff] %v1565
        %1662 = vst [vmem:[#allocation2 + $0x38] sm:$0xff] %v1566
        %1663 = vst [vmem:[#allocation2 + $0x40] sm:$0xff] %v1567
        %1664 = vst [vmem:[#allocation2 + $0x48] sm:$0xff] %v1568
        %1665 = vst [vmem:[#allocation2 + $0x50] sm:$0xff] %v1569
        %1666 = vst [vmem:[#allocation2 + $0x58] sm:$0xff] %v1570
        %1667 = vst [vmem:[#allocation2 + $0x60] sm:$0xff] %v1571
        %1668 = vst [vmem:[#allocation2 + $0x68] sm:$0xff] %v1572
        %1669 = vst [vmem:[#allocation2 + $0x70] sm:$0xff] %v1573
        %1670 = vst [vmem:[#allocation2 + $0x78] sm:$0xff] %v1574
        %1671 = vst [vmem:[#allocation2 + $0x80] sm:$0xff] %v1575
        %1672 = vst [vmem:[#allocation2 + $0x88] sm:$0xff] %v1576
        %1673 = vst [vmem:[#allocation2 + $0x90] sm:$0xff] %v1577
        %1674 = vst [vmem:[#allocation2 + $0x98] sm:$0xff] %v1578
        %1675 = vst [vmem:[#allocation2 + $0xa0] sm:$0xff] %v1579
        %1676 = vst [vmem:[#allocation2 + $0xa8] sm:$0xff] %v1580
        %1677 = vst [vmem:[#allocation2 + $0xb0] sm:$0xff] %v1581
        %1678 = vst [vmem:[#allocation2 + $0xb8] sm:$0xff] %v1582
        %1679 = vst [vmem:[#allocation2 + $0xc0] sm:$0xff] %v1583
        %1680 = vst [vmem:[#allocation2 + $0xc8] sm:$0xff] %v1584
        %1681 = vst [vmem:[#allocation2 + $0xd0] sm:$0xff] %v1585
        %1682 = vst [vmem:[#allocation2 + $0xd8] sm:$0xff] %v1586
        %1683 = vst [vmem:[#allocation2 + $0xe0] sm:$0xff] %v1587
        %1684 = vst [vmem:[#allocation2 + $0xe8] sm:$0xff] %v1588
        %1685 = vst [vmem:[#allocation2 + $0xf0] sm:$0xff] %v1589
        %1686 = vst [vmem:[#allocation2 + $0xf8] sm:$0xff] %v1590
        %1687 = vst [vmem:[#allocation2 + $0x100] sm:$0xff] %v1591
        %1688 = vst [vmem:[#allocation2 + $0x108] sm:$0xff] %v1592
        %1689 = vst [vmem:[#allocation2 + $0x110] sm:$0xff] %v1593
        %1690 = vst [vmem:[#allocation2 + $0x118] sm:$0xff] %v1594
        %1691 = vst [vmem:[#allocation2 + $0x120] sm:$0xff] %v1595
        %1692 = vst [vmem:[#allocation2 + $0x128] sm:$0xff] %v1596
        %1693 = vst [vmem:[#allocation2 + $0x130] sm:$0xff] %v1597
        %1694 = vst [vmem:[#allocation2 + $0x138] sm:$0xff] %v1598
        %1695 = vst [vmem:[#allocation2 + $0x140] sm:$0xff] %v1599
        %1696 = vst [vmem:[#allocation2 + $0x148] sm:$0xff] %v1600
        %1697 = vst [vmem:[#allocation2 + $0x150] sm:$0xff] %v1601
        %1698 = vst [vmem:[#allocation2 + $0x158] sm:$0xff] %v1602
        %1699 = vst [vmem:[#allocation2 + $0x160] sm:$0xff] %v1603
        %1700 = vst [vmem:[#allocation2 + $0x168] sm:$0xff] %v1604
        %1701 = vst [vmem:[#allocation2 + $0x170] sm:$0xff] %v1605
        %1702 = vst [vmem:[#allocation2 + $0x178] sm:$0xff] %v1606
        %1703 = vst [vmem:[#allocation2 + $0x180] sm:$0xff] %v1607
        %1704 = vst [vmem:[#allocation2 + $0x188] sm:$0xff] %v1608
        %1705 = vst [vmem:[#allocation2 + $0x190] sm:$0xff] %v1609
        %1706 = vst [vmem:[#allocation2 + $0x198] sm:$0xff] %v1610
        %1707 = vst [vmem:[#allocation2 + $0x1a0] sm:$0xff] %v1611
        %1708 = vst [vmem:[#allocation2 + $0x1a8] sm:$0xff] %v1612
        %1709 = vst [vmem:[#allocation2 + $0x1b0] sm:$0xff] %v1613
        %1710 = vst [vmem:[#allocation2 + $0x1b8] sm:$0xff] %v1614
        %1711 = vst [vmem:[#allocation2 + $0x1c0] sm:$0xff] %v1615
        %1712 = vst [vmem:[#allocation2 + $0x1c8] sm:$0xff] %v1616
        %1713 = vst [vmem:[#allocation2 + $0x1d0] sm:$0xff] %v1617
        %1714 = vst [vmem:[#allocation2 + $0x1d8] sm:$0xff] %v1618
        %1715 = vst [vmem:[#allocation2 + $0x1e0] sm:$0xff] %v1619
        %1716 = vst [vmem:[#allocation2 + $0x1e8] sm:$0xff] %v1620
        %1717 = vst [vmem:[#allocation2 + $0x1f0] sm:$0xff] %v1621
        %1718 = vst [vmem:[#allocation2 + $0x1f8] sm:$0xff] %v1622
        %1719 = vst [vmem:[#allocation2 + $0x200] sm:$0xff] %v1623
        %1720 = vst [vmem:[#allocation2 + $0x208] sm:$0xff] %v1624
        %1721 = vst [vmem:[#allocation2 + $0x210] sm:$0xff] %v1625
        %1722 = vst [vmem:[#allocation2 + $0x218] sm:$0xff] %v1626
        %1723 = vst [vmem:[#allocation2 + $0x220] sm:$0xff] %v1627
        %1724 = vst [vmem:[#allocation2 + $0x228] sm:$0xff] %v1628
        %1725 = vst [vmem:[#allocation2 + $0x230] sm:$0xff] %v1629
        %1726 = vst [vmem:[#allocation2 + $0x238] sm:$0xff] %v1630
        %1727 = vst [vmem:[#allocation2 + $0x240] sm:$0xff] %v1631
        %1728 = vst [vmem:[#allocation2 + $0x248] sm:$0xff] %v1632
        %1729 = vst [vmem:[#allocation2 + $0x250] sm:$0xff] %v1633
        %1730 = vst [vmem:[#allocation2 + $0x258] sm:$0xff] %v1634
        %1731 = vst [vmem:[#allocation2 + $0x260] sm:$0xff] %v1635
        %1732 = vst [vmem:[#allocation2 + $0x268] sm:$0xff] %v1636
        %1733 = vst [vmem:[#allocation2 + $0x270] sm:$0xff] %v1637
        %1734 = vst [vmem:[#allocation2 + $0x278] sm:$0xff] %v1638
        %1735 = vst [vmem:[#allocation2 + $0x280] sm:$0xff] %v1639
        %1736 = vst [vmem:[#allocation2 + $0x288] sm:$0xff] %v1640
        %1737 = vst [vmem:[#allocation2 + $0x290] sm:$0xff] %v1641
        %1738 = vst [vmem:[#allocation2 + $0x298] sm:$0xff] %v1642
        %1739 = vst [vmem:[#allocation2 + $0x2a0] sm:$0xff] %v1643
        %1740 = vst [vmem:[#allocation2 + $0x2a8] sm:$0xff] %v1644
        %1741 = vst [vmem:[#allocation2 + $0x2b0] sm:$0xff] %v1645
        %1742 = vst [vmem:[#allocation2 + $0x2b8] sm:$0xff] %v1646
        %1743 = vst [vmem:[#allocation2 + $0x2c0] sm:$0xff] %v1647
        %1744 = vst [vmem:[#allocation2 + $0x2c8] sm:$0xff] %v1648
        %1745 = vst [vmem:[#allocation2 + $0x2d0] sm:$0xff] %v1649
        %1746 = vst [vmem:[#allocation2 + $0x2d8] sm:$0xff] %v1650
        %1747 = vst [vmem:[#allocation2 + $0x2e0] sm:$0xff] %v1651
        %1748 = vst [vmem:[#allocation2 + $0x2e8] sm:$0xff] %v1652
        %1749 = vst [vmem:[#allocation2 + $0x2f0] sm:$0xff] %v1653
        %1750 = vst [vmem:[#allocation2 + $0x2f8] sm:$0xff] %v1654
        %v1751 = vld [vmem:[#allocation2] sm:$0xff]
        %v1752 = vld [vmem:[#allocation2 + $0x30] sm:$0xff]
        %v1753 = vld [vmem:[#allocation2 + $0x60] sm:$0xff]
        %v1754 = vld [vmem:[#allocation2 + $0x90] sm:$0xff]
        %v1755 = vld [vmem:[#allocation2 + $0xc0] sm:$0xff]
        %v1756 = vld [vmem:[#allocation2 + $0xf0] sm:$0xff]
        %v1757 = vld [vmem:[#allocation2 + $0x120] sm:$0xff]
        %v1758 = vld [vmem:[#allocation2 + $0x150] sm:$0xff]
        %v1759 = vld [vmem:[#allocation2 + $0x10] sm:$0xff]
        %v1760 = vld [vmem:[#allocation2 + $0x40] sm:$0xff]
        %v1761 = vld [vmem:[#allocation2 + $0x70] sm:$0xff]
        %v1762 = vld [vmem:[#allocation2 + $0xa0] sm:$0xff]
        %v1763 = vld [vmem:[#allocation2 + $0xd0] sm:$0xff]
        %v1764 = vld [vmem:[#allocation2 + $0x100] sm:$0xff]
        %v1765 = vld [vmem:[#allocation2 + $0x130] sm:$0xff]
        %v1766 = vld [vmem:[#allocation2 + $0x160] sm:$0xff]
        %v1767 = vld [vmem:[#allocation2 + $0x20] sm:$0xff]
        %v1768 = vld [vmem:[#allocation2 + $0x50] sm:$0xff]
        %v1769 = vld [vmem:[#allocation2 + $0x80] sm:$0xff]
        %v1770 = vld [vmem:[#allocation2 + $0xb0] sm:$0xff]
        %v1771 = vld [vmem:[#allocation2 + $0xe0] sm:$0xff]
        %v1772 = vld [vmem:[#allocation2 + $0x110] sm:$0xff]
        %v1773 = vld [vmem:[#allocation2 + $0x140] sm:$0xff]
        %v1774 = vld [vmem:[#allocation2 + $0x170] sm:$0xff]
        %vm1775 = vcmask 523264
        %v1777 = vsel %vm1775, %v1751, 0
        %v1780 = vsel %vm1775, %v1752, 0
        %v1783 = vsel %vm1775, %v1753, 0
        %v1786 = vsel %vm1775, %v1754, 0
        %v1789 = vsel %vm1775, %v1755, 0
        %v1792 = vsel %vm1775, %v1756, 0
        %v1795 = vsel %vm1775, %v1757, 0
        %v1798 = vsel %vm1775, %v1758, 0
        %v1801 = vsel %vm1775, %v1759, 0
        %v1804 = vsel %vm1775, %v1760, 0
        %v1807 = vsel %vm1775, %v1761, 0
        %v1810 = vsel %vm1775, %v1762, 0
        %v1813 = vsel %vm1775, %v1763, 0
        %v1816 = vsel %vm1775, %v1764, 0
        %v1819 = vsel %vm1775, %v1765, 0
        %v1822 = vsel %vm1775, %v1766, 0
        %1824 = vmatprep.subr.bf16.mxu0 0
        %1825 = vmatpush1.bf16.xpose.msra.mxu0 %v1801
        %1826 = vmatprep.subr.bf16.mxu0 0
        %1827 = vmatpush1.bf16.xpose.msra.mxu0 %v1804
        %1828 = vmatprep.subr.bf16.mxu0 0
        %1829 = vmatpush1.bf16.xpose.msra.mxu0 %v1807
        %1830 = vmatprep.subr.bf16.mxu0 0
        %1831 = vmatpush1.bf16.xpose.msra.mxu0 %v1810
        %1832 = vmatprep.subr.bf16.mxu0 0
        %1833 = vmatpush1.bf16.xpose.msra.mxu0 %v1813
        %1834 = vmatprep.subr.bf16.mxu0 0
        %1835 = vmatpush1.bf16.xpose.msra.mxu0 %v1816
        %1836 = vmatprep.subr.bf16.mxu0 0
        %1837 = vmatpush1.bf16.xpose.msra.mxu0 %v1819
        %1838 = vmatprep.subr.bf16.mxu0 0
        %1839 = vmatpush1.bf16.xpose.msra.mxu0 %v1822
        %1840 = vmatprep.subr.bf16.mxu0 0
        %1841 = vmatpush1.bf16.xpose.msra.mxu0 0
        %1842 = vmatprep.subr.bf16.mxu0 0
        %1843 = vmatpush1.bf16.xpose.msra.mxu0 0
        %1844 = vmatprep.subr.bf16.mxu0 0
        %1845 = vmatpush1.bf16.xpose.msra.mxu0 0
        %1846 = vmatprep.subr.bf16.mxu0 0
        %1847 = vmatpush1.bf16.xpose.msra.mxu0 0
        %1848 = vmatprep.subr.bf16.mxu0 0
        %1849 = vmatpush1.bf16.xpose.msra.mxu0 0
        %1850 = vmatprep.subr.bf16.mxu0 0
        %1851 = vmatpush1.bf16.xpose.msra.mxu0 0
        %1852 = vmatprep.subr.bf16.mxu0 0
        %1853 = vmatpush1.bf16.xpose.msra.mxu0 0
        %1854 = vmatprep.subr.bf16.mxu0 0
        %1855 = vmatpush1.bf16.xpose.msra.mxu0 0
        %1856 = vmatprep.mubr.bf16.mxu0 0
        %1857 = vmatmul.mubr.bf16.gmra.mrb[0].mxu0 %v1777
        %v1858 = vpop.f32.mrb[0].mxu0
        %v1859 = vadd.f32 0.0, %v1858
        %v1860 = vpop.f32.mrb[0].mxu0
        %v1861 = vpop.f32.mrb[0].mxu0
        %v1862 = vadd.f32 0.0, %v1861
        %v1863 = vpop.f32.mrb[0].mxu0
        %1864 = vmatprep.mubr.bf16.mxu0 0
        %1865 = vmatmul.mubr.bf16.gmra.mrb[0].mxu0 %v1780
        %v1866 = vpop.f32.mrb[0].mxu0
        %v1867 = vadd.f32 0.0, %v1866
        %v1868 = vpop.f32.mrb[0].mxu0
        %v1869 = vpop.f32.mrb[0].mxu0
        %v1870 = vadd.f32 0.0, %v1869
        %v1871 = vpop.f32.mrb[0].mxu0
        %1872 = vmatprep.mubr.bf16.mxu0 0
        %1873 = vmatmul.mubr.bf16.gmra.mrb[0].mxu0 %v1783
        %v1874 = vpop.f32.mrb[0].mxu0
        %v1875 = vadd.f32 0.0, %v1874
        %v1876 = vpop.f32.mrb[0].mxu0
        %v1877 = vpop.f32.mrb[0].mxu0
        %v1878 = vadd.f32 0.0, %v1877
        %v1879 = vpop.f32.mrb[0].mxu0
        %1880 = vmatprep.mubr.bf16.mxu0 0
        %1881 = vmatmul.mubr.bf16.gmra.mrb[0].mxu0 %v1786
        %v1882 = vpop.f32.mrb[0].mxu0
        %v1883 = vadd.f32 0.0, %v1882
        %v1884 = vpop.f32.mrb[0].mxu0
        %v1885 = vpop.f32.mrb[0].mxu0
        %v1886 = vadd.f32 0.0, %v1885
        %v1887 = vpop.f32.mrb[0].mxu0
        %1888 = vmatprep.mubr.bf16.mxu0 0
        %1889 = vmatmul.mubr.bf16.gmra.mrb[0].mxu0 %v1789
        %v1890 = vpop.f32.mrb[0].mxu0
        %v1891 = vadd.f32 0.0, %v1890
        %v1892 = vpop.f32.mrb[0].mxu0
        %v1893 = vpop.f32.mrb[0].mxu0
        %v1894 = vadd.f32 0.0, %v1893
        %v1895 = vpop.f32.mrb[0].mxu0
        %1896 = vmatprep.mubr.bf16.mxu0 0
        %1897 = vmatmul.mubr.bf16.gmra.mrb[0].mxu0 %v1792
        %v1898 = vpop.f32.mrb[0].mxu0
        %v1899 = vadd.f32 0.0, %v1898
        %v1900 = vpop.f32.mrb[0].mxu0
        %v1901 = vpop.f32.mrb[0].mxu0
        %v1902 = vadd.f32 0.0, %v1901
        %v1903 = vpop.f32.mrb[0].mxu0
        %1904 = vmatprep.mubr.bf16.mxu0 0
        %1905 = vmatmul.mubr.bf16.gmra.mrb[0].mxu0 %v1795
        %v1906 = vpop.f32.mrb[0].mxu0
        %v1907 = vadd.f32 0.0, %v1906
        %v1908 = vpop.f32.mrb[0].mxu0
        %v1909 = vpop.f32.mrb[0].mxu0
        %v1910 = vadd.f32 0.0, %v1909
        %v1911 = vpop.f32.mrb[0].mxu0
        %1912 = vmatprep.mubr.bf16.mxu0 0
        %1913 = vmatmul.mubr.bf16.gmra.mrb[0].mxu0 %v1798
        %v1914 = vpop.f32.mrb[0].mxu0
        %v1915 = vadd.f32 0.0, %v1914
        %v1916 = vpop.f32.mrb[0].mxu0
        %v1917 = vpop.f32.mrb[0].mxu0
        %v1918 = vadd.f32 0.0, %v1917
        %v1919 = vpop.f32.mrb[0].mxu0
        %1920 = vdwg.mxu0
        %1921 = vmax.xlane.f32.xlu0 %v1859
        %v1922 = vpop.xlane.xlu0 %1921
        %1923 = vmax.xlane.f32.xlu0 %v1862
        %v1924 = vpop.xlane.xlu0 %1923
        %1925 = vmax.xlane.f32.xlu0 %v1867
        %v1926 = vpop.xlane.xlu0 %1925
        %1927 = vmax.xlane.f32.xlu0 %v1870
        %v1928 = vpop.xlane.xlu0 %1927
        %1929 = vmax.xlane.f32.xlu0 %v1875
        %v1930 = vpop.xlane.xlu0 %1929
        %1931 = vmax.xlane.f32.xlu0 %v1878
        %v1932 = vpop.xlane.xlu0 %1931
        %1933 = vmax.xlane.f32.xlu0 %v1883
        %v1934 = vpop.xlane.xlu0 %1933
        %1935 = vmax.xlane.f32.xlu0 %v1886
        %v1936 = vpop.xlane.xlu0 %1935
        %1937 = vmax.xlane.f32.xlu0 %v1891
        %v1938 = vpop.xlane.xlu0 %1937
        %1939 = vmax.xlane.f32.xlu0 %v1894
        %v1940 = vpop.xlane.xlu0 %1939
        %1941 = vmax.xlane.f32.xlu0 %v1899
        %v1942 = vpop.xlane.xlu0 %1941
        %1943 = vmax.xlane.f32.xlu0 %v1902
        %v1944 = vpop.xlane.xlu0 %1943
        %1945 = vmax.xlane.f32.xlu0 %v1907
        %v1946 = vpop.xlane.xlu0 %1945
        %1947 = vmax.xlane.f32.xlu0 %v1910
        %v1948 = vpop.xlane.xlu0 %1947
        %1949 = vmax.xlane.f32.xlu0 %v1915
        %v1950 = vpop.xlane.xlu0 %1949
        %1951 = vmax.xlane.f32.xlu0 %v1918
        %v1952 = vpop.xlane.xlu0 %1951
        %v1953 = vsub.f32 %v1859, %v1922
        %v1954 = vsub.f32 %v1862, %v1924
        %v1955 = vsub.f32 %v1867, %v1926
        %v1956 = vsub.f32 %v1870, %v1928
        %v1957 = vsub.f32 %v1875, %v1930
        %v1958 = vsub.f32 %v1878, %v1932
        %v1959 = vsub.f32 %v1883, %v1934
        %v1960 = vsub.f32 %v1886, %v1936
        %v1961 = vsub.f32 %v1891, %v1938
        %v1962 = vsub.f32 %v1894, %v1940
        %v1963 = vsub.f32 %v1899, %v1942
        %v1964 = vsub.f32 %v1902, %v1944
        %v1965 = vsub.f32 %v1907, %v1946
        %v1966 = vsub.f32 %v1910, %v1948
        %v1967 = vsub.f32 %v1915, %v1950
        %v1968 = vsub.f32 %v1918, %v1952
        %v1969 = vmul.f32 %v1953, 1.442695
        %v1970 = vpow.pop %v1969
        %v1971 = vmul.f32 %v1954, 1.442695
        %v1972 = vpow.pop %v1971
        %v1973 = vmul.f32 %v1955, 1.442695
        %v1974 = vpow.pop %v1973
        %v1975 = vmul.f32 %v1956, 1.442695
        %v1976 = vpow.pop %v1975
        %v1977 = vmul.f32 %v1957, 1.442695
        %v1978 = vpow.pop %v1977
        %v1979 = vmul.f32 %v1958, 1.442695
        %v1980 = vpow.pop %v1979
        %v1981 = vmul.f32 %v1959, 1.442695
        %v1982 = vpow.pop %v1981
        %v1983 = vmul.f32 %v1960, 1.442695
        %v1984 = vpow.pop %v1983
        %v1985 = vmul.f32 %v1961, 1.442695
        %v1986 = vpow.pop %v1985
        %v1987 = vmul.f32 %v1962, 1.442695
        %v1988 = vpow.pop %v1987
        %v1989 = vmul.f32 %v1963, 1.442695
        %v1990 = vpow.pop %v1989
        %v1991 = vmul.f32 %v1964, 1.442695
        %v1992 = vpow.pop %v1991
        %v1993 = vmul.f32 %v1965, 1.442695
        %v1994 = vpow.pop %v1993
        %v1995 = vmul.f32 %v1966, 1.442695
        %v1996 = vpow.pop %v1995
        %v1997 = vmul.f32 %v1967, 1.442695
        %v1998 = vpow.pop %v1997
        %v1999 = vmul.f32 %v1968, 1.442695
        %v2000 = vpow.pop %v1999
        %2001 = vadd.xlane.f32.xlu0 %v1970
        %v2002 = vpop.xlane.xlu0 %2001
        %2003 = vadd.xlane.f32.xlu0 %v1972
        %v2004 = vpop.xlane.xlu0 %2003
        %2005 = vadd.xlane.f32.xlu0 %v1974
        %v2006 = vpop.xlane.xlu0 %2005
        %2007 = vadd.xlane.f32.xlu0 %v1976
        %v2008 = vpop.xlane.xlu0 %2007
        %2009 = vadd.xlane.f32.xlu0 %v1978
        %v2010 = vpop.xlane.xlu0 %2009
        %2011 = vadd.xlane.f32.xlu0 %v1980
        %v2012 = vpop.xlane.xlu0 %2011
        %2013 = vadd.xlane.f32.xlu0 %v1982
        %v2014 = vpop.xlane.xlu0 %2013
        %2015 = vadd.xlane.f32.xlu0 %v1984
        %v2016 = vpop.xlane.xlu0 %2015
        %2017 = vadd.xlane.f32.xlu0 %v1986
        %v2018 = vpop.xlane.xlu0 %2017
        %2019 = vadd.xlane.f32.xlu0 %v1988
        %v2020 = vpop.xlane.xlu0 %2019
        %2021 = vadd.xlane.f32.xlu0 %v1990
        %v2022 = vpop.xlane.xlu0 %2021
        %2023 = vadd.xlane.f32.xlu0 %v1992
        %v2024 = vpop.xlane.xlu0 %2023
        %2025 = vadd.xlane.f32.xlu0 %v1994
        %v2026 = vpop.xlane.xlu0 %2025
        %2027 = vadd.xlane.f32.xlu0 %v1996
        %v2028 = vpop.xlane.xlu0 %2027
        %2029 = vadd.xlane.f32.xlu0 %v1998
        %v2030 = vpop.xlane.xlu0 %2029
        %2031 = vadd.xlane.f32.xlu0 %v2000
        %v2032 = vpop.xlane.xlu0 %2031
        %v2033 = vpack.c.bf16 %v1972, %v1970
        %v2034 = vpack.c.bf16 %v1976, %v1974
        %v2035 = vpack.c.bf16 %v1980, %v1978
        %v2036 = vpack.c.bf16 %v1984, %v1982
        %v2037 = vpack.c.bf16 %v1988, %v1986
        %v2038 = vpack.c.bf16 %v1992, %v1990
        %v2039 = vpack.c.bf16 %v1996, %v1994
        %v2040 = vpack.c.bf16 %v2000, %v1998
        %2041 = vmatprep.subr.bf16.mxu0 0
        %2042 = vmatpush1.bf16.msra.mxu0 %v1767
        %2043 = vmatprep.subr.bf16.mxu0 0
        %2044 = vmatpush1.bf16.msra.mxu0 %v1768
        %2045 = vmatprep.subr.bf16.mxu0 0
        %2046 = vmatpush1.bf16.msra.mxu0 %v1769
        %2047 = vmatprep.subr.bf16.mxu0 0
        %2048 = vmatpush1.bf16.msra.mxu0 %v1770
        %2049 = vmatprep.subr.bf16.mxu0 0
        %2050 = vmatpush1.bf16.msra.mxu0 %v1771
        %2051 = vmatprep.subr.bf16.mxu0 0
        %2052 = vmatpush1.bf16.msra.mxu0 %v1772
        %2053 = vmatprep.subr.bf16.mxu0 0
        %2054 = vmatpush1.bf16.msra.mxu0 %v1773
        %2055 = vmatprep.subr.bf16.mxu0 0
        %2056 = vmatpush1.bf16.msra.mxu0 %v1774
        %2057 = vmatprep.subr.bf16.mxu0 0
        %2058 = vmatpush1.bf16.msra.mxu0 0
        %2059 = vmatprep.subr.bf16.mxu0 0
        %2060 = vmatpush1.bf16.msra.mxu0 0
        %2061 = vmatprep.subr.bf16.mxu0 0
        %2062 = vmatpush1.bf16.msra.mxu0 0
        %2063 = vmatprep.subr.bf16.mxu0 0
        %2064 = vmatpush1.bf16.msra.mxu0 0
        %2065 = vmatprep.subr.bf16.mxu0 0
        %2066 = vmatpush1.bf16.msra.mxu0 0
        %2067 = vmatprep.subr.bf16.mxu0 0
        %2068 = vmatpush1.bf16.msra.mxu0 0
        %2069 = vmatprep.subr.bf16.mxu0 0
        %2070 = vmatpush1.bf16.msra.mxu0 0
        %2071 = vmatprep.subr.bf16.mxu0 0
        %2072 = vmatpush1.bf16.msra.mxu0 0
        %2073 = vmatprep.mubr.bf16.mxu0 0
        %2074 = vmatmul.mubr.bf16.gmra.mrb[0].mxu0 %v2033
        %v2075 = vpop.f32.mrb[0].mxu0
        %v2076 = vadd.f32 0.0, %v2075
        %v2077 = vpop.f32.mrb[0].mxu0
        %v2078 = vpop.f32.mrb[0].mxu0
        %v2079 = vadd.f32 0.0, %v2078
        %v2080 = vpop.f32.mrb[0].mxu0
        %2081 = vmatprep.mubr.bf16.mxu0 0
        %2082 = vmatmul.mubr.bf16.gmra.mrb[0].mxu0 %v2034
        %v2083 = vpop.f32.mrb[0].mxu0
        %v2084 = vadd.f32 0.0, %v2083
        %v2085 = vpop.f32.mrb[0].mxu0
        %v2086 = vpop.f32.mrb[0].mxu0
        %v2087 = vadd.f32 0.0, %v2086
        %v2088 = vpop.f32.mrb[0].mxu0
        %2089 = vmatprep.mubr.bf16.mxu0 0
        %2090 = vmatmul.mubr.bf16.gmra.mrb[0].mxu0 %v2035
        %v2091 = vpop.f32.mrb[0].mxu0
        %v2092 = vadd.f32 0.0, %v2091
        %v2093 = vpop.f32.mrb[0].mxu0
        %v2094 = vpop.f32.mrb[0].mxu0
        %v2095 = vadd.f32 0.0, %v2094
        %v2096 = vpop.f32.mrb[0].mxu0
        %2097 = vmatprep.mubr.bf16.mxu0 0
        %2098 = vmatmul.mubr.bf16.gmra.mrb[0].mxu0 %v2036
        %v2099 = vpop.f32.mrb[0].mxu0
        %v2100 = vadd.f32 0.0, %v2099
        %v2101 = vpop.f32.mrb[0].mxu0
        %v2102 = vpop.f32.mrb[0].mxu0
        %v2103 = vadd.f32 0.0, %v2102
        %v2104 = vpop.f32.mrb[0].mxu0
        %2105 = vmatprep.mubr.bf16.mxu0 0
        %2106 = vmatmul.mubr.bf16.gmra.mrb[0].mxu0 %v2037
        %v2107 = vpop.f32.mrb[0].mxu0
        %v2108 = vadd.f32 0.0, %v2107
        %v2109 = vpop.f32.mrb[0].mxu0
        %v2110 = vpop.f32.mrb[0].mxu0
        %v2111 = vadd.f32 0.0, %v2110
        %v2112 = vpop.f32.mrb[0].mxu0
        %2113 = vmatprep.mubr.bf16.mxu0 0
        %2114 = vmatmul.mubr.bf16.gmra.mrb[0].mxu0 %v2038
        %v2115 = vpop.f32.mrb[0].mxu0
        %v2116 = vadd.f32 0.0, %v2115
        %v2117 = vpop.f32.mrb[0].mxu0
        %v2118 = vpop.f32.mrb[0].mxu0
        %v2119 = vadd.f32 0.0, %v2118
        %v2120 = vpop.f32.mrb[0].mxu0
        %2121 = vmatprep.mubr.bf16.mxu0 0
        %2122 = vmatmul.mubr.bf16.gmra.mrb[0].mxu0 %v2039
        %v2123 = vpop.f32.mrb[0].mxu0
        %v2124 = vadd.f32 0.0, %v2123
        %v2125 = vpop.f32.mrb[0].mxu0
        %v2126 = vpop.f32.mrb[0].mxu0
        %v2127 = vadd.f32 0.0, %v2126
        %v2128 = vpop.f32.mrb[0].mxu0
        %2129 = vmatprep.mubr.bf16.mxu0 0
        %2130 = vmatmul.mubr.bf16.gmra.mrb[0].mxu0 %v2040
        %v2131 = vpop.f32.mrb[0].mxu0
        %v2132 = vadd.f32 0.0, %v2131
        %v2133 = vpop.f32.mrb[0].mxu0
        %v2134 = vpop.f32.mrb[0].mxu0
        %v2135 = vadd.f32 0.0, %v2134
        %v2136 = vpop.f32.mrb[0].mxu0
        %2137 = vdwg.mxu0
        %v2138 = vrcp.pop %v2002
        %v2139 = vrcp.pop %v2004
        %v2140 = vrcp.pop %v2006
        %v2141 = vrcp.pop %v2008
        %v2142 = vrcp.pop %v2010
        %v2143 = vrcp.pop %v2012
        %v2144 = vrcp.pop %v2014
        %v2145 = vrcp.pop %v2016
        %v2146 = vrcp.pop %v2018
        %v2147 = vrcp.pop %v2020
        %v2148 = vrcp.pop %v2022
        %v2149 = vrcp.pop %v2024
        %v2150 = vrcp.pop %v2026
        %v2151 = vrcp.pop %v2028
        %v2152 = vrcp.pop %v2030
        %v2153 = vrcp.pop %v2032
        %v2154 = vmul.f32 %v2076, %v2138
        %v2155 = vmul.f32 %v2079, %v2139
        %v2156 = vmul.f32 %v2084, %v2140
        %v2157 = vmul.f32 %v2087, %v2141
        %v2158 = vmul.f32 %v2092, %v2142
        %v2159 = vmul.f32 %v2095, %v2143
        %v2160 = vmul.f32 %v2100, %v2144
        %v2161 = vmul.f32 %v2103, %v2145
        %v2162 = vmul.f32 %v2108, %v2146
        %v2163 = vmul.f32 %v2111, %v2147
        %v2164 = vmul.f32 %v2116, %v2148
        %v2165 = vmul.f32 %v2119, %v2149
        %v2166 = vmul.f32 %v2124, %v2150
        %v2167 = vmul.f32 %v2127, %v2151
        %v2168 = vmul.f32 %v2132, %v2152
        %v2169 = vmul.f32 %v2135, %v2153
        %v2170 = vpack.c.bf16 %v2155, %v2154
        %v2171 = vpack.c.bf16 %v2157, %v2156
        %v2172 = vpack.c.bf16 %v2159, %v2158
        %v2173 = vpack.c.bf16 %v2161, %v2160
        %v2174 = vpack.c.bf16 %v2163, %v2162
        %v2175 = vpack.c.bf16 %v2165, %v2164
        %v2176 = vpack.c.bf16 %v2167, %v2166
        %v2177 = vpack.c.bf16 %v2169, %v2168
        %2178 = vst.msk [vmem:[#allocation3] sm:$0xff] %vm1775, %v2170
        %2179 = vst.msk [vmem:[#allocation3 + $0x10] sm:$0xff] %vm1775, %v2171
        %2180 = vst.msk [vmem:[#allocation3 + $0x20] sm:$0xff] %vm1775, %v2172
        %2181 = vst.msk [vmem:[#allocation3 + $0x30] sm:$0xff] %vm1775, %v2173
        %2182 = vst.msk [vmem:[#allocation3 + $0x40] sm:$0xff] %vm1775, %v2174
        %2183 = vst.msk [vmem:[#allocation3 + $0x50] sm:$0xff] %vm1775, %v2175
        %2184 = vst.msk [vmem:[#allocation3 + $0x60] sm:$0xff] %vm1775, %v2176
        %2185 = vst.msk [vmem:[#allocation3 + $0x70] sm:$0xff] %vm1775, %v2177
        %v2186 = vld [vmem:[#allocation2] sm:$0xff]
        %v2187 = vld [vmem:[#allocation2 + $0x30] sm:$0xff]
        %v2188 = vld [vmem:[#allocation2 + $0x60] sm:$0xff]
        %v2189 = vld [vmem:[#allocation2 + $0x90] sm:$0xff]
        %v2190 = vld [vmem:[#allocation2 + $0xc0] sm:$0xff]
        %v2191 = vld [vmem:[#allocation2 + $0xf0] sm:$0xff]
        %v2192 = vld [vmem:[#allocation2 + $0x120] sm:$0xff]
        %v2193 = vld [vmem:[#allocation2 + $0x150] sm:$0xff]
        %v2194 = vld [vmem:[#allocation2 + $0x10] sm:$0xff]
        %v2195 = vld [vmem:[#allocation2 + $0x40] sm:$0xff]
        %v2196 = vld [vmem:[#allocation2 + $0x70] sm:$0xff]
        %v2197 = vld [vmem:[#allocation2 + $0xa0] sm:$0xff]
        %v2198 = vld [vmem:[#allocation2 + $0xd0] sm:$0xff]
        %v2199 = vld [vmem:[#allocation2 + $0x100] sm:$0xff]
        %v2200 = vld [vmem:[#allocation2 + $0x130] sm:$0xff]
        %v2201 = vld [vmem:[#allocation2 + $0x160] sm:$0xff]
        %v2202 = vld [vmem:[#allocation2 + $0x20] sm:$0xff]
        %v2203 = vld [vmem:[#allocation2 + $0x50] sm:$0xff]
        %v2204 = vld [vmem:[#allocation2 + $0x80] sm:$0xff]
        %v2205 = vld [vmem:[#allocation2 + $0xb0] sm:$0xff]
        %v2206 = vld [vmem:[#allocation2 + $0xe0] sm:$0xff]
        %v2207 = vld [vmem:[#allocation2 + $0x110] sm:$0xff]
        %v2208 = vld [vmem:[#allocation2 + $0x140] sm:$0xff]
        %v2209 = vld [vmem:[#allocation2 + $0x170] sm:$0xff]
        %2218 = vrot.lane.b32.xlu0 %v2186, 64
        %v2219 = vpop.permute.xlu0 %2218
        %2220 = vrot.lane.b32.xlu0 %v2187, 64
        %v2221 = vpop.permute.xlu0 %2220
        %2222 = vrot.lane.b32.xlu0 %v2188, 64
        %v2223 = vpop.permute.xlu0 %2222
        %2224 = vrot.lane.b32.xlu0 %v2189, 64
        %v2225 = vpop.permute.xlu0 %2224
        %2226 = vrot.lane.b32.xlu0 %v2190, 64
        %v2227 = vpop.permute.xlu0 %2226
        %2228 = vrot.lane.b32.xlu0 %v2191, 64
        %v2229 = vpop.permute.xlu0 %2228
        %2230 = vrot.lane.b32.xlu0 %v2192, 64
        %v2231 = vpop.permute.xlu0 %2230
        %2232 = vrot.lane.b32.xlu0 %v2193, 64
        %v2233 = vpop.permute.xlu0 %2232
        %2242 = vrot.lane.b32.xlu0 %v2194, 64
        %v2243 = vpop.permute.xlu0 %2242
        %2244 = vrot.lane.b32.xlu0 %v2195, 64
        %v2245 = vpop.permute.xlu0 %2244
        %2246 = vrot.lane.b32.xlu0 %v2196, 64
        %v2247 = vpop.permute.xlu0 %2246
        %2248 = vrot.lane.b32.xlu0 %v2197, 64
        %v2249 = vpop.permute.xlu0 %2248
        %2250 = vrot.lane.b32.xlu0 %v2198, 64
        %v2251 = vpop.permute.xlu0 %2250
        %2252 = vrot.lane.b32.xlu0 %v2199, 64
        %v2253 = vpop.permute.xlu0 %2252
        %2254 = vrot.lane.b32.xlu0 %v2200, 64
        %v2255 = vpop.permute.xlu0 %2254
        %2256 = vrot.lane.b32.xlu0 %v2201, 64
        %v2257 = vpop.permute.xlu0 %2256
        %v2259 = vsel %vm1775, %v2219, 0
        %v2262 = vsel %vm1775, %v2221, 0
        %v2265 = vsel %vm1775, %v2223, 0
        %v2268 = vsel %vm1775, %v2225, 0
        %v2271 = vsel %vm1775, %v2227, 0
        %v2274 = vsel %vm1775, %v2229, 0
        %v2277 = vsel %vm1775, %v2231, 0
        %v2280 = vsel %vm1775, %v2233, 0
        %v2283 = vsel %vm1775, %v2243, 0
        %v2286 = vsel %vm1775, %v2245, 0
        %v2289 = vsel %vm1775, %v2247, 0
        %v2292 = vsel %vm1775, %v2249, 0
        %v2295 = vsel %vm1775, %v2251, 0
        %v2298 = vsel %vm1775, %v2253, 0
        %v2301 = vsel %vm1775, %v2255, 0
        %v2304 = vsel %vm1775, %v2257, 0
        %2306 = vmatprep.subr.bf16.mxu0 0
        %2307 = vmatpush1.bf16.xpose.msra.mxu0 %v2283
        %2308 = vmatprep.subr.bf16.mxu0 0
        %2309 = vmatpush1.bf16.xpose.msra.mxu0 %v2286
        %2310 = vmatprep.subr.bf16.mxu0 0
        %2311 = vmatpush1.bf16.xpose.msra.mxu0 %v2289
        %2312 = vmatprep.subr.bf16.mxu0 0
        %2313 = vmatpush1.bf16.xpose.msra.mxu0 %v2292
        %2314 = vmatprep.subr.bf16.mxu0 0
        %2315 = vmatpush1.bf16.xpose.msra.mxu0 %v2295
        %2316 = vmatprep.subr.bf16.mxu0 0
        %2317 = vmatpush1.bf16.xpose.msra.mxu0 %v2298
        %2318 = vmatprep.subr.bf16.mxu0 0
        %2319 = vmatpush1.bf16.xpose.msra.mxu0 %v2301
        %2320 = vmatprep.subr.bf16.mxu0 0
        %2321 = vmatpush1.bf16.xpose.msra.mxu0 %v2304
        %2322 = vmatprep.subr.bf16.mxu0 0
        %2323 = vmatpush1.bf16.xpose.msra.mxu0 0
        %2324 = vmatprep.subr.bf16.mxu0 0
        %2325 = vmatpush1.bf16.xpose.msra.mxu0 0
        %2326 = vmatprep.subr.bf16.mxu0 0
        %2327 = vmatpush1.bf16.xpose.msra.mxu0 0
        %2328 = vmatprep.subr.bf16.mxu0 0
        %2329 = vmatpush1.bf16.xpose.msra.mxu0 0
        %2330 = vmatprep.subr.bf16.mxu0 0
        %2331 = vmatpush1.bf16.xpose.msra.mxu0 0
        %2332 = vmatprep.subr.bf16.mxu0 0
        %2333 = vmatpush1.bf16.xpose.msra.mxu0 0
        %2334 = vmatprep.subr.bf16.mxu0 0
        %2335 = vmatpush1.bf16.xpose.msra.mxu0 0
        %2336 = vmatprep.subr.bf16.mxu0 0
        %2337 = vmatpush1.bf16.xpose.msra.mxu0 0
        %2338 = vmatprep.mubr.bf16.mxu0 0
        %2339 = vmatmul.mubr.bf16.gmra.mrb[0].mxu0 %v2259
        %v2340 = vpop.f32.mrb[0].mxu0
        %v2341 = vadd.f32 0.0, %v2340
        %v2342 = vpop.f32.mrb[0].mxu0
        %v2343 = vpop.f32.mrb[0].mxu0
        %v2344 = vadd.f32 0.0, %v2343
        %v2345 = vpop.f32.mrb[0].mxu0
        %2346 = vmatprep.mubr.bf16.mxu0 0
        %2347 = vmatmul.mubr.bf16.gmra.mrb[0].mxu0 %v2262
        %v2348 = vpop.f32.mrb[0].mxu0
        %v2349 = vadd.f32 0.0, %v2348
        %v2350 = vpop.f32.mrb[0].mxu0
        %v2351 = vpop.f32.mrb[0].mxu0
        %v2352 = vadd.f32 0.0, %v2351
        %v2353 = vpop.f32.mrb[0].mxu0
        %2354 = vmatprep.mubr.bf16.mxu0 0
        %2355 = vmatmul.mubr.bf16.gmra.mrb[0].mxu0 %v2265
        %v2356 = vpop.f32.mrb[0].mxu0
        %v2357 = vadd.f32 0.0, %v2356
        %v2358 = vpop.f32.mrb[0].mxu0
        %v2359 = vpop.f32.mrb[0].mxu0
        %v2360 = vadd.f32 0.0, %v2359
        %v2361 = vpop.f32.mrb[0].mxu0
        %2362 = vmatprep.mubr.bf16.mxu0 0
        %2363 = vmatmul.mubr.bf16.gmra.mrb[0].mxu0 %v2268
        %v2364 = vpop.f32.mrb[0].mxu0
        %v2365 = vadd.f32 0.0, %v2364
        %v2366 = vpop.f32.mrb[0].mxu0
        %v2367 = vpop.f32.mrb[0].mxu0
        %v2368 = vadd.f32 0.0, %v2367
        %v2369 = vpop.f32.mrb[0].mxu0
        %2370 = vmatprep.mubr.bf16.mxu0 0
        %2371 = vmatmul.mubr.bf16.gmra.mrb[0].mxu0 %v2271
        %v2372 = vpop.f32.mrb[0].mxu0
        %v2373 = vadd.f32 0.0, %v2372
        %v2374 = vpop.f32.mrb[0].mxu0
        %v2375 = vpop.f32.mrb[0].mxu0
        %v2376 = vadd.f32 0.0, %v2375
        %v2377 = vpop.f32.mrb[0].mxu0
        %2378 = vmatprep.mubr.bf16.mxu0 0
        %2379 = vmatmul.mubr.bf16.gmra.mrb[0].mxu0 %v2274
        %v2380 = vpop.f32.mrb[0].mxu0
        %v2381 = vadd.f32 0.0, %v2380
        %v2382 = vpop.f32.mrb[0].mxu0
        %v2383 = vpop.f32.mrb[0].mxu0
        %v2384 = vadd.f32 0.0, %v2383
        %v2385 = vpop.f32.mrb[0].mxu0
        %2386 = vmatprep.mubr.bf16.mxu0 0
        %2387 = vmatmul.mubr.bf16.gmra.mrb[0].mxu0 %v2277
        %v2388 = vpop.f32.mrb[0].mxu0
        %v2389 = vadd.f32 0.0, %v2388
        %v2390 = vpop.f32.mrb[0].mxu0
        %v2391 = vpop.f32.mrb[0].mxu0
        %v2392 = vadd.f32 0.0, %v2391
        %v2393 = vpop.f32.mrb[0].mxu0
        %2394 = vmatprep.mubr.bf16.mxu0 0
        %2395 = vmatmul.mubr.bf16.gmra.mrb[0].mxu0 %v2280
        %v2396 = vpop.f32.mrb[0].mxu0
        %v2397 = vadd.f32 0.0, %v2396
        %v2398 = vpop.f32.mrb[0].mxu0
        %v2399 = vpop.f32.mrb[0].mxu0
        %v2400 = vadd.f32 0.0, %v2399
        %v2401 = vpop.f32.mrb[0].mxu0
        %2402 = vdwg.mxu0
        %2403 = vmax.xlane.f32.xlu0 %v2341
        %v2404 = vpop.xlane.xlu0 %2403
        %2405 = vmax.xlane.f32.xlu0 %v2344
        %v2406 = vpop.xlane.xlu0 %2405
        %2407 = vmax.xlane.f32.xlu0 %v2349
        %v2408 = vpop.xlane.xlu0 %2407
        %2409 = vmax.xlane.f32.xlu0 %v2352
        %v2410 = vpop.xlane.xlu0 %2409
        %2411 = vmax.xlane.f32.xlu0 %v2357
        %v2412 = vpop.xlane.xlu0 %2411
        %2413 = vmax.xlane.f32.xlu0 %v2360
        %v2414 = vpop.xlane.xlu0 %2413
        %2415 = vmax.xlane.f32.xlu0 %v2365
        %v2416 = vpop.xlane.xlu0 %2415
        %2417 = vmax.xlane.f32.xlu0 %v2368
        %v2418 = vpop.xlane.xlu0 %2417
        %2419 = vmax.xlane.f32.xlu0 %v2373
        %v2420 = vpop.xlane.xlu0 %2419
        %2421 = vmax.xlane.f32.xlu0 %v2376
        %v2422 = vpop.xlane.xlu0 %2421
        %2423 = vmax.xlane.f32.xlu0 %v2381
        %v2424 = vpop.xlane.xlu0 %2423
        %2425 = vmax.xlane.f32.xlu0 %v2384
        %v2426 = vpop.xlane.xlu0 %2425
        %2427 = vmax.xlane.f32.xlu0 %v2389
        %v2428 = vpop.xlane.xlu0 %2427
        %2429 = vmax.xlane.f32.xlu0 %v2392
        %v2430 = vpop.xlane.xlu0 %2429
        %2431 = vmax.xlane.f32.xlu0 %v2397
        %v2432 = vpop.xlane.xlu0 %2431
        %2433 = vmax.xlane.f32.xlu0 %v2400
        %v2434 = vpop.xlane.xlu0 %2433
        %v2435 = vsub.f32 %v2341, %v2404
        %v2436 = vsub.f32 %v2344, %v2406
        %v2437 = vsub.f32 %v2349, %v2408
        %v2438 = vsub.f32 %v2352, %v2410
        %v2439 = vsub.f32 %v2357, %v2412
        %v2440 = vsub.f32 %v2360, %v2414
        %v2441 = vsub.f32 %v2365, %v2416
        %v2442 = vsub.f32 %v2368, %v2418
        %v2443 = vsub.f32 %v2373, %v2420
        %v2444 = vsub.f32 %v2376, %v2422
        %v2445 = vsub.f32 %v2381, %v2424
        %v2446 = vsub.f32 %v2384, %v2426
        %v2447 = vsub.f32 %v2389, %v2428
        %v2448 = vsub.f32 %v2392, %v2430
        %v2449 = vsub.f32 %v2397, %v2432
        %v2450 = vsub.f32 %v2400, %v2434
        %v2451 = vmul.f32 %v2435, 1.442695
        %v2452 = vpow.pop %v2451
        %v2453 = vmul.f32 %v2436, 1.442695
        %v2454 = vpow.pop %v2453
        %v2455 = vmul.f32 %v2437, 1.442695
        %v2456 = vpow.pop %v2455
        %v2457 = vmul.f32 %v2438, 1.442695
        %v2458 = vpow.pop %v2457
        %v2459 = vmul.f32 %v2439, 1.442695
        %v2460 = vpow.pop %v2459
        %v2461 = vmul.f32 %v2440, 1.442695
        %v2462 = vpow.pop %v2461
        %v2463 = vmul.f32 %v2441, 1.442695
        %v2464 = vpow.pop %v2463
        %v2465 = vmul.f32 %v2442, 1.442695
        %v2466 = vpow.pop %v2465
        %v2467 = vmul.f32 %v2443, 1.442695
        %v2468 = vpow.pop %v2467
        %v2469 = vmul.f32 %v2444, 1.442695
        %v2470 = vpow.pop %v2469
        %v2471 = vmul.f32 %v2445, 1.442695
        %v2472 = vpow.pop %v2471
        %v2473 = vmul.f32 %v2446, 1.442695
        %v2474 = vpow.pop %v2473
        %v2475 = vmul.f32 %v2447, 1.442695
        %v2476 = vpow.pop %v2475
        %v2477 = vmul.f32 %v2448, 1.442695
        %v2478 = vpow.pop %v2477
        %v2479 = vmul.f32 %v2449, 1.442695
        %v2480 = vpow.pop %v2479
        %v2481 = vmul.f32 %v2450, 1.442695
        %v2482 = vpow.pop %v2481
        %2483 = vadd.xlane.f32.xlu0 %v2452
        %v2484 = vpop.xlane.xlu0 %2483
        %2485 = vadd.xlane.f32.xlu0 %v2454
        %v2486 = vpop.xlane.xlu0 %2485
        %2487 = vadd.xlane.f32.xlu0 %v2456
        %v2488 = vpop.xlane.xlu0 %2487
        %2489 = vadd.xlane.f32.xlu0 %v2458
        %v2490 = vpop.xlane.xlu0 %2489
        %2491 = vadd.xlane.f32.xlu0 %v2460
        %v2492 = vpop.xlane.xlu0 %2491
        %2493 = vadd.xlane.f32.xlu0 %v2462
        %v2494 = vpop.xlane.xlu0 %2493
        %2495 = vadd.xlane.f32.xlu0 %v2464
        %v2496 = vpop.xlane.xlu0 %2495
        %2497 = vadd.xlane.f32.xlu0 %v2466
        %v2498 = vpop.xlane.xlu0 %2497
        %2499 = vadd.xlane.f32.xlu0 %v2468
        %v2500 = vpop.xlane.xlu0 %2499
        %2501 = vadd.xlane.f32.xlu0 %v2470
        %v2502 = vpop.xlane.xlu0 %2501
        %2503 = vadd.xlane.f32.xlu0 %v2472
        %v2504 = vpop.xlane.xlu0 %2503
        %2505 = vadd.xlane.f32.xlu0 %v2474
        %v2506 = vpop.xlane.xlu0 %2505
        %2507 = vadd.xlane.f32.xlu0 %v2476
        %v2508 = vpop.xlane.xlu0 %2507
        %2509 = vadd.xlane.f32.xlu0 %v2478
        %v2510 = vpop.xlane.xlu0 %2509
        %2511 = vadd.xlane.f32.xlu0 %v2480
        %v2512 = vpop.xlane.xlu0 %2511
        %2513 = vadd.xlane.f32.xlu0 %v2482
        %v2514 = vpop.xlane.xlu0 %2513
        %v2515 = vpack.c.bf16 %v2454, %v2452
        %v2516 = vpack.c.bf16 %v2458, %v2456
        %v2517 = vpack.c.bf16 %v2462, %v2460
        %v2518 = vpack.c.bf16 %v2466, %v2464
        %v2519 = vpack.c.bf16 %v2470, %v2468
        %v2520 = vpack.c.bf16 %v2474, %v2472
        %v2521 = vpack.c.bf16 %v2478, %v2476
        %v2522 = vpack.c.bf16 %v2482, %v2480
        %2531 = vrot.lane.b32.xlu0 %v2202, 64
        %v2532 = vpop.permute.xlu0 %2531
        %2533 = vrot.lane.b32.xlu0 %v2203, 64
        %v2534 = vpop.permute.xlu0 %2533
        %2535 = vrot.lane.b32.xlu0 %v2204, 64
        %v2536 = vpop.permute.xlu0 %2535
        %2537 = vrot.lane.b32.xlu0 %v2205, 64
        %v2538 = vpop.permute.xlu0 %2537
        %2539 = vrot.lane.b32.xlu0 %v2206, 64
        %v2540 = vpop.permute.xlu0 %2539
        %2541 = vrot.lane.b32.xlu0 %v2207, 64
        %v2542 = vpop.permute.xlu0 %2541
        %2543 = vrot.lane.b32.xlu0 %v2208, 64
        %v2544 = vpop.permute.xlu0 %2543
        %2545 = vrot.lane.b32.xlu0 %v2209, 64
        %v2546 = vpop.permute.xlu0 %2545
        %2555 = vmatprep.subr.bf16.mxu0 0
        %2556 = vmatpush1.bf16.msra.mxu0 %v2532
        %2557 = vmatprep.subr.bf16.mxu0 0
        %2558 = vmatpush1.bf16.msra.mxu0 %v2534
        %2559 = vmatprep.subr.bf16.mxu0 0
        %2560 = vmatpush1.bf16.msra.mxu0 %v2536
        %2561 = vmatprep.subr.bf16.mxu0 0
        %2562 = vmatpush1.bf16.msra.mxu0 %v2538
        %2563 = vmatprep.subr.bf16.mxu0 0
        %2564 = vmatpush1.bf16.msra.mxu0 %v2540
        %2565 = vmatprep.subr.bf16.mxu0 0
        %2566 = vmatpush1.bf16.msra.mxu0 %v2542
        %2567 = vmatprep.subr.bf16.mxu0 0
        %2568 = vmatpush1.bf16.msra.mxu0 %v2544
        %2569 = vmatprep.subr.bf16.mxu0 0
        %2570 = vmatpush1.bf16.msra.mxu0 %v2546
        %2571 = vmatprep.subr.bf16.mxu0 0
        %2572 = vmatpush1.bf16.msra.mxu0 0
        %2573 = vmatprep.subr.bf16.mxu0 0
        %2574 = vmatpush1.bf16.msra.mxu0 0
        %2575 = vmatprep.subr.bf16.mxu0 0
        %2576 = vmatpush1.bf16.msra.mxu0 0
        %2577 = vmatprep.subr.bf16.mxu0 0
        %2578 = vmatpush1.bf16.msra.mxu0 0
        %2579 = vmatprep.subr.bf16.mxu0 0
        %2580 = vmatpush1.bf16.msra.mxu0 0
        %2581 = vmatprep.subr.bf16.mxu0 0
        %2582 = vmatpush1.bf16.msra.mxu0 0
        %2583 = vmatprep.subr.bf16.mxu0 0
        %2584 = vmatpush1.bf16.msra.mxu0 0
        %2585 = vmatprep.subr.bf16.mxu0 0
        %2586 = vmatpush1.bf16.msra.mxu0 0
        %2587 = vmatprep.mubr.bf16.mxu0 0
        %2588 = vmatmul.mubr.bf16.gmra.mrb[0].mxu0 %v2515
        %v2589 = vpop.f32.mrb[0].mxu0
        %v2590 = vadd.f32 0.0, %v2589
        %v2591 = vpop.f32.mrb[0].mxu0
        %v2592 = vpop.f32.mrb[0].mxu0
        %v2593 = vadd.f32 0.0, %v2592
        %v2594 = vpop.f32.mrb[0].mxu0
        %2595 = vmatprep.mubr.bf16.mxu0 0
        %2596 = vmatmul.mubr.bf16.gmra.mrb[0].mxu0 %v2516
        %v2597 = vpop.f32.mrb[0].mxu0
        %v2598 = vadd.f32 0.0, %v2597
        %v2599 = vpop.f32.mrb[0].mxu0
        %v2600 = vpop.f32.mrb[0].mxu0
        %v2601 = vadd.f32 0.0, %v2600
        %v2602 = vpop.f32.mrb[0].mxu0
        %2603 = vmatprep.mubr.bf16.mxu0 0
        %2604 = vmatmul.mubr.bf16.gmra.mrb[0].mxu0 %v2517
        %v2605 = vpop.f32.mrb[0].mxu0
        %v2606 = vadd.f32 0.0, %v2605
        %v2607 = vpop.f32.mrb[0].mxu0
        %v2608 = vpop.f32.mrb[0].mxu0
        %v2609 = vadd.f32 0.0, %v2608
        %v2610 = vpop.f32.mrb[0].mxu0
        %2611 = vmatprep.mubr.bf16.mxu0 0
        %2612 = vmatmul.mubr.bf16.gmra.mrb[0].mxu0 %v2518
        %v2613 = vpop.f32.mrb[0].mxu0
        %v2614 = vadd.f32 0.0, %v2613
        %v2615 = vpop.f32.mrb[0].mxu0
        %v2616 = vpop.f32.mrb[0].mxu0
        %v2617 = vadd.f32 0.0, %v2616
        %v2618 = vpop.f32.mrb[0].mxu0
        %2619 = vmatprep.mubr.bf16.mxu0 0
        %2620 = vmatmul.mubr.bf16.gmra.mrb[0].mxu0 %v2519
        %v2621 = vpop.f32.mrb[0].mxu0
        %v2622 = vadd.f32 0.0, %v2621
        %v2623 = vpop.f32.mrb[0].mxu0
        %v2624 = vpop.f32.mrb[0].mxu0
        %v2625 = vadd.f32 0.0, %v2624
        %v2626 = vpop.f32.mrb[0].mxu0
        %2627 = vmatprep.mubr.bf16.mxu0 0
        %2628 = vmatmul.mubr.bf16.gmra.mrb[0].mxu0 %v2520
        %v2629 = vpop.f32.mrb[0].mxu0
        %v2630 = vadd.f32 0.0, %v2629
        %v2631 = vpop.f32.mrb[0].mxu0
        %v2632 = vpop.f32.mrb[0].mxu0
        %v2633 = vadd.f32 0.0, %v2632
        %v2634 = vpop.f32.mrb[0].mxu0
        %2635 = vmatprep.mubr.bf16.mxu0 0
        %2636 = vmatmul.mubr.bf16.gmra.mrb[0].mxu0 %v2521
        %v2637 = vpop.f32.mrb[0].mxu0
        %v2638 = vadd.f32 0.0, %v2637
        %v2639 = vpop.f32.mrb[0].mxu0
        %v2640 = vpop.f32.mrb[0].mxu0
        %v2641 = vadd.f32 0.0, %v2640
        %v2642 = vpop.f32.mrb[0].mxu0
        %2643 = vmatprep.mubr.bf16.mxu0 0
        %2644 = vmatmul.mubr.bf16.gmra.mrb[0].mxu0 %v2522
        %v2645 = vpop.f32.mrb[0].mxu0
        %v2646 = vadd.f32 0.0, %v2645
        %v2647 = vpop.f32.mrb[0].mxu0
        %v2648 = vpop.f32.mrb[0].mxu0
        %v2649 = vadd.f32 0.0, %v2648
        %v2650 = vpop.f32.mrb[0].mxu0
        %2651 = vdwg.mxu0
        %v2652 = vrcp.pop %v2484
        %v2653 = vrcp.pop %v2486
        %v2654 = vrcp.pop %v2488
        %v2655 = vrcp.pop %v2490
        %v2656 = vrcp.pop %v2492
        %v2657 = vrcp.pop %v2494
        %v2658 = vrcp.pop %v2496
        %v2659 = vrcp.pop %v2498
        %v2660 = vrcp.pop %v2500
        %v2661 = vrcp.pop %v2502
        %v2662 = vrcp.pop %v2504
        %v2663 = vrcp.pop %v2506
        %v2664 = vrcp.pop %v2508
        %v2665 = vrcp.pop %v2510
        %v2666 = vrcp.pop %v2512
        %v2667 = vrcp.pop %v2514
        %v2668 = vmul.f32 %v2590, %v2652
        %v2669 = vmul.f32 %v2593, %v2653
        %v2670 = vmul.f32 %v2598, %v2654
        %v2671 = vmul.f32 %v2601, %v2655
        %v2672 = vmul.f32 %v2606, %v2656
        %v2673 = vmul.f32 %v2609, %v2657
        %v2674 = vmul.f32 %v2614, %v2658
        %v2675 = vmul.f32 %v2617, %v2659
        %v2676 = vmul.f32 %v2622, %v2660
        %v2677 = vmul.f32 %v2625, %v2661
        %v2678 = vmul.f32 %v2630, %v2662
        %v2679 = vmul.f32 %v2633, %v2663
        %v2680 = vmul.f32 %v2638, %v2664
        %v2681 = vmul.f32 %v2641, %v2665
        %v2682 = vmul.f32 %v2646, %v2666
        %v2683 = vmul.f32 %v2649, %v2667
        %v2684 = vpack.c.bf16 %v2669, %v2668
        %v2685 = vpack.c.bf16 %v2671, %v2670
        %v2686 = vpack.c.bf16 %v2673, %v2672
        %v2687 = vpack.c.bf16 %v2675, %v2674
        %v2688 = vpack.c.bf16 %v2677, %v2676
        %v2689 = vpack.c.bf16 %v2679, %v2678
        %v2690 = vpack.c.bf16 %v2681, %v2680
        %v2691 = vpack.c.bf16 %v2683, %v2682
        %2700 = vrot.lane.b32.xlu0 %v2684, 64
        %v2701 = vpop.permute.xlu0 %2700
        %2702 = vrot.lane.b32.xlu0 %v2685, 64
        %v2703 = vpop.permute.xlu0 %2702
        %2704 = vrot.lane.b32.xlu0 %v2686, 64
        %v2705 = vpop.permute.xlu0 %2704
        %2706 = vrot.lane.b32.xlu0 %v2687, 64
        %v2707 = vpop.permute.xlu0 %2706
        %2708 = vrot.lane.b32.xlu0 %v2688, 64
        %v2709 = vpop.permute.xlu0 %2708
        %2710 = vrot.lane.b32.xlu0 %v2689, 64
        %v2711 = vpop.permute.xlu0 %2710
        %2712 = vrot.lane.b32.xlu0 %v2690, 64
        %v2713 = vpop.permute.xlu0 %2712
        %2714 = vrot.lane.b32.xlu0 %v2691, 64
        %v2715 = vpop.permute.xlu0 %2714
        %vm2724 = vcmask 1048064
        %2725 = vst.msk [vmem:[#allocation3] sm:$0xff] %vm2724, %v2701
        %2726 = vst.msk [vmem:[#allocation3 + $0x10] sm:$0xff] %vm2724, %v2703
        %2727 = vst.msk [vmem:[#allocation3 + $0x20] sm:$0xff] %vm2724, %v2705
        %2728 = vst.msk [vmem:[#allocation3 + $0x30] sm:$0xff] %vm2724, %v2707
        %2729 = vst.msk [vmem:[#allocation3 + $0x40] sm:$0xff] %vm2724, %v2709
        %2730 = vst.msk [vmem:[#allocation3 + $0x50] sm:$0xff] %vm2724, %v2711
        %2731 = vst.msk [vmem:[#allocation3 + $0x60] sm:$0xff] %vm2724, %v2713
        %2732 = vst.msk [vmem:[#allocation3 + $0x70] sm:$0xff] %vm2724, %v2715
        %v2733 = vld [vmem:[#allocation2 + $0x8] sm:$0xff]
        %v2734 = vld [vmem:[#allocation2 + $0x38] sm:$0xff]
        %v2735 = vld [vmem:[#allocation2 + $0x68] sm:$0xff]
        %v2736 = vld [vmem:[#allocation2 + $0x98] sm:$0xff]
        %v2737 = vld [vmem:[#allocation2 + $0xc8] sm:$0xff]
        %v2738 = vld [vmem:[#allocation2 + $0xf8] sm:$0xff]
        %v2739 = vld [vmem:[#allocation2 + $0x128] sm:$0xff]
        %v2740 = vld [vmem:[#allocation2 + $0x158] sm:$0xff]
        %v2741 = vld [vmem:[#allocation2 + $0x18] sm:$0xff]
        %v2742 = vld [vmem:[#allocation2 + $0x48] sm:$0xff]
        %v2743 = vld [vmem:[#allocation2 + $0x78] sm:$0xff]
        %v2744 = vld [vmem:[#allocation2 + $0xa8] sm:$0xff]
        %v2745 = vld [vmem:[#allocation2 + $0xd8] sm:$0xff]
        %v2746 = vld [vmem:[#allocation2 + $0x108] sm:$0xff]
        %v2747 = vld [vmem:[#allocation2 + $0x138] sm:$0xff]
        %v2748 = vld [vmem:[#allocation2 + $0x168] sm:$0xff]
        %v2749 = vld [vmem:[#allocation2 + $0x28] sm:$0xff]
        %v2750 = vld [vmem:[#allocation2 + $0x58] sm:$0xff]
        %v2751 = vld [vmem:[#allocation2 + $0x88] sm:$0xff]
        %v2752 = vld [vmem:[#allocation2 + $0xb8] sm:$0xff]
        %v2753 = vld [vmem:[#allocation2 + $0xe8] sm:$0xff]
        %v2754 = vld [vmem:[#allocation2 + $0x118] sm:$0xff]
        %v2755 = vld [vmem:[#allocation2 + $0x148] sm:$0xff]
        %v2756 = vld [vmem:[#allocation2 + $0x178] sm:$0xff]
        %v2758 = vsel %vm1775, %v2733, 0
        %v2761 = vsel %vm1775, %v2734, 0
        %v2764 = vsel %vm1775, %v2735, 0
        %v2767 = vsel %vm1775, %v2736, 0
        %v2770 = vsel %vm1775, %v2737, 0
        %v2773 = vsel %vm1775, %v2738, 0
        %v2776 = vsel %vm1775, %v2739, 0
        %v2779 = vsel %vm1775, %v2740, 0
        %v2782 = vsel %vm1775, %v2741, 0
        %v2785 = vsel %vm1775, %v2742, 0
        %v2788 = vsel %vm1775, %v2743, 0
        %v2791 = vsel %vm1775, %v2744, 0
        %v2794 = vsel %vm1775, %v2745, 0
        %v2797 = vsel %vm1775, %v2746, 0
        %v2800 = vsel %vm1775, %v2747, 0
        %v2803 = vsel %vm1775, %v2748, 0
        %2805 = vmatprep.subr.bf16.mxu0 0
        %2806 = vmatpush1.bf16.xpose.msra.mxu0 %v2782
        %2807 = vmatprep.subr.bf16.mxu0 0
        %2808 = vmatpush1.bf16.xpose.msra.mxu0 %v2785
        %2809 = vmatprep.subr.bf16.mxu0 0
        %2810 = vmatpush1.bf16.xpose.msra.mxu0 %v2788
        %2811 = vmatprep.subr.bf16.mxu0 0
        %2812 = vmatpush1.bf16.xpose.msra.mxu0 %v2791
        %2813 = vmatprep.subr.bf16.mxu0 0
        %2814 = vmatpush1.bf16.xpose.msra.mxu0 %v2794
        %2815 = vmatprep.subr.bf16.mxu0 0
        %2816 = vmatpush1.bf16.xpose.msra.mxu0 %v2797
        %2817 = vmatprep.subr.bf16.mxu0 0
        %2818 = vmatpush1.bf16.xpose.msra.mxu0 %v2800
        %2819 = vmatprep.subr.bf16.mxu0 0
        %2820 = vmatpush1.bf16.xpose.msra.mxu0 %v2803
        %2821 = vmatprep.subr.bf16.mxu0 0
        %2822 = vmatpush1.bf16.xpose.msra.mxu0 0
        %2823 = vmatprep.subr.bf16.mxu0 0
        %2824 = vmatpush1.bf16.xpose.msra.mxu0 0
        %2825 = vmatprep.subr.bf16.mxu0 0
        %2826 = vmatpush1.bf16.xpose.msra.mxu0 0
        %2827 = vmatprep.subr.bf16.mxu0 0
        %2828 = vmatpush1.bf16.xpose.msra.mxu0 0
        %2829 = vmatprep.subr.bf16.mxu0 0
        %2830 = vmatpush1.bf16.xpose.msra.mxu0 0
        %2831 = vmatprep.subr.bf16.mxu0 0
        %2832 = vmatpush1.bf16.xpose.msra.mxu0 0
        %2833 = vmatprep.subr.bf16.mxu0 0
        %2834 = vmatpush1.bf16.xpose.msra.mxu0 0
        %2835 = vmatprep.subr.bf16.mxu0 0
        %2836 = vmatpush1.bf16.xpose.msra.mxu0 0
        %2837 = vmatprep.mubr.bf16.mxu0 0
        %2838 = vmatmul.mubr.bf16.gmra.mrb[0].mxu0 %v2758
        %v2839 = vpop.f32.mrb[0].mxu0
        %v2840 = vadd.f32 0.0, %v2839
        %v2841 = vpop.f32.mrb[0].mxu0
        %v2842 = vpop.f32.mrb[0].mxu0
        %v2843 = vadd.f32 0.0, %v2842
        %v2844 = vpop.f32.mrb[0].mxu0
        %2845 = vmatprep.mubr.bf16.mxu0 0
        %2846 = vmatmul.mubr.bf16.gmra.mrb[0].mxu0 %v2761
        %v2847 = vpop.f32.mrb[0].mxu0
        %v2848 = vadd.f32 0.0, %v2847
        %v2849 = vpop.f32.mrb[0].mxu0
        %v2850 = vpop.f32.mrb[0].mxu0
        %v2851 = vadd.f32 0.0, %v2850
        %v2852 = vpop.f32.mrb[0].mxu0
        %2853 = vmatprep.mubr.bf16.mxu0 0
        %2854 = vmatmul.mubr.bf16.gmra.mrb[0].mxu0 %v2764
        %v2855 = vpop.f32.mrb[0].mxu0
        %v2856 = vadd.f32 0.0, %v2855
        %v2857 = vpop.f32.mrb[0].mxu0
        %v2858 = vpop.f32.mrb[0].mxu0
        %v2859 = vadd.f32 0.0, %v2858
        %v2860 = vpop.f32.mrb[0].mxu0
        %2861 = vmatprep.mubr.bf16.mxu0 0
        %2862 = vmatmul.mubr.bf16.gmra.mrb[0].mxu0 %v2767
        %v2863 = vpop.f32.mrb[0].mxu0
        %v2864 = vadd.f32 0.0, %v2863
        %v2865 = vpop.f32.mrb[0].mxu0
        %v2866 = vpop.f32.mrb[0].mxu0
        %v2867 = vadd.f32 0.0, %v2866
        %v2868 = vpop.f32.mrb[0].mxu0
        %2869 = vmatprep.mubr.bf16.mxu0 0
        %2870 = vmatmul.mubr.bf16.gmra.mrb[0].mxu0 %v2770
        %v2871 = vpop.f32.mrb[0].mxu0
        %v2872 = vadd.f32 0.0, %v2871
        %v2873 = vpop.f32.mrb[0].mxu0
        %v2874 = vpop.f32.mrb[0].mxu0
        %v2875 = vadd.f32 0.0, %v2874
        %v2876 = vpop.f32.mrb[0].mxu0
        %2877 = vmatprep.mubr.bf16.mxu0 0
        %2878 = vmatmul.mubr.bf16.gmra.mrb[0].mxu0 %v2773
        %v2879 = vpop.f32.mrb[0].mxu0
        %v2880 = vadd.f32 0.0, %v2879
        %v2881 = vpop.f32.mrb[0].mxu0
        %v2882 = vpop.f32.mrb[0].mxu0
        %v2883 = vadd.f32 0.0, %v2882
        %v2884 = vpop.f32.mrb[0].mxu0
        %2885 = vmatprep.mubr.bf16.mxu0 0
        %2886 = vmatmul.mubr.bf16.gmra.mrb[0].mxu0 %v2776
        %v2887 = vpop.f32.mrb[0].mxu0
        %v2888 = vadd.f32 0.0, %v2887
        %v2889 = vpop.f32.mrb[0].mxu0
        %v2890 = vpop.f32.mrb[0].mxu0
        %v2891 = vadd.f32 0.0, %v2890
        %v2892 = vpop.f32.mrb[0].mxu0
        %2893 = vmatprep.mubr.bf16.mxu0 0
        %2894 = vmatmul.mubr.bf16.gmra.mrb[0].mxu0 %v2779
        %v2895 = vpop.f32.mrb[0].mxu0
        %v2896 = vadd.f32 0.0, %v2895
        %v2897 = vpop.f32.mrb[0].mxu0
        %v2898 = vpop.f32.mrb[0].mxu0
        %v2899 = vadd.f32 0.0, %v2898
        %v2900 = vpop.f32.mrb[0].mxu0
        %2901 = vdwg.mxu0
        %2902 = vmax.xlane.f32.xlu0 %v2840
        %v2903 = vpop.xlane.xlu0 %2902
        %2904 = vmax.xlane.f32.xlu0 %v2843
        %v2905 = vpop.xlane.xlu0 %2904
        %2906 = vmax.xlane.f32.xlu0 %v2848
        %v2907 = vpop.xlane.xlu0 %2906
        %2908 = vmax.xlane.f32.xlu0 %v2851
        %v2909 = vpop.xlane.xlu0 %2908
        %2910 = vmax.xlane.f32.xlu0 %v2856
        %v2911 = vpop.xlane.xlu0 %2910
        %2912 = vmax.xlane.f32.xlu0 %v2859
        %v2913 = vpop.xlane.xlu0 %2912
        %2914 = vmax.xlane.f32.xlu0 %v2864
        %v2915 = vpop.xlane.xlu0 %2914
        %2916 = vmax.xlane.f32.xlu0 %v2867
        %v2917 = vpop.xlane.xlu0 %2916
        %2918 = vmax.xlane.f32.xlu0 %v2872
        %v2919 = vpop.xlane.xlu0 %2918
        %2920 = vmax.xlane.f32.xlu0 %v2875
        %v2921 = vpop.xlane.xlu0 %2920
        %2922 = vmax.xlane.f32.xlu0 %v2880
        %v2923 = vpop.xlane.xlu0 %2922
        %2924 = vmax.xlane.f32.xlu0 %v2883
        %v2925 = vpop.xlane.xlu0 %2924
        %2926 = vmax.xlane.f32.xlu0 %v2888
        %v2927 = vpop.xlane.xlu0 %2926
        %2928 = vmax.xlane.f32.xlu0 %v2891
        %v2929 = vpop.xlane.xlu0 %2928
        %2930 = vmax.xlane.f32.xlu0 %v2896
        %v2931 = vpop.xlane.xlu0 %2930
        %2932 = vmax.xlane.f32.xlu0 %v2899
        %v2933 = vpop.xlane.xlu0 %2932
        %v2934 = vsub.f32 %v2840, %v2903
        %v2935 = vsub.f32 %v2843, %v2905
        %v2936 = vsub.f32 %v2848, %v2907
        %v2937 = vsub.f32 %v2851, %v2909
        %v2938 = vsub.f32 %v2856, %v2911
        %v2939 = vsub.f32 %v2859, %v2913
        %v2940 = vsub.f32 %v2864, %v2915
        %v2941 = vsub.f32 %v2867, %v2917
        %v2942 = vsub.f32 %v2872, %v2919
        %v2943 = vsub.f32 %v2875, %v2921
        %v2944 = vsub.f32 %v2880, %v2923
        %v2945 = vsub.f32 %v2883, %v2925
        %v2946 = vsub.f32 %v2888, %v2927
        %v2947 = vsub.f32 %v2891, %v2929
        %v2948 = vsub.f32 %v2896, %v2931
        %v2949 = vsub.f32 %v2899, %v2933
        %v2950 = vmul.f32 %v2934, 1.442695
        %v2951 = vpow.pop %v2950
        %v2952 = vmul.f32 %v2935, 1.442695
        %v2953 = vpow.pop %v2952
        %v2954 = vmul.f32 %v2936, 1.442695
        %v2955 = vpow.pop %v2954
        %v2956 = vmul.f32 %v2937, 1.442695
        %v2957 = vpow.pop %v2956
        %v2958 = vmul.f32 %v2938, 1.442695
        %v2959 = vpow.pop %v2958
        %v2960 = vmul.f32 %v2939, 1.442695
        %v2961 = vpow.pop %v2960
        %v2962 = vmul.f32 %v2940, 1.442695
        %v2963 = vpow.pop %v2962
        %v2964 = vmul.f32 %v2941, 1.442695
        %v2965 = vpow.pop %v2964
        %v2966 = vmul.f32 %v2942, 1.442695
        %v2967 = vpow.pop %v2966
        %v2968 = vmul.f32 %v2943, 1.442695
        %v2969 = vpow.pop %v2968
        %v2970 = vmul.f32 %v2944, 1.442695
        %v2971 = vpow.pop %v2970
        %v2972 = vmul.f32 %v2945, 1.442695
        %v2973 = vpow.pop %v2972
        %v2974 = vmul.f32 %v2946, 1.442695
        %v2975 = vpow.pop %v2974
        %v2976 = vmul.f32 %v2947, 1.442695
        %v2977 = vpow.pop %v2976
        %v2978 = vmul.f32 %v2948, 1.442695
        %v2979 = vpow.pop %v2978
        %v2980 = vmul.f32 %v2949, 1.442695
        %v2981 = vpow.pop %v2980
        %2982 = vadd.xlane.f32.xlu0 %v2951
        %v2983 = vpop.xlane.xlu0 %2982
        %2984 = vadd.xlane.f32.xlu0 %v2953
        %v2985 = vpop.xlane.xlu0 %2984
        %2986 = vadd.xlane.f32.xlu0 %v2955
        %v2987 = vpop.xlane.xlu0 %2986
        %2988 = vadd.xlane.f32.xlu0 %v2957
        %v2989 = vpop.xlane.xlu0 %2988
        %2990 = vadd.xlane.f32.xlu0 %v2959
        %v2991 = vpop.xlane.xlu0 %2990
        %2992 = vadd.xlane.f32.xlu0 %v2961
        %v2993 = vpop.xlane.xlu0 %2992
        %2994 = vadd.xlane.f32.xlu0 %v2963
        %v2995 = vpop.xlane.xlu0 %2994
        %2996 = vadd.xlane.f32.xlu0 %v2965
        %v2997 = vpop.xlane.xlu0 %2996
        %2998 = vadd.xlane.f32.xlu0 %v2967
        %v2999 = vpop.xlane.xlu0 %2998
        %3000 = vadd.xlane.f32.xlu0 %v2969
        %v3001 = vpop.xlane.xlu0 %3000
        %3002 = vadd.xlane.f32.xlu0 %v2971
        %v3003 = vpop.xlane.xlu0 %3002
        %3004 = vadd.xlane.f32.xlu0 %v2973
        %v3005 = vpop.xlane.xlu0 %3004
        %3006 = vadd.xlane.f32.xlu0 %v2975
        %v3007 = vpop.xlane.xlu0 %3006
        %3008 = vadd.xlane.f32.xlu0 %v2977
        %v3009 = vpop.xlane.xlu0 %3008
        %3010 = vadd.xlane.f32.xlu0 %v2979
        %v3011 = vpop.xlane.xlu0 %3010
        %3012 = vadd.xlane.f32.xlu0 %v2981
        %v3013 = vpop.xlane.xlu0 %3012
        %v3014 = vpack.c.bf16 %v2953, %v2951
        %v3015 = vpack.c.bf16 %v2957, %v2955
        %v3016 = vpack.c.bf16 %v2961, %v2959
        %v3017 = vpack.c.bf16 %v2965, %v2963
        %v3018 = vpack.c.bf16 %v2969, %v2967
        %v3019 = vpack.c.bf16 %v2973, %v2971
        %v3020 = vpack.c.bf16 %v2977, %v2975
        %v3021 = vpack.c.bf16 %v2981, %v2979
        %3022 = vmatprep.subr.bf16.mxu0 0
        %3023 = vmatpush1.bf16.msra.mxu0 %v2749
        %3024 = vmatprep.subr.bf16.mxu0 0
        %3025 = vmatpush1.bf16.msra.mxu0 %v2750
        %3026 = vmatprep.subr.bf16.mxu0 0
        %3027 = vmatpush1.bf16.msra.mxu0 %v2751
        %3028 = vmatprep.subr.bf16.mxu0 0
        %3029 = vmatpush1.bf16.msra.mxu0 %v2752
        %3030 = vmatprep.subr.bf16.mxu0 0
        %3031 = vmatpush1.bf16.msra.mxu0 %v2753
        %3032 = vmatprep.subr.bf16.mxu0 0
        %3033 = vmatpush1.bf16.msra.mxu0 %v2754
        %3034 = vmatprep.subr.bf16.mxu0 0
        %3035 = vmatpush1.bf16.msra.mxu0 %v2755
        %3036 = vmatprep.subr.bf16.mxu0 0
        %3037 = vmatpush1.bf16.msra.mxu0 %v2756
        %3038 = vmatprep.subr.bf16.mxu0 0
        %3039 = vmatpush1.bf16.msra.mxu0 0
        %3040 = vmatprep.subr.bf16.mxu0 0
        %3041 = vmatpush1.bf16.msra.mxu0 0
        %3042 = vmatprep.subr.bf16.mxu0 0
        %3043 = vmatpush1.bf16.msra.mxu0 0
        %3044 = vmatprep.subr.bf16.mxu0 0
        %3045 = vmatpush1.bf16.msra.mxu0 0
        %3046 = vmatprep.subr.bf16.mxu0 0
        %3047 = vmatpush1.bf16.msra.mxu0 0
        %3048 = vmatprep.subr.bf16.mxu0 0
        %3049 = vmatpush1.bf16.msra.mxu0 0
        %3050 = vmatprep.subr.bf16.mxu0 0
        %3051 = vmatpush1.bf16.msra.mxu0 0
        %3052 = vmatprep.subr.bf16.mxu0 0
        %3053 = vmatpush1.bf16.msra.mxu0 0
        %3054 = vmatprep.mubr.bf16.mxu0 0
        %3055 = vmatmul.mubr.bf16.gmra.mrb[0].mxu0 %v3014
        %v3056 = vpop.f32.mrb[0].mxu0
        %v3057 = vadd.f32 0.0, %v3056
        %v3058 = vpop.f32.mrb[0].mxu0
        %v3059 = vpop.f32.mrb[0].mxu0
        %v3060 = vadd.f32 0.0, %v3059
        %v3061 = vpop.f32.mrb[0].mxu0
        %3062 = vmatprep.mubr.bf16.mxu0 0
        %3063 = vmatmul.mubr.bf16.gmra.mrb[0].mxu0 %v3015
        %v3064 = vpop.f32.mrb[0].mxu0
        %v3065 = vadd.f32 0.0, %v3064
        %v3066 = vpop.f32.mrb[0].mxu0
        %v3067 = vpop.f32.mrb[0].mxu0
        %v3068 = vadd.f32 0.0, %v3067
        %v3069 = vpop.f32.mrb[0].mxu0
        %3070 = vmatprep.mubr.bf16.mxu0 0
        %3071 = vmatmul.mubr.bf16.gmra.mrb[0].mxu0 %v3016
        %v3072 = vpop.f32.mrb[0].mxu0
        %v3073 = vadd.f32 0.0, %v3072
        %v3074 = vpop.f32.mrb[0].mxu0
        %v3075 = vpop.f32.mrb[0].mxu0
        %v3076 = vadd.f32 0.0, %v3075
        %v3077 = vpop.f32.mrb[0].mxu0
        %3078 = vmatprep.mubr.bf16.mxu0 0
        %3079 = vmatmul.mubr.bf16.gmra.mrb[0].mxu0 %v3017
        %v3080 = vpop.f32.mrb[0].mxu0
        %v3081 = vadd.f32 0.0, %v3080
        %v3082 = vpop.f32.mrb[0].mxu0
        %v3083 = vpop.f32.mrb[0].mxu0
        %v3084 = vadd.f32 0.0, %v3083
        %v3085 = vpop.f32.mrb[0].mxu0
        %3086 = vmatprep.mubr.bf16.mxu0 0
        %3087 = vmatmul.mubr.bf16.gmra.mrb[0].mxu0 %v3018
        %v3088 = vpop.f32.mrb[0].mxu0
        %v3089 = vadd.f32 0.0, %v3088
        %v3090 = vpop.f32.mrb[0].mxu0
        %v3091 = vpop.f32.mrb[0].mxu0
        %v3092 = vadd.f32 0.0, %v3091
        %v3093 = vpop.f32.mrb[0].mxu0
        %3094 = vmatprep.mubr.bf16.mxu0 0
        %3095 = vmatmul.mubr.bf16.gmra.mrb[0].mxu0 %v3019
        %v3096 = vpop.f32.mrb[0].mxu0
        %v3097 = vadd.f32 0.0, %v3096
        %v3098 = vpop.f32.mrb[0].mxu0
        %v3099 = vpop.f32.mrb[0].mxu0
        %v3100 = vadd.f32 0.0, %v3099
        %v3101 = vpop.f32.mrb[0].mxu0
        %3102 = vmatprep.mubr.bf16.mxu0 0
        %3103 = vmatmul.mubr.bf16.gmra.mrb[0].mxu0 %v3020
        %v3104 = vpop.f32.mrb[0].mxu0
        %v3105 = vadd.f32 0.0, %v3104
        %v3106 = vpop.f32.mrb[0].mxu0
        %v3107 = vpop.f32.mrb[0].mxu0
        %v3108 = vadd.f32 0.0, %v3107
        %v3109 = vpop.f32.mrb[0].mxu0
        %3110 = vmatprep.mubr.bf16.mxu0 0
        %3111 = vmatmul.mubr.bf16.gmra.mrb[0].mxu0 %v3021
        %v3112 = vpop.f32.mrb[0].mxu0
        %v3113 = vadd.f32 0.0, %v3112
        %v3114 = vpop.f32.mrb[0].mxu0
        %v3115 = vpop.f32.mrb[0].mxu0
        %v3116 = vadd.f32 0.0, %v3115
        %v3117 = vpop.f32.mrb[0].mxu0
        %3118 = vdwg.mxu0
        %v3119 = vrcp.pop %v2983
        %v3120 = vrcp.pop %v2985
        %v3121 = vrcp.pop %v2987
        %v3122 = vrcp.pop %v2989
        %v3123 = vrcp.pop %v2991
        %v3124 = vrcp.pop %v2993
        %v3125 = vrcp.pop %v2995
        %v3126 = vrcp.pop %v2997
        %v3127 = vrcp.pop %v2999
        %v3128 = vrcp.pop %v3001
        %v3129 = vrcp.pop %v3003
        %v3130 = vrcp.pop %v3005
        %v3131 = vrcp.pop %v3007
        %v3132 = vrcp.pop %v3009
        %v3133 = vrcp.pop %v3011
        %v3134 = vrcp.pop %v3013
        %v3135 = vmul.f32 %v3057, %v3119
        %v3136 = vmul.f32 %v3060, %v3120
        %v3137 = vmul.f32 %v3065, %v3121
        %v3138 = vmul.f32 %v3068, %v3122
        %v3139 = vmul.f32 %v3073, %v3123
        %v3140 = vmul.f32 %v3076, %v3124
        %v3141 = vmul.f32 %v3081, %v3125
        %v3142 = vmul.f32 %v3084, %v3126
        %v3143 = vmul.f32 %v3089, %v3127
        %v3144 = vmul.f32 %v3092, %v3128
        %v3145 = vmul.f32 %v3097, %v3129
        %v3146 = vmul.f32 %v3100, %v3130
        %v3147 = vmul.f32 %v3105, %v3131
        %v3148 = vmul.f32 %v3108, %v3132
        %v3149 = vmul.f32 %v3113, %v3133
        %v3150 = vmul.f32 %v3116, %v3134
        %v3151 = vpack.c.bf16 %v3136, %v3135
        %v3152 = vpack.c.bf16 %v3138, %v3137
        %v3153 = vpack.c.bf16 %v3140, %v3139
        %v3154 = vpack.c.bf16 %v3142, %v3141
        %v3155 = vpack.c.bf16 %v3144, %v3143
        %v3156 = vpack.c.bf16 %v3146, %v3145
        %v3157 = vpack.c.bf16 %v3148, %v3147
        %v3158 = vpack.c.bf16 %v3150, %v3149
        %3159 = vst.msk [vmem:[#allocation3 + $0x8] sm:$0xff] %vm1775, %v3151
        %3160 = vst.msk [vmem:[#allocation3 + $0x18] sm:$0xff] %vm1775, %v3152
        %3161 = vst.msk [vmem:[#allocation3 + $0x28] sm:$0xff] %vm1775, %v3153
        %3162 = vst.msk [vmem:[#allocation3 + $0x38] sm:$0xff] %vm1775, %v3154
        %3163 = vst.msk [vmem:[#allocation3 + $0x48] sm:$0xff] %vm1775, %v3155
        %3164 = vst.msk [vmem:[#allocation3 + $0x58] sm:$0xff] %vm1775, %v3156
        %3165 = vst.msk [vmem:[#allocation3 + $0x68] sm:$0xff] %vm1775, %v3157
        %3166 = vst.msk [vmem:[#allocation3 + $0x78] sm:$0xff] %vm1775, %v3158
        %v3167 = vld [vmem:[#allocation2 + $0x8] sm:$0xff]
        %v3168 = vld [vmem:[#allocation2 + $0x38] sm:$0xff]
        %v3169 = vld [vmem:[#allocation2 + $0x68] sm:$0xff]
        %v3170 = vld [vmem:[#allocation2 + $0x98] sm:$0xff]
        %v3171 = vld [vmem:[#allocation2 + $0xc8] sm:$0xff]
        %v3172 = vld [vmem:[#allocation2 + $0xf8] sm:$0xff]
        %v3173 = vld [vmem:[#allocation2 + $0x128] sm:$0xff]
        %v3174 = vld [vmem:[#allocation2 + $0x158] sm:$0xff]
        %v3175 = vld [vmem:[#allocation2 + $0x18] sm:$0xff]
        %v3176 = vld [vmem:[#allocation2 + $0x48] sm:$0xff]
        %v3177 = vld [vmem:[#allocation2 + $0x78] sm:$0xff]
        %v3178 = vld [vmem:[#allocation2 + $0xa8] sm:$0xff]
        %v3179 = vld [vmem:[#allocation2 + $0xd8] sm:$0xff]
        %v3180 = vld [vmem:[#allocation2 + $0x108] sm:$0xff]
        %v3181 = vld [vmem:[#allocation2 + $0x138] sm:$0xff]
        %v3182 = vld [vmem:[#allocation2 + $0x168] sm:$0xff]
        %v3183 = vld [vmem:[#allocation2 + $0x28] sm:$0xff]
        %v3184 = vld [vmem:[#allocation2 + $0x58] sm:$0xff]
        %v3185 = vld [vmem:[#allocation2 + $0x88] sm:$0xff]
        %v3186 = vld [vmem:[#allocation2 + $0xb8] sm:$0xff]
        %v3187 = vld [vmem:[#allocation2 + $0xe8] sm:$0xff]
        %v3188 = vld [vmem:[#allocation2 + $0x118] sm:$0xff]
        %v3189 = vld [vmem:[#allocation2 + $0x148] sm:$0xff]
        %v3190 = vld [vmem:[#allocation2 + $0x178] sm:$0xff]
        %3199 = vrot.lane.b32.xlu0 %v3167, 64
        %v3200 = vpop.permute.xlu0 %3199
        %3201 = vrot.lane.b32.xlu0 %v3168, 64
        %v3202 = vpop.permute.xlu0 %3201
        %3203 = vrot.lane.b32.xlu0 %v3169, 64
        %v3204 = vpop.permute.xlu0 %3203
        %3205 = vrot.lane.b32.xlu0 %v3170, 64
        %v3206 = vpop.permute.xlu0 %3205
        %3207 = vrot.lane.b32.xlu0 %v3171, 64
        %v3208 = vpop.permute.xlu0 %3207
        %3209 = vrot.lane.b32.xlu0 %v3172, 64
        %v3210 = vpop.permute.xlu0 %3209
        %3211 = vrot.lane.b32.xlu0 %v3173, 64
        %v3212 = vpop.permute.xlu0 %3211
        %3213 = vrot.lane.b32.xlu0 %v3174, 64
        %v3214 = vpop.permute.xlu0 %3213
        %3223 = vrot.lane.b32.xlu0 %v3175, 64
        %v3224 = vpop.permute.xlu0 %3223
        %3225 = vrot.lane.b32.xlu0 %v3176, 64
        %v3226 = vpop.permute.xlu0 %3225
        %3227 = vrot.lane.b32.xlu0 %v3177, 64
        %v3228 = vpop.permute.xlu0 %3227
        %3229 = vrot.lane.b32.xlu0 %v3178, 64
        %v3230 = vpop.permute.xlu0 %3229
        %3231 = vrot.lane.b32.xlu0 %v3179, 64
        %v3232 = vpop.permute.xlu0 %3231
        %3233 = vrot.lane.b32.xlu0 %v3180, 64
        %v3234 = vpop.permute.xlu0 %3233
        %3235 = vrot.lane.b32.xlu0 %v3181, 64
        %v3236 = vpop.permute.xlu0 %3235
        %3237 = vrot.lane.b32.xlu0 %v3182, 64
        %v3238 = vpop.permute.xlu0 %3237
        %v3240 = vsel %vm1775, %v3200, 0
        %v3243 = vsel %vm1775, %v3202, 0
        %v3246 = vsel %vm1775, %v3204, 0
        %v3249 = vsel %vm1775, %v3206, 0
        %v3252 = vsel %vm1775, %v3208, 0
        %v3255 = vsel %vm1775, %v3210, 0
        %v3258 = vsel %vm1775, %v3212, 0
        %v3261 = vsel %vm1775, %v3214, 0
        %v3264 = vsel %vm1775, %v3224, 0
        %v3267 = vsel %vm1775, %v3226, 0
        %v3270 = vsel %vm1775, %v3228, 0
        %v3273 = vsel %vm1775, %v3230, 0
        %v3276 = vsel %vm1775, %v3232, 0
        %v3279 = vsel %vm1775, %v3234, 0
        %v3282 = vsel %vm1775, %v3236, 0
        %v3285 = vsel %vm1775, %v3238, 0
        %3287 = vmatprep.subr.bf16.mxu0 0
        %3288 = vmatpush1.bf16.xpose.msra.mxu0 %v3264
        %3289 = vmatprep.subr.bf16.mxu0 0
        %3290 = vmatpush1.bf16.xpose.msra.mxu0 %v3267
        %3291 = vmatprep.subr.bf16.mxu0 0
        %3292 = vmatpush1.bf16.xpose.msra.mxu0 %v3270
        %3293 = vmatprep.subr.bf16.mxu0 0
        %3294 = vmatpush1.bf16.xpose.msra.mxu0 %v3273
        %3295 = vmatprep.subr.bf16.mxu0 0
        %3296 = vmatpush1.bf16.xpose.msra.mxu0 %v3276
        %3297 = vmatprep.subr.bf16.mxu0 0
        %3298 = vmatpush1.bf16.xpose.msra.mxu0 %v3279
        %3299 = vmatprep.subr.bf16.mxu0 0
        %3300 = vmatpush1.bf16.xpose.msra.mxu0 %v3282
        %3301 = vmatprep.subr.bf16.mxu0 0
        %3302 = vmatpush1.bf16.xpose.msra.mxu0 %v3285
        %3303 = vmatprep.subr.bf16.mxu0 0
        %3304 = vmatpush1.bf16.xpose.msra.mxu0 0
        %3305 = vmatprep.subr.bf16.mxu0 0
        %3306 = vmatpush1.bf16.xpose.msra.mxu0 0
        %3307 = vmatprep.subr.bf16.mxu0 0
        %3308 = vmatpush1.bf16.xpose.msra.mxu0 0
        %3309 = vmatprep.subr.bf16.mxu0 0
        %3310 = vmatpush1.bf16.xpose.msra.mxu0 0
        %3311 = vmatprep.subr.bf16.mxu0 0
        %3312 = vmatpush1.bf16.xpose.msra.mxu0 0
        %3313 = vmatprep.subr.bf16.mxu0 0
        %3314 = vmatpush1.bf16.xpose.msra.mxu0 0
        %3315 = vmatprep.subr.bf16.mxu0 0
        %3316 = vmatpush1.bf16.xpose.msra.mxu0 0
        %3317 = vmatprep.subr.bf16.mxu0 0
        %3318 = vmatpush1.bf16.xpose.msra.mxu0 0
        %3319 = vmatprep.mubr.bf16.mxu0 0
        %3320 = vmatmul.mubr.bf16.gmra.mrb[0].mxu0 %v3240
        %v3321 = vpop.f32.mrb[0].mxu0
        %v3322 = vadd.f32 0.0, %v3321
        %v3323 = vpop.f32.mrb[0].mxu0
        %v3324 = vpop.f32.mrb[0].mxu0
        %v3325 = vadd.f32 0.0, %v3324
        %v3326 = vpop.f32.mrb[0].mxu0
        %3327 = vmatprep.mubr.bf16.mxu0 0
        %3328 = vmatmul.mubr.bf16.gmra.mrb[0].mxu0 %v3243
        %v3329 = vpop.f32.mrb[0].mxu0
        %v3330 = vadd.f32 0.0, %v3329
        %v3331 = vpop.f32.mrb[0].mxu0
        %v3332 = vpop.f32.mrb[0].mxu0
        %v3333 = vadd.f32 0.0, %v3332
        %v3334 = vpop.f32.mrb[0].mxu0
        %3335 = vmatprep.mubr.bf16.mxu0 0
        %3336 = vmatmul.mubr.bf16.gmra.mrb[0].mxu0 %v3246
        %v3337 = vpop.f32.mrb[0].mxu0
        %v3338 = vadd.f32 0.0, %v3337
        %v3339 = vpop.f32.mrb[0].mxu0
        %v3340 = vpop.f32.mrb[0].mxu0
        %v3341 = vadd.f32 0.0, %v3340
        %v3342 = vpop.f32.mrb[0].mxu0
        %3343 = vmatprep.mubr.bf16.mxu0 0
        %3344 = vmatmul.mubr.bf16.gmra.mrb[0].mxu0 %v3249
        %v3345 = vpop.f32.mrb[0].mxu0
        %v3346 = vadd.f32 0.0, %v3345
        %v3347 = vpop.f32.mrb[0].mxu0
        %v3348 = vpop.f32.mrb[0].mxu0
        %v3349 = vadd.f32 0.0, %v3348
        %v3350 = vpop.f32.mrb[0].mxu0
        %3351 = vmatprep.mubr.bf16.mxu0 0
        %3352 = vmatmul.mubr.bf16.gmra.mrb[0].mxu0 %v3252
        %v3353 = vpop.f32.mrb[0].mxu0
        %v3354 = vadd.f32 0.0, %v3353
        %v3355 = vpop.f32.mrb[0].mxu0
        %v3356 = vpop.f32.mrb[0].mxu0
        %v3357 = vadd.f32 0.0, %v3356
        %v3358 = vpop.f32.mrb[0].mxu0
        %3359 = vmatprep.mubr.bf16.mxu0 0
        %3360 = vmatmul.mubr.bf16.gmra.mrb[0].mxu0 %v3255
        %v3361 = vpop.f32.mrb[0].mxu0
        %v3362 = vadd.f32 0.0, %v3361
        %v3363 = vpop.f32.mrb[0].mxu0
        %v3364 = vpop.f32.mrb[0].mxu0
        %v3365 = vadd.f32 0.0, %v3364
        %v3366 = vpop.f32.mrb[0].mxu0
        %3367 = vmatprep.mubr.bf16.mxu0 0
        %3368 = vmatmul.mubr.bf16.gmra.mrb[0].mxu0 %v3258
        %v3369 = vpop.f32.mrb[0].mxu0
        %v3370 = vadd.f32 0.0, %v3369
        %v3371 = vpop.f32.mrb[0].mxu0
        %v3372 = vpop.f32.mrb[0].mxu0
        %v3373 = vadd.f32 0.0, %v3372
        %v3374 = vpop.f32.mrb[0].mxu0
        %3375 = vmatprep.mubr.bf16.mxu0 0
        %3376 = vmatmul.mubr.bf16.gmra.mrb[0].mxu0 %v3261
        %v3377 = vpop.f32.mrb[0].mxu0
        %v3378 = vadd.f32 0.0, %v3377
        %v3379 = vpop.f32.mrb[0].mxu0
        %v3380 = vpop.f32.mrb[0].mxu0
        %v3381 = vadd.f32 0.0, %v3380
        %v3382 = vpop.f32.mrb[0].mxu0
        %3383 = vdwg.mxu0
        %3384 = vmax.xlane.f32.xlu0 %v3322
        %v3385 = vpop.xlane.xlu0 %3384
        %3386 = vmax.xlane.f32.xlu0 %v3325
        %v3387 = vpop.xlane.xlu0 %3386
        %3388 = vmax.xlane.f32.xlu0 %v3330
        %v3389 = vpop.xlane.xlu0 %3388
        %3390 = vmax.xlane.f32.xlu0 %v3333
        %v3391 = vpop.xlane.xlu0 %3390
        %3392 = vmax.xlane.f32.xlu0 %v3338
        %v3393 = vpop.xlane.xlu0 %3392
        %3394 = vmax.xlane.f32.xlu0 %v3341
        %v3395 = vpop.xlane.xlu0 %3394
        %3396 = vmax.xlane.f32.xlu0 %v3346
        %v3397 = vpop.xlane.xlu0 %3396
        %3398 = vmax.xlane.f32.xlu0 %v3349
        %v3399 = vpop.xlane.xlu0 %3398
        %3400 = vmax.xlane.f32.xlu0 %v3354
        %v3401 = vpop.xlane.xlu0 %3400
        %3402 = vmax.xlane.f32.xlu0 %v3357
        %v3403 = vpop.xlane.xlu0 %3402
        %3404 = vmax.xlane.f32.xlu0 %v3362
        %v3405 = vpop.xlane.xlu0 %3404
        %3406 = vmax.xlane.f32.xlu0 %v3365
        %v3407 = vpop.xlane.xlu0 %3406
        %3408 = vmax.xlane.f32.xlu0 %v3370
        %v3409 = vpop.xlane.xlu0 %3408
        %3410 = vmax.xlane.f32.xlu0 %v3373
        %v3411 = vpop.xlane.xlu0 %3410
        %3412 = vmax.xlane.f32.xlu0 %v3378
        %v3413 = vpop.xlane.xlu0 %3412
        %3414 = vmax.xlane.f32.xlu0 %v3381
        %v3415 = vpop.xlane.xlu0 %3414
        %v3416 = vsub.f32 %v3322, %v3385
        %v3417 = vsub.f32 %v3325, %v3387
        %v3418 = vsub.f32 %v3330, %v3389
        %v3419 = vsub.f32 %v3333, %v3391
        %v3420 = vsub.f32 %v3338, %v3393
        %v3421 = vsub.f32 %v3341, %v3395
        %v3422 = vsub.f32 %v3346, %v3397
        %v3423 = vsub.f32 %v3349, %v3399
        %v3424 = vsub.f32 %v3354, %v3401
        %v3425 = vsub.f32 %v3357, %v3403
        %v3426 = vsub.f32 %v3362, %v3405
        %v3427 = vsub.f32 %v3365, %v3407
        %v3428 = vsub.f32 %v3370, %v3409
        %v3429 = vsub.f32 %v3373, %v3411
        %v3430 = vsub.f32 %v3378, %v3413
        %v3431 = vsub.f32 %v3381, %v3415
        %v3432 = vmul.f32 %v3416, 1.442695
        %v3433 = vpow.pop %v3432
        %v3434 = vmul.f32 %v3417, 1.442695
        %v3435 = vpow.pop %v3434
        %v3436 = vmul.f32 %v3418, 1.442695
        %v3437 = vpow.pop %v3436
        %v3438 = vmul.f32 %v3419, 1.442695
        %v3439 = vpow.pop %v3438
        %v3440 = vmul.f32 %v3420, 1.442695
        %v3441 = vpow.pop %v3440
        %v3442 = vmul.f32 %v3421, 1.442695
        %v3443 = vpow.pop %v3442
        %v3444 = vmul.f32 %v3422, 1.442695
        %v3445 = vpow.pop %v3444
        %v3446 = vmul.f32 %v3423, 1.442695
        %v3447 = vpow.pop %v3446
        %v3448 = vmul.f32 %v3424, 1.442695
        %v3449 = vpow.pop %v3448
        %v3450 = vmul.f32 %v3425, 1.442695
        %v3451 = vpow.pop %v3450
        %v3452 = vmul.f32 %v3426, 1.442695
        %v3453 = vpow.pop %v3452
        %v3454 = vmul.f32 %v3427, 1.442695
        %v3455 = vpow.pop %v3454
        %v3456 = vmul.f32 %v3428, 1.442695
        %v3457 = vpow.pop %v3456
        %v3458 = vmul.f32 %v3429, 1.442695
        %v3459 = vpow.pop %v3458
        %v3460 = vmul.f32 %v3430, 1.442695
        %v3461 = vpow.pop %v3460
        %v3462 = vmul.f32 %v3431, 1.442695
        %v3463 = vpow.pop %v3462
        %3464 = vadd.xlane.f32.xlu0 %v3433
        %v3465 = vpop.xlane.xlu0 %3464
        %3466 = vadd.xlane.f32.xlu0 %v3435
        %v3467 = vpop.xlane.xlu0 %3466
        %3468 = vadd.xlane.f32.xlu0 %v3437
        %v3469 = vpop.xlane.xlu0 %3468
        %3470 = vadd.xlane.f32.xlu0 %v3439
        %v3471 = vpop.xlane.xlu0 %3470
        %3472 = vadd.xlane.f32.xlu0 %v3441
        %v3473 = vpop.xlane.xlu0 %3472
        %3474 = vadd.xlane.f32.xlu0 %v3443
        %v3475 = vpop.xlane.xlu0 %3474
        %3476 = vadd.xlane.f32.xlu0 %v3445
        %v3477 = vpop.xlane.xlu0 %3476
        %3478 = vadd.xlane.f32.xlu0 %v3447
        %v3479 = vpop.xlane.xlu0 %3478
        %3480 = vadd.xlane.f32.xlu0 %v3449
        %v3481 = vpop.xlane.xlu0 %3480
        %3482 = vadd.xlane.f32.xlu0 %v3451
        %v3483 = vpop.xlane.xlu0 %3482
        %3484 = vadd.xlane.f32.xlu0 %v3453
        %v3485 = vpop.xlane.xlu0 %3484
        %3486 = vadd.xlane.f32.xlu0 %v3455
        %v3487 = vpop.xlane.xlu0 %3486
        %3488 = vadd.xlane.f32.xlu0 %v3457
        %v3489 = vpop.xlane.xlu0 %3488
        %3490 = vadd.xlane.f32.xlu0 %v3459
        %v3491 = vpop.xlane.xlu0 %3490
        %3492 = vadd.xlane.f32.xlu0 %v3461
        %v3493 = vpop.xlane.xlu0 %3492
        %3494 = vadd.xlane.f32.xlu0 %v3463
        %v3495 = vpop.xlane.xlu0 %3494
        %v3496 = vpack.c.bf16 %v3435, %v3433
        %v3497 = vpack.c.bf16 %v3439, %v3437
        %v3498 = vpack.c.bf16 %v3443, %v3441
        %v3499 = vpack.c.bf16 %v3447, %v3445
        %v3500 = vpack.c.bf16 %v3451, %v3449
        %v3501 = vpack.c.bf16 %v3455, %v3453
        %v3502 = vpack.c.bf16 %v3459, %v3457
        %v3503 = vpack.c.bf16 %v3463, %v3461
        %3512 = vrot.lane.b32.xlu0 %v3183, 64
        %v3513 = vpop.permute.xlu0 %3512
        %3514 = vrot.lane.b32.xlu0 %v3184, 64
        %v3515 = vpop.permute.xlu0 %3514
        %3516 = vrot.lane.b32.xlu0 %v3185, 64
        %v3517 = vpop.permute.xlu0 %3516
        %3518 = vrot.lane.b32.xlu0 %v3186, 64
        %v3519 = vpop.permute.xlu0 %3518
        %3520 = vrot.lane.b32.xlu0 %v3187, 64
        %v3521 = vpop.permute.xlu0 %3520
        %3522 = vrot.lane.b32.xlu0 %v3188, 64
        %v3523 = vpop.permute.xlu0 %3522
        %3524 = vrot.lane.b32.xlu0 %v3189, 64
        %v3525 = vpop.permute.xlu0 %3524
        %3526 = vrot.lane.b32.xlu0 %v3190, 64
        %v3527 = vpop.permute.xlu0 %3526
        %3536 = vmatprep.subr.bf16.mxu0 0
        %3537 = vmatpush1.bf16.msra.mxu0 %v3513
        %3538 = vmatprep.subr.bf16.mxu0 0
        %3539 = vmatpush1.bf16.msra.mxu0 %v3515
        %3540 = vmatprep.subr.bf16.mxu0 0
        %3541 = vmatpush1.bf16.msra.mxu0 %v3517
        %3542 = vmatprep.subr.bf16.mxu0 0
        %3543 = vmatpush1.bf16.msra.mxu0 %v3519
        %3544 = vmatprep.subr.bf16.mxu0 0
        %3545 = vmatpush1.bf16.msra.mxu0 %v3521
        %3546 = vmatprep.subr.bf16.mxu0 0
        %3547 = vmatpush1.bf16.msra.mxu0 %v3523
        %3548 = vmatprep.subr.bf16.mxu0 0
        %3549 = vmatpush1.bf16.msra.mxu0 %v3525
        %3550 = vmatprep.subr.bf16.mxu0 0
        %3551 = vmatpush1.bf16.msra.mxu0 %v3527
        %3552 = vmatprep.subr.bf16.mxu0 0
        %3553 = vmatpush1.bf16.msra.mxu0 0
        %3554 = vmatprep.subr.bf16.mxu0 0
        %3555 = vmatpush1.bf16.msra.mxu0 0
        %3556 = vmatprep.subr.bf16.mxu0 0
        %3557 = vmatpush1.bf16.msra.mxu0 0
        %3558 = vmatprep.subr.bf16.mxu0 0
        %3559 = vmatpush1.bf16.msra.mxu0 0
        %3560 = vmatprep.subr.bf16.mxu0 0
        %3561 = vmatpush1.bf16.msra.mxu0 0
        %3562 = vmatprep.subr.bf16.mxu0 0
        %3563 = vmatpush1.bf16.msra.mxu0 0
        %3564 = vmatprep.subr.bf16.mxu0 0
        %3565 = vmatpush1.bf16.msra.mxu0 0
        %3566 = vmatprep.subr.bf16.mxu0 0
        %3567 = vmatpush1.bf16.msra.mxu0 0
        %3568 = vmatprep.mubr.bf16.mxu0 0
        %3569 = vmatmul.mubr.bf16.gmra.mrb[0].mxu0 %v3496
        %v3570 = vpop.f32.mrb[0].mxu0
        %v3571 = vadd.f32 0.0, %v3570
        %v3572 = vpop.f32.mrb[0].mxu0
        %v3573 = vpop.f32.mrb[0].mxu0
        %v3574 = vadd.f32 0.0, %v3573
        %v3575 = vpop.f32.mrb[0].mxu0
        %3576 = vmatprep.mubr.bf16.mxu0 0
        %3577 = vmatmul.mubr.bf16.gmra.mrb[0].mxu0 %v3497
        %v3578 = vpop.f32.mrb[0].mxu0
        %v3579 = vadd.f32 0.0, %v3578
        %v3580 = vpop.f32.mrb[0].mxu0
        %v3581 = vpop.f32.mrb[0].mxu0
        %v3582 = vadd.f32 0.0, %v3581
        %v3583 = vpop.f32.mrb[0].mxu0
        %3584 = vmatprep.mubr.bf16.mxu0 0
        %3585 = vmatmul.mubr.bf16.gmra.mrb[0].mxu0 %v3498
        %v3586 = vpop.f32.mrb[0].mxu0
        %v3587 = vadd.f32 0.0, %v3586
        %v3588 = vpop.f32.mrb[0].mxu0
        %v3589 = vpop.f32.mrb[0].mxu0
        %v3590 = vadd.f32 0.0, %v3589
        %v3591 = vpop.f32.mrb[0].mxu0
        %3592 = vmatprep.mubr.bf16.mxu0 0
        %3593 = vmatmul.mubr.bf16.gmra.mrb[0].mxu0 %v3499
        %v3594 = vpop.f32.mrb[0].mxu0
        %v3595 = vadd.f32 0.0, %v3594
        %v3596 = vpop.f32.mrb[0].mxu0
        %v3597 = vpop.f32.mrb[0].mxu0
        %v3598 = vadd.f32 0.0, %v3597
        %v3599 = vpop.f32.mrb[0].mxu0
        %3600 = vmatprep.mubr.bf16.mxu0 0
        %3601 = vmatmul.mubr.bf16.gmra.mrb[0].mxu0 %v3500
        %v3602 = vpop.f32.mrb[0].mxu0
        %v3603 = vadd.f32 0.0, %v3602
        %v3604 = vpop.f32.mrb[0].mxu0
        %v3605 = vpop.f32.mrb[0].mxu0
        %v3606 = vadd.f32 0.0, %v3605
        %v3607 = vpop.f32.mrb[0].mxu0
        %3608 = vmatprep.mubr.bf16.mxu0 0
        %3609 = vmatmul.mubr.bf16.gmra.mrb[0].mxu0 %v3501
        %v3610 = vpop.f32.mrb[0].mxu0
        %v3611 = vadd.f32 0.0, %v3610
        %v3612 = vpop.f32.mrb[0].mxu0
        %v3613 = vpop.f32.mrb[0].mxu0
        %v3614 = vadd.f32 0.0, %v3613
        %v3615 = vpop.f32.mrb[0].mxu0
        %3616 = vmatprep.mubr.bf16.mxu0 0
        %3617 = vmatmul.mubr.bf16.gmra.mrb[0].mxu0 %v3502
        %v3618 = vpop.f32.mrb[0].mxu0
        %v3619 = vadd.f32 0.0, %v3618
        %v3620 = vpop.f32.mrb[0].mxu0
        %v3621 = vpop.f32.mrb[0].mxu0
        %v3622 = vadd.f32 0.0, %v3621
        %v3623 = vpop.f32.mrb[0].mxu0
        %3624 = vmatprep.mubr.bf16.mxu0 0
        %3625 = vmatmul.mubr.bf16.gmra.mrb[0].mxu0 %v3503
        %v3626 = vpop.f32.mrb[0].mxu0
        %v3627 = vadd.f32 0.0, %v3626
        %v3628 = vpop.f32.mrb[0].mxu0
        %v3629 = vpop.f32.mrb[0].mxu0
        %v3630 = vadd.f32 0.0, %v3629
        %v3631 = vpop.f32.mrb[0].mxu0
        %3632 = vdwg.mxu0
        %v3633 = vrcp.pop %v3465
        %v3634 = vrcp.pop %v3467
        %v3635 = vrcp.pop %v3469
        %v3636 = vrcp.pop %v3471
        %v3637 = vrcp.pop %v3473
        %v3638 = vrcp.pop %v3475
        %v3639 = vrcp.pop %v3477
        %v3640 = vrcp.pop %v3479
        %v3641 = vrcp.pop %v3481
        %v3642 = vrcp.pop %v3483
        %v3643 = vrcp.pop %v3485
        %v3644 = vrcp.pop %v3487
        %v3645 = vrcp.pop %v3489
        %v3646 = vrcp.pop %v3491
        %v3647 = vrcp.pop %v3493
        %v3648 = vrcp.pop %v3495
        %v3649 = vmul.f32 %v3571, %v3633
        %v3650 = vmul.f32 %v3574, %v3634
        %v3651 = vmul.f32 %v3579, %v3635
        %v3652 = vmul.f32 %v3582, %v3636
        %v3653 = vmul.f32 %v3587, %v3637
        %v3654 = vmul.f32 %v3590, %v3638
        %v3655 = vmul.f32 %v3595, %v3639
        %v3656 = vmul.f32 %v3598, %v3640
        %v3657 = vmul.f32 %v3603, %v3641
        %v3658 = vmul.f32 %v3606, %v3642
        %v3659 = vmul.f32 %v3611, %v3643
        %v3660 = vmul.f32 %v3614, %v3644
        %v3661 = vmul.f32 %v3619, %v3645
        %v3662 = vmul.f32 %v3622, %v3646
        %v3663 = vmul.f32 %v3627, %v3647
        %v3664 = vmul.f32 %v3630, %v3648
        %v3665 = vpack.c.bf16 %v3650, %v3649
        %v3666 = vpack.c.bf16 %v3652, %v3651
        %v3667 = vpack.c.bf16 %v3654, %v3653
        %v3668 = vpack.c.bf16 %v3656, %v3655
        %v3669 = vpack.c.bf16 %v3658, %v3657
        %v3670 = vpack.c.bf16 %v3660, %v3659
        %v3671 = vpack.c.bf16 %v3662, %v3661
        %v3672 = vpack.c.bf16 %v3664, %v3663
        %3681 = vrot.lane.b32.xlu0 %v3665, 64
        %v3682 = vpop.permute.xlu0 %3681
        %3683 = vrot.lane.b32.xlu0 %v3666, 64
        %v3684 = vpop.permute.xlu0 %3683
        %3685 = vrot.lane.b32.xlu0 %v3667, 64
        %v3686 = vpop.permute.xlu0 %3685
        %3687 = vrot.lane.b32.xlu0 %v3668, 64
        %v3688 = vpop.permute.xlu0 %3687
        %3689 = vrot.lane.b32.xlu0 %v3669, 64
        %v3690 = vpop.permute.xlu0 %3689
        %3691 = vrot.lane.b32.xlu0 %v3670, 64
        %v3692 = vpop.permute.xlu0 %3691
        %3693 = vrot.lane.b32.xlu0 %v3671, 64
        %v3694 = vpop.permute.xlu0 %3693
        %3695 = vrot.lane.b32.xlu0 %v3672, 64
        %v3696 = vpop.permute.xlu0 %3695
        %3705 = vst.msk [vmem:[#allocation3 + $0x8] sm:$0xff] %vm2724, %v3682
        %3706 = vst.msk [vmem:[#allocation3 + $0x18] sm:$0xff] %vm2724, %v3684
        %3707 = vst.msk [vmem:[#allocation3 + $0x28] sm:$0xff] %vm2724, %v3686
        %3708 = vst.msk [vmem:[#allocation3 + $0x38] sm:$0xff] %vm2724, %v3688
        %3709 = vst.msk [vmem:[#allocation3 + $0x48] sm:$0xff] %vm2724, %v3690
        %3710 = vst.msk [vmem:[#allocation3 + $0x58] sm:$0xff] %vm2724, %v3692
        %3711 = vst.msk [vmem:[#allocation3 + $0x68] sm:$0xff] %vm2724, %v3694
        %3712 = vst.msk [vmem:[#allocation3 + $0x78] sm:$0xff] %vm2724, %v3696
        %v3713 = vld [vmem:[#allocation2 + $0x180] sm:$0xff]
        %v3714 = vld [vmem:[#allocation2 + $0x1b0] sm:$0xff]
        %v3715 = vld [vmem:[#allocation2 + $0x1e0] sm:$0xff]
        %v3716 = vld [vmem:[#allocation2 + $0x210] sm:$0xff]
        %v3717 = vld [vmem:[#allocation2 + $0x240] sm:$0xff]
        %v3718 = vld [vmem:[#allocation2 + $0x270] sm:$0xff]
        %v3719 = vld [vmem:[#allocation2 + $0x2a0] sm:$0xff]
        %v3720 = vld [vmem:[#allocation2 + $0x2d0] sm:$0xff]
        %v3721 = vld [vmem:[#allocation2 + $0x190] sm:$0xff]
        %v3722 = vld [vmem:[#allocation2 + $0x1c0] sm:$0xff]
        %v3723 = vld [vmem:[#allocation2 + $0x1f0] sm:$0xff]
        %v3724 = vld [vmem:[#allocation2 + $0x220] sm:$0xff]
        %v3725 = vld [vmem:[#allocation2 + $0x250] sm:$0xff]
        %v3726 = vld [vmem:[#allocation2 + $0x280] sm:$0xff]
        %v3727 = vld [vmem:[#allocation2 + $0x2b0] sm:$0xff]
        %v3728 = vld [vmem:[#allocation2 + $0x2e0] sm:$0xff]
        %v3729 = vld [vmem:[#allocation2 + $0x1a0] sm:$0xff]
        %v3730 = vld [vmem:[#allocation2 + $0x1d0] sm:$0xff]
        %v3731 = vld [vmem:[#allocation2 + $0x200] sm:$0xff]
        %v3732 = vld [vmem:[#allocation2 + $0x230] sm:$0xff]
        %v3733 = vld [vmem:[#allocation2 + $0x260] sm:$0xff]
        %v3734 = vld [vmem:[#allocation2 + $0x290] sm:$0xff]
        %v3735 = vld [vmem:[#allocation2 + $0x2c0] sm:$0xff]
        %v3736 = vld [vmem:[#allocation2 + $0x2f0] sm:$0xff]
        %v3738 = vsel %vm1775, %v3713, 0
        %v3741 = vsel %vm1775, %v3714, 0
        %v3744 = vsel %vm1775, %v3715, 0
        %v3747 = vsel %vm1775, %v3716, 0
        %v3750 = vsel %vm1775, %v3717, 0
        %v3753 = vsel %vm1775, %v3718, 0
        %v3756 = vsel %vm1775, %v3719, 0
        %v3759 = vsel %vm1775, %v3720, 0
        %v3762 = vsel %vm1775, %v3721, 0
        %v3765 = vsel %vm1775, %v3722, 0
        %v3768 = vsel %vm1775, %v3723, 0
        %v3771 = vsel %vm1775, %v3724, 0
        %v3774 = vsel %vm1775, %v3725, 0
        %v3777 = vsel %vm1775, %v3726, 0
        %v3780 = vsel %vm1775, %v3727, 0
        %v3783 = vsel %vm1775, %v3728, 0
        %3785 = vmatprep.subr.bf16.mxu0 0
        %3786 = vmatpush1.bf16.xpose.msra.mxu0 %v3762
        %3787 = vmatprep.subr.bf16.mxu0 0
        %3788 = vmatpush1.bf16.xpose.msra.mxu0 %v3765
        %3789 = vmatprep.subr.bf16.mxu0 0
        %3790 = vmatpush1.bf16.xpose.msra.mxu0 %v3768
        %3791 = vmatprep.subr.bf16.mxu0 0
        %3792 = vmatpush1.bf16.xpose.msra.mxu0 %v3771
        %3793 = vmatprep.subr.bf16.mxu0 0
        %3794 = vmatpush1.bf16.xpose.msra.mxu0 %v3774
        %3795 = vmatprep.subr.bf16.mxu0 0
        %3796 = vmatpush1.bf16.xpose.msra.mxu0 %v3777
        %3797 = vmatprep.subr.bf16.mxu0 0
        %3798 = vmatpush1.bf16.xpose.msra.mxu0 %v3780
        %3799 = vmatprep.subr.bf16.mxu0 0
        %3800 = vmatpush1.bf16.xpose.msra.mxu0 %v3783
        %3801 = vmatprep.subr.bf16.mxu0 0
        %3802 = vmatpush1.bf16.xpose.msra.mxu0 0
        %3803 = vmatprep.subr.bf16.mxu0 0
        %3804 = vmatpush1.bf16.xpose.msra.mxu0 0
        %3805 = vmatprep.subr.bf16.mxu0 0
        %3806 = vmatpush1.bf16.xpose.msra.mxu0 0
        %3807 = vmatprep.subr.bf16.mxu0 0
        %3808 = vmatpush1.bf16.xpose.msra.mxu0 0
        %3809 = vmatprep.subr.bf16.mxu0 0
        %3810 = vmatpush1.bf16.xpose.msra.mxu0 0
        %3811 = vmatprep.subr.bf16.mxu0 0
        %3812 = vmatpush1.bf16.xpose.msra.mxu0 0
        %3813 = vmatprep.subr.bf16.mxu0 0
        %3814 = vmatpush1.bf16.xpose.msra.mxu0 0
        %3815 = vmatprep.subr.bf16.mxu0 0
        %3816 = vmatpush1.bf16.xpose.msra.mxu0 0
        %3817 = vmatprep.mubr.bf16.mxu0 0
        %3818 = vmatmul.mubr.bf16.gmra.mrb[0].mxu0 %v3738
        %v3819 = vpop.f32.mrb[0].mxu0
        %v3820 = vadd.f32 0.0, %v3819
        %v3821 = vpop.f32.mrb[0].mxu0
        %v3822 = vpop.f32.mrb[0].mxu0
        %v3823 = vadd.f32 0.0, %v3822
        %v3824 = vpop.f32.mrb[0].mxu0
        %3825 = vmatprep.mubr.bf16.mxu0 0
        %3826 = vmatmul.mubr.bf16.gmra.mrb[0].mxu0 %v3741
        %v3827 = vpop.f32.mrb[0].mxu0
        %v3828 = vadd.f32 0.0, %v3827
        %v3829 = vpop.f32.mrb[0].mxu0
        %v3830 = vpop.f32.mrb[0].mxu0
        %v3831 = vadd.f32 0.0, %v3830
        %v3832 = vpop.f32.mrb[0].mxu0
        %3833 = vmatprep.mubr.bf16.mxu0 0
        %3834 = vmatmul.mubr.bf16.gmra.mrb[0].mxu0 %v3744
        %v3835 = vpop.f32.mrb[0].mxu0
        %v3836 = vadd.f32 0.0, %v3835
        %v3837 = vpop.f32.mrb[0].mxu0
        %v3838 = vpop.f32.mrb[0].mxu0
        %v3839 = vadd.f32 0.0, %v3838
        %v3840 = vpop.f32.mrb[0].mxu0
        %3841 = vmatprep.mubr.bf16.mxu0 0
        %3842 = vmatmul.mubr.bf16.gmra.mrb[0].mxu0 %v3747
        %v3843 = vpop.f32.mrb[0].mxu0
        %v3844 = vadd.f32 0.0, %v3843
        %v3845 = vpop.f32.mrb[0].mxu0
        %v3846 = vpop.f32.mrb[0].mxu0
        %v3847 = vadd.f32 0.0, %v3846
        %v3848 = vpop.f32.mrb[0].mxu0
        %3849 = vmatprep.mubr.bf16.mxu0 0
        %3850 = vmatmul.mubr.bf16.gmra.mrb[0].mxu0 %v3750
        %v3851 = vpop.f32.mrb[0].mxu0
        %v3852 = vadd.f32 0.0, %v3851
        %v3853 = vpop.f32.mrb[0].mxu0
        %v3854 = vpop.f32.mrb[0].mxu0
        %v3855 = vadd.f32 0.0, %v3854
        %v3856 = vpop.f32.mrb[0].mxu0
        %3857 = vmatprep.mubr.bf16.mxu0 0
        %3858 = vmatmul.mubr.bf16.gmra.mrb[0].mxu0 %v3753
        %v3859 = vpop.f32.mrb[0].mxu0
        %v3860 = vadd.f32 0.0, %v3859
        %v3861 = vpop.f32.mrb[0].mxu0
        %v3862 = vpop.f32.mrb[0].mxu0
        %v3863 = vadd.f32 0.0, %v3862
        %v3864 = vpop.f32.mrb[0].mxu0
        %3865 = vmatprep.mubr.bf16.mxu0 0
        %3866 = vmatmul.mubr.bf16.gmra.mrb[0].mxu0 %v3756
        %v3867 = vpop.f32.mrb[0].mxu0
        %v3868 = vadd.f32 0.0, %v3867
        %v3869 = vpop.f32.mrb[0].mxu0
        %v3870 = vpop.f32.mrb[0].mxu0
        %v3871 = vadd.f32 0.0, %v3870
        %v3872 = vpop.f32.mrb[0].mxu0
        %3873 = vmatprep.mubr.bf16.mxu0 0
        %3874 = vmatmul.mubr.bf16.gmra.mrb[0].mxu0 %v3759
        %v3875 = vpop.f32.mrb[0].mxu0
        %v3876 = vadd.f32 0.0, %v3875
        %v3877 = vpop.f32.mrb[0].mxu0
        %v3878 = vpop.f32.mrb[0].mxu0
        %v3879 = vadd.f32 0.0, %v3878
        %v3880 = vpop.f32.mrb[0].mxu0
        %3881 = vdwg.mxu0
        %3882 = vmax.xlane.f32.xlu0 %v3820
        %v3883 = vpop.xlane.xlu0 %3882
        %3884 = vmax.xlane.f32.xlu0 %v3823
        %v3885 = vpop.xlane.xlu0 %3884
        %3886 = vmax.xlane.f32.xlu0 %v3828
        %v3887 = vpop.xlane.xlu0 %3886
        %3888 = vmax.xlane.f32.xlu0 %v3831
        %v3889 = vpop.xlane.xlu0 %3888
        %3890 = vmax.xlane.f32.xlu0 %v3836
        %v3891 = vpop.xlane.xlu0 %3890
        %3892 = vmax.xlane.f32.xlu0 %v3839
        %v3893 = vpop.xlane.xlu0 %3892
        %3894 = vmax.xlane.f32.xlu0 %v3844
        %v3895 = vpop.xlane.xlu0 %3894
        %3896 = vmax.xlane.f32.xlu0 %v3847
        %v3897 = vpop.xlane.xlu0 %3896
        %3898 = vmax.xlane.f32.xlu0 %v3852
        %v3899 = vpop.xlane.xlu0 %3898
        %3900 = vmax.xlane.f32.xlu0 %v3855
        %v3901 = vpop.xlane.xlu0 %3900
        %3902 = vmax.xlane.f32.xlu0 %v3860
        %v3903 = vpop.xlane.xlu0 %3902
        %3904 = vmax.xlane.f32.xlu0 %v3863
        %v3905 = vpop.xlane.xlu0 %3904
        %3906 = vmax.xlane.f32.xlu0 %v3868
        %v3907 = vpop.xlane.xlu0 %3906
        %3908 = vmax.xlane.f32.xlu0 %v3871
        %v3909 = vpop.xlane.xlu0 %3908
        %3910 = vmax.xlane.f32.xlu0 %v3876
        %v3911 = vpop.xlane.xlu0 %3910
        %3912 = vmax.xlane.f32.xlu0 %v3879
        %v3913 = vpop.xlane.xlu0 %3912
        %v3914 = vsub.f32 %v3820, %v3883
        %v3915 = vsub.f32 %v3823, %v3885
        %v3916 = vsub.f32 %v3828, %v3887
        %v3917 = vsub.f32 %v3831, %v3889
        %v3918 = vsub.f32 %v3836, %v3891
        %v3919 = vsub.f32 %v3839, %v3893
        %v3920 = vsub.f32 %v3844, %v3895
        %v3921 = vsub.f32 %v3847, %v3897
        %v3922 = vsub.f32 %v3852, %v3899
        %v3923 = vsub.f32 %v3855, %v3901
        %v3924 = vsub.f32 %v3860, %v3903
        %v3925 = vsub.f32 %v3863, %v3905
        %v3926 = vsub.f32 %v3868, %v3907
        %v3927 = vsub.f32 %v3871, %v3909
        %v3928 = vsub.f32 %v3876, %v3911
        %v3929 = vsub.f32 %v3879, %v3913
        %v3930 = vmul.f32 %v3914, 1.442695
        %v3931 = vpow.pop %v3930
        %v3932 = vmul.f32 %v3915, 1.442695
        %v3933 = vpow.pop %v3932
        %v3934 = vmul.f32 %v3916, 1.442695
        %v3935 = vpow.pop %v3934
        %v3936 = vmul.f32 %v3917, 1.442695
        %v3937 = vpow.pop %v3936
        %v3938 = vmul.f32 %v3918, 1.442695
        %v3939 = vpow.pop %v3938
        %v3940 = vmul.f32 %v3919, 1.442695
        %v3941 = vpow.pop %v3940
        %v3942 = vmul.f32 %v3920, 1.442695
        %v3943 = vpow.pop %v3942
        %v3944 = vmul.f32 %v3921, 1.442695
        %v3945 = vpow.pop %v3944
        %v3946 = vmul.f32 %v3922, 1.442695
        %v3947 = vpow.pop %v3946
        %v3948 = vmul.f32 %v3923, 1.442695
        %v3949 = vpow.pop %v3948
        %v3950 = vmul.f32 %v3924, 1.442695
        %v3951 = vpow.pop %v3950
        %v3952 = vmul.f32 %v3925, 1.442695
        %v3953 = vpow.pop %v3952
        %v3954 = vmul.f32 %v3926, 1.442695
        %v3955 = vpow.pop %v3954
        %v3956 = vmul.f32 %v3927, 1.442695
        %v3957 = vpow.pop %v3956
        %v3958 = vmul.f32 %v3928, 1.442695
        %v3959 = vpow.pop %v3958
        %v3960 = vmul.f32 %v3929, 1.442695
        %v3961 = vpow.pop %v3960
        %3962 = vadd.xlane.f32.xlu0 %v3931
        %v3963 = vpop.xlane.xlu0 %3962
        %3964 = vadd.xlane.f32.xlu0 %v3933
        %v3965 = vpop.xlane.xlu0 %3964
        %3966 = vadd.xlane.f32.xlu0 %v3935
        %v3967 = vpop.xlane.xlu0 %3966
        %3968 = vadd.xlane.f32.xlu0 %v3937
        %v3969 = vpop.xlane.xlu0 %3968
        %3970 = vadd.xlane.f32.xlu0 %v3939
        %v3971 = vpop.xlane.xlu0 %3970
        %3972 = vadd.xlane.f32.xlu0 %v3941
        %v3973 = vpop.xlane.xlu0 %3972
        %3974 = vadd.xlane.f32.xlu0 %v3943
        %v3975 = vpop.xlane.xlu0 %3974
        %3976 = vadd.xlane.f32.xlu0 %v3945
        %v3977 = vpop.xlane.xlu0 %3976
        %3978 = vadd.xlane.f32.xlu0 %v3947
        %v3979 = vpop.xlane.xlu0 %3978
        %3980 = vadd.xlane.f32.xlu0 %v3949
        %v3981 = vpop.xlane.xlu0 %3980
        %3982 = vadd.xlane.f32.xlu0 %v3951
        %v3983 = vpop.xlane.xlu0 %3982
        %3984 = vadd.xlane.f32.xlu0 %v3953
        %v3985 = vpop.xlane.xlu0 %3984
        %3986 = vadd.xlane.f32.xlu0 %v3955
        %v3987 = vpop.xlane.xlu0 %3986
        %3988 = vadd.xlane.f32.xlu0 %v3957
        %v3989 = vpop.xlane.xlu0 %3988
        %3990 = vadd.xlane.f32.xlu0 %v3959
        %v3991 = vpop.xlane.xlu0 %3990
        %3992 = vadd.xlane.f32.xlu0 %v3961
        %v3993 = vpop.xlane.xlu0 %3992
        %v3994 = vpack.c.bf16 %v3933, %v3931
        %v3995 = vpack.c.bf16 %v3937, %v3935
        %v3996 = vpack.c.bf16 %v3941, %v3939
        %v3997 = vpack.c.bf16 %v3945, %v3943
        %v3998 = vpack.c.bf16 %v3949, %v3947
        %v3999 = vpack.c.bf16 %v3953, %v3951
        %v4000 = vpack.c.bf16 %v3957, %v3955
        %v4001 = vpack.c.bf16 %v3961, %v3959
        %4002 = vmatprep.subr.bf16.mxu0 0
        %4003 = vmatpush1.bf16.msra.mxu0 %v3729
        %4004 = vmatprep.subr.bf16.mxu0 0
        %4005 = vmatpush1.bf16.msra.mxu0 %v3730
        %4006 = vmatprep.subr.bf16.mxu0 0
        %4007 = vmatpush1.bf16.msra.mxu0 %v3731
        %4008 = vmatprep.subr.bf16.mxu0 0
        %4009 = vmatpush1.bf16.msra.mxu0 %v3732
        %4010 = vmatprep.subr.bf16.mxu0 0
        %4011 = vmatpush1.bf16.msra.mxu0 %v3733
        %4012 = vmatprep.subr.bf16.mxu0 0
        %4013 = vmatpush1.bf16.msra.mxu0 %v3734
        %4014 = vmatprep.subr.bf16.mxu0 0
        %4015 = vmatpush1.bf16.msra.mxu0 %v3735
        %4016 = vmatprep.subr.bf16.mxu0 0
        %4017 = vmatpush1.bf16.msra.mxu0 %v3736
        %4018 = vmatprep.subr.bf16.mxu0 0
        %4019 = vmatpush1.bf16.msra.mxu0 0
        %4020 = vmatprep.subr.bf16.mxu0 0
        %4021 = vmatpush1.bf16.msra.mxu0 0
        %4022 = vmatprep.subr.bf16.mxu0 0
        %4023 = vmatpush1.bf16.msra.mxu0 0
        %4024 = vmatprep.subr.bf16.mxu0 0
        %4025 = vmatpush1.bf16.msra.mxu0 0
        %4026 = vmatprep.subr.bf16.mxu0 0
        %4027 = vmatpush1.bf16.msra.mxu0 0
        %4028 = vmatprep.subr.bf16.mxu0 0
        %4029 = vmatpush1.bf16.msra.mxu0 0
        %4030 = vmatprep.subr.bf16.mxu0 0
        %4031 = vmatpush1.bf16.msra.mxu0 0
        %4032 = vmatprep.subr.bf16.mxu0 0
        %4033 = vmatpush1.bf16.msra.mxu0 0
        %4034 = vmatprep.mubr.bf16.mxu0 0
        %4035 = vmatmul.mubr.bf16.gmra.mrb[0].mxu0 %v3994
        %v4036 = vpop.f32.mrb[0].mxu0
        %v4037 = vadd.f32 0.0, %v4036
        %v4038 = vpop.f32.mrb[0].mxu0
        %v4039 = vpop.f32.mrb[0].mxu0
        %v4040 = vadd.f32 0.0, %v4039
        %v4041 = vpop.f32.mrb[0].mxu0
        %4042 = vmatprep.mubr.bf16.mxu0 0
        %4043 = vmatmul.mubr.bf16.gmra.mrb[0].mxu0 %v3995
        %v4044 = vpop.f32.mrb[0].mxu0
        %v4045 = vadd.f32 0.0, %v4044
        %v4046 = vpop.f32.mrb[0].mxu0
        %v4047 = vpop.f32.mrb[0].mxu0
        %v4048 = vadd.f32 0.0, %v4047
        %v4049 = vpop.f32.mrb[0].mxu0
        %4050 = vmatprep.mubr.bf16.mxu0 0
        %4051 = vmatmul.mubr.bf16.gmra.mrb[0].mxu0 %v3996
        %v4052 = vpop.f32.mrb[0].mxu0
        %v4053 = vadd.f32 0.0, %v4052
        %v4054 = vpop.f32.mrb[0].mxu0
        %v4055 = vpop.f32.mrb[0].mxu0
        %v4056 = vadd.f32 0.0, %v4055
        %v4057 = vpop.f32.mrb[0].mxu0
        %4058 = vmatprep.mubr.bf16.mxu0 0
        %4059 = vmatmul.mubr.bf16.gmra.mrb[0].mxu0 %v3997
        %v4060 = vpop.f32.mrb[0].mxu0
        %v4061 = vadd.f32 0.0, %v4060
        %v4062 = vpop.f32.mrb[0].mxu0
        %v4063 = vpop.f32.mrb[0].mxu0
        %v4064 = vadd.f32 0.0, %v4063
        %v4065 = vpop.f32.mrb[0].mxu0
        %4066 = vmatprep.mubr.bf16.mxu0 0
        %4067 = vmatmul.mubr.bf16.gmra.mrb[0].mxu0 %v3998
        %v4068 = vpop.f32.mrb[0].mxu0
        %v4069 = vadd.f32 0.0, %v4068
        %v4070 = vpop.f32.mrb[0].mxu0
        %v4071 = vpop.f32.mrb[0].mxu0
        %v4072 = vadd.f32 0.0, %v4071
        %v4073 = vpop.f32.mrb[0].mxu0
        %4074 = vmatprep.mubr.bf16.mxu0 0
        %4075 = vmatmul.mubr.bf16.gmra.mrb[0].mxu0 %v3999
        %v4076 = vpop.f32.mrb[0].mxu0
        %v4077 = vadd.f32 0.0, %v4076
        %v4078 = vpop.f32.mrb[0].mxu0
        %v4079 = vpop.f32.mrb[0].mxu0
        %v4080 = vadd.f32 0.0, %v4079
        %v4081 = vpop.f32.mrb[0].mxu0
        %4082 = vmatprep.mubr.bf16.mxu0 0
        %4083 = vmatmul.mubr.bf16.gmra.mrb[0].mxu0 %v4000
        %v4084 = vpop.f32.mrb[0].mxu0
        %v4085 = vadd.f32 0.0, %v4084
        %v4086 = vpop.f32.mrb[0].mxu0
        %v4087 = vpop.f32.mrb[0].mxu0
        %v4088 = vadd.f32 0.0, %v4087
        %v4089 = vpop.f32.mrb[0].mxu0
        %4090 = vmatprep.mubr.bf16.mxu0 0
        %4091 = vmatmul.mubr.bf16.gmra.mrb[0].mxu0 %v4001
        %v4092 = vpop.f32.mrb[0].mxu0
        %v4093 = vadd.f32 0.0, %v4092
        %v4094 = vpop.f32.mrb[0].mxu0
        %v4095 = vpop.f32.mrb[0].mxu0
        %v4096 = vadd.f32 0.0, %v4095
        %v4097 = vpop.f32.mrb[0].mxu0
        %4098 = vdwg.mxu0
        %v4099 = vrcp.pop %v3963
        %v4100 = vrcp.pop %v3965
        %v4101 = vrcp.pop %v3967
        %v4102 = vrcp.pop %v3969
        %v4103 = vrcp.pop %v3971
        %v4104 = vrcp.pop %v3973
        %v4105 = vrcp.pop %v3975
        %v4106 = vrcp.pop %v3977
        %v4107 = vrcp.pop %v3979
        %v4108 = vrcp.pop %v3981
        %v4109 = vrcp.pop %v3983
        %v4110 = vrcp.pop %v3985
        %v4111 = vrcp.pop %v3987
        %v4112 = vrcp.pop %v3989
        %v4113 = vrcp.pop %v3991
        %v4114 = vrcp.pop %v3993
        %v4115 = vmul.f32 %v4037, %v4099
        %v4116 = vmul.f32 %v4040, %v4100
        %v4117 = vmul.f32 %v4045, %v4101
        %v4118 = vmul.f32 %v4048, %v4102
        %v4119 = vmul.f32 %v4053, %v4103
        %v4120 = vmul.f32 %v4056, %v4104
        %v4121 = vmul.f32 %v4061, %v4105
        %v4122 = vmul.f32 %v4064, %v4106
        %v4123 = vmul.f32 %v4069, %v4107
        %v4124 = vmul.f32 %v4072, %v4108
        %v4125 = vmul.f32 %v4077, %v4109
        %v4126 = vmul.f32 %v4080, %v4110
        %v4127 = vmul.f32 %v4085, %v4111
        %v4128 = vmul.f32 %v4088, %v4112
        %v4129 = vmul.f32 %v4093, %v4113
        %v4130 = vmul.f32 %v4096, %v4114
        %v4131 = vpack.c.bf16 %v4116, %v4115
        %v4132 = vpack.c.bf16 %v4118, %v4117
        %v4133 = vpack.c.bf16 %v4120, %v4119
        %v4134 = vpack.c.bf16 %v4122, %v4121
        %v4135 = vpack.c.bf16 %v4124, %v4123
        %v4136 = vpack.c.bf16 %v4126, %v4125
        %v4137 = vpack.c.bf16 %v4128, %v4127
        %v4138 = vpack.c.bf16 %v4130, %v4129
        %4139 = vst.msk [vmem:[#allocation3 + $0x80] sm:$0xff] %vm1775, %v4131
        %4140 = vst.msk [vmem:[#allocation3 + $0x90] sm:$0xff] %vm1775, %v4132
        %4141 = vst.msk [vmem:[#allocation3 + $0xa0] sm:$0xff] %vm1775, %v4133
        %4142 = vst.msk [vmem:[#allocation3 + $0xb0] sm:$0xff] %vm1775, %v4134
        %4143 = vst.msk [vmem:[#allocation3 + $0xc0] sm:$0xff] %vm1775, %v4135
        %4144 = vst.msk [vmem:[#allocation3 + $0xd0] sm:$0xff] %vm1775, %v4136
        %4145 = vst.msk [vmem:[#allocation3 + $0xe0] sm:$0xff] %vm1775, %v4137
        %4146 = vst.msk [vmem:[#allocation3 + $0xf0] sm:$0xff] %vm1775, %v4138
        %v4147 = vld [vmem:[#allocation2 + $0x180] sm:$0xff]
        %v4148 = vld [vmem:[#allocation2 + $0x1b0] sm:$0xff]
        %v4149 = vld [vmem:[#allocation2 + $0x1e0] sm:$0xff]
        %v4150 = vld [vmem:[#allocation2 + $0x210] sm:$0xff]
        %v4151 = vld [vmem:[#allocation2 + $0x240] sm:$0xff]
        %v4152 = vld [vmem:[#allocation2 + $0x270] sm:$0xff]
        %v4153 = vld [vmem:[#allocation2 + $0x2a0] sm:$0xff]
        %v4154 = vld [vmem:[#allocation2 + $0x2d0] sm:$0xff]
        %v4155 = vld [vmem:[#allocation2 + $0x190] sm:$0xff]
        %v4156 = vld [vmem:[#allocation2 + $0x1c0] sm:$0xff]
        %v4157 = vld [vmem:[#allocation2 + $0x1f0] sm:$0xff]
        %v4158 = vld [vmem:[#allocation2 + $0x220] sm:$0xff]
        %v4159 = vld [vmem:[#allocation2 + $0x250] sm:$0xff]
        %v4160 = vld [vmem:[#allocation2 + $0x280] sm:$0xff]
        %v4161 = vld [vmem:[#allocation2 + $0x2b0] sm:$0xff]
        %v4162 = vld [vmem:[#allocation2 + $0x2e0] sm:$0xff]
        %v4163 = vld [vmem:[#allocation2 + $0x1a0] sm:$0xff]
        %v4164 = vld [vmem:[#allocation2 + $0x1d0] sm:$0xff]
        %v4165 = vld [vmem:[#allocation2 + $0x200] sm:$0xff]
        %v4166 = vld [vmem:[#allocation2 + $0x230] sm:$0xff]
        %v4167 = vld [vmem:[#allocation2 + $0x260] sm:$0xff]
        %v4168 = vld [vmem:[#allocation2 + $0x290] sm:$0xff]
        %v4169 = vld [vmem:[#allocation2 + $0x2c0] sm:$0xff]
        %v4170 = vld [vmem:[#allocation2 + $0x2f0] sm:$0xff]
        %4179 = vrot.lane.b32.xlu0 %v4147, 64
        %v4180 = vpop.permute.xlu0 %4179
        %4181 = vrot.lane.b32.xlu0 %v4148, 64
        %v4182 = vpop.permute.xlu0 %4181
        %4183 = vrot.lane.b32.xlu0 %v4149, 64
        %v4184 = vpop.permute.xlu0 %4183
        %4185 = vrot.lane.b32.xlu0 %v4150, 64
        %v4186 = vpop.permute.xlu0 %4185
        %4187 = vrot.lane.b32.xlu0 %v4151, 64
        %v4188 = vpop.permute.xlu0 %4187
        %4189 = vrot.lane.b32.xlu0 %v4152, 64
        %v4190 = vpop.permute.xlu0 %4189
        %4191 = vrot.lane.b32.xlu0 %v4153, 64
        %v4192 = vpop.permute.xlu0 %4191
        %4193 = vrot.lane.b32.xlu0 %v4154, 64
        %v4194 = vpop.permute.xlu0 %4193
        %4203 = vrot.lane.b32.xlu0 %v4155, 64
        %v4204 = vpop.permute.xlu0 %4203
        %4205 = vrot.lane.b32.xlu0 %v4156, 64
        %v4206 = vpop.permute.xlu0 %4205
        %4207 = vrot.lane.b32.xlu0 %v4157, 64
        %v4208 = vpop.permute.xlu0 %4207
        %4209 = vrot.lane.b32.xlu0 %v4158, 64
        %v4210 = vpop.permute.xlu0 %4209
        %4211 = vrot.lane.b32.xlu0 %v4159, 64
        %v4212 = vpop.permute.xlu0 %4211
        %4213 = vrot.lane.b32.xlu0 %v4160, 64
        %v4214 = vpop.permute.xlu0 %4213
        %4215 = vrot.lane.b32.xlu0 %v4161, 64
        %v4216 = vpop.permute.xlu0 %4215
        %4217 = vrot.lane.b32.xlu0 %v4162, 64
        %v4218 = vpop.permute.xlu0 %4217
        %v4220 = vsel %vm1775, %v4180, 0
        %v4223 = vsel %vm1775, %v4182, 0
        %v4226 = vsel %vm1775, %v4184, 0
        %v4229 = vsel %vm1775, %v4186, 0
        %v4232 = vsel %vm1775, %v4188, 0
        %v4235 = vsel %vm1775, %v4190, 0
        %v4238 = vsel %vm1775, %v4192, 0
        %v4241 = vsel %vm1775, %v4194, 0
        %v4244 = vsel %vm1775, %v4204, 0
        %v4247 = vsel %vm1775, %v4206, 0
        %v4250 = vsel %vm1775, %v4208, 0
        %v4253 = vsel %vm1775, %v4210, 0
        %v4256 = vsel %vm1775, %v4212, 0
        %v4259 = vsel %vm1775, %v4214, 0
        %v4262 = vsel %vm1775, %v4216, 0
        %v4265 = vsel %vm1775, %v4218, 0
        %4267 = vmatprep.subr.bf16.mxu0 0
        %4268 = vmatpush1.bf16.xpose.msra.mxu0 %v4244
        %4269 = vmatprep.subr.bf16.mxu0 0
        %4270 = vmatpush1.bf16.xpose.msra.mxu0 %v4247
        %4271 = vmatprep.subr.bf16.mxu0 0
        %4272 = vmatpush1.bf16.xpose.msra.mxu0 %v4250
        %4273 = vmatprep.subr.bf16.mxu0 0
        %4274 = vmatpush1.bf16.xpose.msra.mxu0 %v4253
        %4275 = vmatprep.subr.bf16.mxu0 0
        %4276 = vmatpush1.bf16.xpose.msra.mxu0 %v4256
        %4277 = vmatprep.subr.bf16.mxu0 0
        %4278 = vmatpush1.bf16.xpose.msra.mxu0 %v4259
        %4279 = vmatprep.subr.bf16.mxu0 0
        %4280 = vmatpush1.bf16.xpose.msra.mxu0 %v4262
        %4281 = vmatprep.subr.bf16.mxu0 0
        %4282 = vmatpush1.bf16.xpose.msra.mxu0 %v4265
        %4283 = vmatprep.subr.bf16.mxu0 0
        %4284 = vmatpush1.bf16.xpose.msra.mxu0 0
        %4285 = vmatprep.subr.bf16.mxu0 0
        %4286 = vmatpush1.bf16.xpose.msra.mxu0 0
        %4287 = vmatprep.subr.bf16.mxu0 0
        %4288 = vmatpush1.bf16.xpose.msra.mxu0 0
        %4289 = vmatprep.subr.bf16.mxu0 0
        %4290 = vmatpush1.bf16.xpose.msra.mxu0 0
        %4291 = vmatprep.subr.bf16.mxu0 0
        %4292 = vmatpush1.bf16.xpose.msra.mxu0 0
        %4293 = vmatprep.subr.bf16.mxu0 0
        %4294 = vmatpush1.bf16.xpose.msra.mxu0 0
        %4295 = vmatprep.subr.bf16.mxu0 0
        %4296 = vmatpush1.bf16.xpose.msra.mxu0 0
        %4297 = vmatprep.subr.bf16.mxu0 0
        %4298 = vmatpush1.bf16.xpose.msra.mxu0 0
        %4299 = vmatprep.mubr.bf16.mxu0 0
        %4300 = vmatmul.mubr.bf16.gmra.mrb[0].mxu0 %v4220
        %v4301 = vpop.f32.mrb[0].mxu0
        %v4302 = vadd.f32 0.0, %v4301
        %v4303 = vpop.f32.mrb[0].mxu0
        %v4304 = vpop.f32.mrb[0].mxu0
        %v4305 = vadd.f32 0.0, %v4304
        %v4306 = vpop.f32.mrb[0].mxu0
        %4307 = vmatprep.mubr.bf16.mxu0 0
        %4308 = vmatmul.mubr.bf16.gmra.mrb[0].mxu0 %v4223
        %v4309 = vpop.f32.mrb[0].mxu0
        %v4310 = vadd.f32 0.0, %v4309
        %v4311 = vpop.f32.mrb[0].mxu0
        %v4312 = vpop.f32.mrb[0].mxu0
        %v4313 = vadd.f32 0.0, %v4312
        %v4314 = vpop.f32.mrb[0].mxu0
        %4315 = vmatprep.mubr.bf16.mxu0 0
        %4316 = vmatmul.mubr.bf16.gmra.mrb[0].mxu0 %v4226
        %v4317 = vpop.f32.mrb[0].mxu0
        %v4318 = vadd.f32 0.0, %v4317
        %v4319 = vpop.f32.mrb[0].mxu0
        %v4320 = vpop.f32.mrb[0].mxu0
        %v4321 = vadd.f32 0.0, %v4320
        %v4322 = vpop.f32.mrb[0].mxu0
        %4323 = vmatprep.mubr.bf16.mxu0 0
        %4324 = vmatmul.mubr.bf16.gmra.mrb[0].mxu0 %v4229
        %v4325 = vpop.f32.mrb[0].mxu0
        %v4326 = vadd.f32 0.0, %v4325
        %v4327 = vpop.f32.mrb[0].mxu0
        %v4328 = vpop.f32.mrb[0].mxu0
        %v4329 = vadd.f32 0.0, %v4328
        %v4330 = vpop.f32.mrb[0].mxu0
        %4331 = vmatprep.mubr.bf16.mxu0 0
        %4332 = vmatmul.mubr.bf16.gmra.mrb[0].mxu0 %v4232
        %v4333 = vpop.f32.mrb[0].mxu0
        %v4334 = vadd.f32 0.0, %v4333
        %v4335 = vpop.f32.mrb[0].mxu0
        %v4336 = vpop.f32.mrb[0].mxu0
        %v4337 = vadd.f32 0.0, %v4336
        %v4338 = vpop.f32.mrb[0].mxu0
        %4339 = vmatprep.mubr.bf16.mxu0 0
        %4340 = vmatmul.mubr.bf16.gmra.mrb[0].mxu0 %v4235
        %v4341 = vpop.f32.mrb[0].mxu0
        %v4342 = vadd.f32 0.0, %v4341
        %v4343 = vpop.f32.mrb[0].mxu0
        %v4344 = vpop.f32.mrb[0].mxu0
        %v4345 = vadd.f32 0.0, %v4344
        %v4346 = vpop.f32.mrb[0].mxu0
        %4347 = vmatprep.mubr.bf16.mxu0 0
        %4348 = vmatmul.mubr.bf16.gmra.mrb[0].mxu0 %v4238
        %v4349 = vpop.f32.mrb[0].mxu0
        %v4350 = vadd.f32 0.0, %v4349
        %v4351 = vpop.f32.mrb[0].mxu0
        %v4352 = vpop.f32.mrb[0].mxu0
        %v4353 = vadd.f32 0.0, %v4352
        %v4354 = vpop.f32.mrb[0].mxu0
        %4355 = vmatprep.mubr.bf16.mxu0 0
        %4356 = vmatmul.mubr.bf16.gmra.mrb[0].mxu0 %v4241
        %v4357 = vpop.f32.mrb[0].mxu0
        %v4358 = vadd.f32 0.0, %v4357
        %v4359 = vpop.f32.mrb[0].mxu0
        %v4360 = vpop.f32.mrb[0].mxu0
        %v4361 = vadd.f32 0.0, %v4360
        %v4362 = vpop.f32.mrb[0].mxu0
        %4363 = vdwg.mxu0
        %4364 = vmax.xlane.f32.xlu0 %v4302
        %v4365 = vpop.xlane.xlu0 %4364
        %4366 = vmax.xlane.f32.xlu0 %v4305
        %v4367 = vpop.xlane.xlu0 %4366
        %4368 = vmax.xlane.f32.xlu0 %v4310
        %v4369 = vpop.xlane.xlu0 %4368
        %4370 = vmax.xlane.f32.xlu0 %v4313
        %v4371 = vpop.xlane.xlu0 %4370
        %4372 = vmax.xlane.f32.xlu0 %v4318
        %v4373 = vpop.xlane.xlu0 %4372
        %4374 = vmax.xlane.f32.xlu0 %v4321
        %v4375 = vpop.xlane.xlu0 %4374
        %4376 = vmax.xlane.f32.xlu0 %v4326
        %v4377 = vpop.xlane.xlu0 %4376
        %4378 = vmax.xlane.f32.xlu0 %v4329
        %v4379 = vpop.xlane.xlu0 %4378
        %4380 = vmax.xlane.f32.xlu0 %v4334
        %v4381 = vpop.xlane.xlu0 %4380
        %4382 = vmax.xlane.f32.xlu0 %v4337
        %v4383 = vpop.xlane.xlu0 %4382
        %4384 = vmax.xlane.f32.xlu0 %v4342
        %v4385 = vpop.xlane.xlu0 %4384
        %4386 = vmax.xlane.f32.xlu0 %v4345
        %v4387 = vpop.xlane.xlu0 %4386
        %4388 = vmax.xlane.f32.xlu0 %v4350
        %v4389 = vpop.xlane.xlu0 %4388
        %4390 = vmax.xlane.f32.xlu0 %v4353
        %v4391 = vpop.xlane.xlu0 %4390
        %4392 = vmax.xlane.f32.xlu0 %v4358
        %v4393 = vpop.xlane.xlu0 %4392
        %4394 = vmax.xlane.f32.xlu0 %v4361
        %v4395 = vpop.xlane.xlu0 %4394
        %v4396 = vsub.f32 %v4302, %v4365
        %v4397 = vsub.f32 %v4305, %v4367
        %v4398 = vsub.f32 %v4310, %v4369
        %v4399 = vsub.f32 %v4313, %v4371
        %v4400 = vsub.f32 %v4318, %v4373
        %v4401 = vsub.f32 %v4321, %v4375
        %v4402 = vsub.f32 %v4326, %v4377
        %v4403 = vsub.f32 %v4329, %v4379
        %v4404 = vsub.f32 %v4334, %v4381
        %v4405 = vsub.f32 %v4337, %v4383
        %v4406 = vsub.f32 %v4342, %v4385
        %v4407 = vsub.f32 %v4345, %v4387
        %v4408 = vsub.f32 %v4350, %v4389
        %v4409 = vsub.f32 %v4353, %v4391
        %v4410 = vsub.f32 %v4358, %v4393
        %v4411 = vsub.f32 %v4361, %v4395
        %v4412 = vmul.f32 %v4396, 1.442695
        %v4413 = vpow.pop %v4412
        %v4414 = vmul.f32 %v4397, 1.442695
        %v4415 = vpow.pop %v4414
        %v4416 = vmul.f32 %v4398, 1.442695
        %v4417 = vpow.pop %v4416
        %v4418 = vmul.f32 %v4399, 1.442695
        %v4419 = vpow.pop %v4418
        %v4420 = vmul.f32 %v4400, 1.442695
        %v4421 = vpow.pop %v4420
        %v4422 = vmul.f32 %v4401, 1.442695
        %v4423 = vpow.pop %v4422
        %v4424 = vmul.f32 %v4402, 1.442695
        %v4425 = vpow.pop %v4424
        %v4426 = vmul.f32 %v4403, 1.442695
        %v4427 = vpow.pop %v4426
        %v4428 = vmul.f32 %v4404, 1.442695
        %v4429 = vpow.pop %v4428
        %v4430 = vmul.f32 %v4405, 1.442695
        %v4431 = vpow.pop %v4430
        %v4432 = vmul.f32 %v4406, 1.442695
        %v4433 = vpow.pop %v4432
        %v4434 = vmul.f32 %v4407, 1.442695
        %v4435 = vpow.pop %v4434
        %v4436 = vmul.f32 %v4408, 1.442695
        %v4437 = vpow.pop %v4436
        %v4438 = vmul.f32 %v4409, 1.442695
        %v4439 = vpow.pop %v4438
        %v4440 = vmul.f32 %v4410, 1.442695
        %v4441 = vpow.pop %v4440
        %v4442 = vmul.f32 %v4411, 1.442695
        %v4443 = vpow.pop %v4442
        %4444 = vadd.xlane.f32.xlu0 %v4413
        %v4445 = vpop.xlane.xlu0 %4444
        %4446 = vadd.xlane.f32.xlu0 %v4415
        %v4447 = vpop.xlane.xlu0 %4446
        %4448 = vadd.xlane.f32.xlu0 %v4417
        %v4449 = vpop.xlane.xlu0 %4448
        %4450 = vadd.xlane.f32.xlu0 %v4419
        %v4451 = vpop.xlane.xlu0 %4450
        %4452 = vadd.xlane.f32.xlu0 %v4421
        %v4453 = vpop.xlane.xlu0 %4452
        %4454 = vadd.xlane.f32.xlu0 %v4423
        %v4455 = vpop.xlane.xlu0 %4454
        %4456 = vadd.xlane.f32.xlu0 %v4425
        %v4457 = vpop.xlane.xlu0 %4456
        %4458 = vadd.xlane.f32.xlu0 %v4427
        %v4459 = vpop.xlane.xlu0 %4458
        %4460 = vadd.xlane.f32.xlu0 %v4429
        %v4461 = vpop.xlane.xlu0 %4460
        %4462 = vadd.xlane.f32.xlu0 %v4431
        %v4463 = vpop.xlane.xlu0 %4462
        %4464 = vadd.xlane.f32.xlu0 %v4433
        %v4465 = vpop.xlane.xlu0 %4464
        %4466 = vadd.xlane.f32.xlu0 %v4435
        %v4467 = vpop.xlane.xlu0 %4466
        %4468 = vadd.xlane.f32.xlu0 %v4437
        %v4469 = vpop.xlane.xlu0 %4468
        %4470 = vadd.xlane.f32.xlu0 %v4439
        %v4471 = vpop.xlane.xlu0 %4470
        %4472 = vadd.xlane.f32.xlu0 %v4441
        %v4473 = vpop.xlane.xlu0 %4472
        %4474 = vadd.xlane.f32.xlu0 %v4443
        %v4475 = vpop.xlane.xlu0 %4474
        %v4476 = vpack.c.bf16 %v4415, %v4413
        %v4477 = vpack.c.bf16 %v4419, %v4417
        %v4478 = vpack.c.bf16 %v4423, %v4421
        %v4479 = vpack.c.bf16 %v4427, %v4425
        %v4480 = vpack.c.bf16 %v4431, %v4429
        %v4481 = vpack.c.bf16 %v4435, %v4433
        %v4482 = vpack.c.bf16 %v4439, %v4437
        %v4483 = vpack.c.bf16 %v4443, %v4441
        %4492 = vrot.lane.b32.xlu0 %v4163, 64
        %v4493 = vpop.permute.xlu0 %4492
        %4494 = vrot.lane.b32.xlu0 %v4164, 64
        %v4495 = vpop.permute.xlu0 %4494
        %4496 = vrot.lane.b32.xlu0 %v4165, 64
        %v4497 = vpop.permute.xlu0 %4496
        %4498 = vrot.lane.b32.xlu0 %v4166, 64
        %v4499 = vpop.permute.xlu0 %4498
        %4500 = vrot.lane.b32.xlu0 %v4167, 64
        %v4501 = vpop.permute.xlu0 %4500
        %4502 = vrot.lane.b32.xlu0 %v4168, 64
        %v4503 = vpop.permute.xlu0 %4502
        %4504 = vrot.lane.b32.xlu0 %v4169, 64
        %v4505 = vpop.permute.xlu0 %4504
        %4506 = vrot.lane.b32.xlu0 %v4170, 64
        %v4507 = vpop.permute.xlu0 %4506
        %4516 = vmatprep.subr.bf16.mxu0 0
        %4517 = vmatpush1.bf16.msra.mxu0 %v4493
        %4518 = vmatprep.subr.bf16.mxu0 0
        %4519 = vmatpush1.bf16.msra.mxu0 %v4495
        %4520 = vmatprep.subr.bf16.mxu0 0
        %4521 = vmatpush1.bf16.msra.mxu0 %v4497
        %4522 = vmatprep.subr.bf16.mxu0 0
        %4523 = vmatpush1.bf16.msra.mxu0 %v4499
        %4524 = vmatprep.subr.bf16.mxu0 0
        %4525 = vmatpush1.bf16.msra.mxu0 %v4501
        %4526 = vmatprep.subr.bf16.mxu0 0
        %4527 = vmatpush1.bf16.msra.mxu0 %v4503
        %4528 = vmatprep.subr.bf16.mxu0 0
        %4529 = vmatpush1.bf16.msra.mxu0 %v4505
        %4530 = vmatprep.subr.bf16.mxu0 0
        %4531 = vmatpush1.bf16.msra.mxu0 %v4507
        %4532 = vmatprep.subr.bf16.mxu0 0
        %4533 = vmatpush1.bf16.msra.mxu0 0
        %4534 = vmatprep.subr.bf16.mxu0 0
        %4535 = vmatpush1.bf16.msra.mxu0 0
        %4536 = vmatprep.subr.bf16.mxu0 0
        %4537 = vmatpush1.bf16.msra.mxu0 0
        %4538 = vmatprep.subr.bf16.mxu0 0
        %4539 = vmatpush1.bf16.msra.mxu0 0
        %4540 = vmatprep.subr.bf16.mxu0 0
        %4541 = vmatpush1.bf16.msra.mxu0 0
        %4542 = vmatprep.subr.bf16.mxu0 0
        %4543 = vmatpush1.bf16.msra.mxu0 0
        %4544 = vmatprep.subr.bf16.mxu0 0
        %4545 = vmatpush1.bf16.msra.mxu0 0
        %4546 = vmatprep.subr.bf16.mxu0 0
        %4547 = vmatpush1.bf16.msra.mxu0 0
        %4548 = vmatprep.mubr.bf16.mxu0 0
        %4549 = vmatmul.mubr.bf16.gmra.mrb[0].mxu0 %v4476
        %v4550 = vpop.f32.mrb[0].mxu0
        %v4551 = vadd.f32 0.0, %v4550
        %v4552 = vpop.f32.mrb[0].mxu0
        %v4553 = vpop.f32.mrb[0].mxu0
        %v4554 = vadd.f32 0.0, %v4553
        %v4555 = vpop.f32.mrb[0].mxu0
        %4556 = vmatprep.mubr.bf16.mxu0 0
        %4557 = vmatmul.mubr.bf16.gmra.mrb[0].mxu0 %v4477
        %v4558 = vpop.f32.mrb[0].mxu0
        %v4559 = vadd.f32 0.0, %v4558
        %v4560 = vpop.f32.mrb[0].mxu0
        %v4561 = vpop.f32.mrb[0].mxu0
        %v4562 = vadd.f32 0.0, %v4561
        %v4563 = vpop.f32.mrb[0].mxu0
        %4564 = vmatprep.mubr.bf16.mxu0 0
        %4565 = vmatmul.mubr.bf16.gmra.mrb[0].mxu0 %v4478
        %v4566 = vpop.f32.mrb[0].mxu0
        %v4567 = vadd.f32 0.0, %v4566
        %v4568 = vpop.f32.mrb[0].mxu0
        %v4569 = vpop.f32.mrb[0].mxu0
        %v4570 = vadd.f32 0.0, %v4569
        %v4571 = vpop.f32.mrb[0].mxu0
        %4572 = vmatprep.mubr.bf16.mxu0 0
        %4573 = vmatmul.mubr.bf16.gmra.mrb[0].mxu0 %v4479
        %v4574 = vpop.f32.mrb[0].mxu0
        %v4575 = vadd.f32 0.0, %v4574
        %v4576 = vpop.f32.mrb[0].mxu0
        %v4577 = vpop.f32.mrb[0].mxu0
        %v4578 = vadd.f32 0.0, %v4577
        %v4579 = vpop.f32.mrb[0].mxu0
        %4580 = vmatprep.mubr.bf16.mxu0 0
        %4581 = vmatmul.mubr.bf16.gmra.mrb[0].mxu0 %v4480
        %v4582 = vpop.f32.mrb[0].mxu0
        %v4583 = vadd.f32 0.0, %v4582
        %v4584 = vpop.f32.mrb[0].mxu0
        %v4585 = vpop.f32.mrb[0].mxu0
        %v4586 = vadd.f32 0.0, %v4585
        %v4587 = vpop.f32.mrb[0].mxu0
        %4588 = vmatprep.mubr.bf16.mxu0 0
        %4589 = vmatmul.mubr.bf16.gmra.mrb[0].mxu0 %v4481
        %v4590 = vpop.f32.mrb[0].mxu0
        %v4591 = vadd.f32 0.0, %v4590
        %v4592 = vpop.f32.mrb[0].mxu0
        %v4593 = vpop.f32.mrb[0].mxu0
        %v4594 = vadd.f32 0.0, %v4593
        %v4595 = vpop.f32.mrb[0].mxu0
        %4596 = vmatprep.mubr.bf16.mxu0 0
        %4597 = vmatmul.mubr.bf16.gmra.mrb[0].mxu0 %v4482
        %v4598 = vpop.f32.mrb[0].mxu0
        %v4599 = vadd.f32 0.0, %v4598
        %v4600 = vpop.f32.mrb[0].mxu0
        %v4601 = vpop.f32.mrb[0].mxu0
        %v4602 = vadd.f32 0.0, %v4601
        %v4603 = vpop.f32.mrb[0].mxu0
        %4604 = vmatprep.mubr.bf16.mxu0 0
        %4605 = vmatmul.mubr.bf16.gmra.mrb[0].mxu0 %v4483
        %v4606 = vpop.f32.mrb[0].mxu0
        %v4607 = vadd.f32 0.0, %v4606
        %v4608 = vpop.f32.mrb[0].mxu0
        %v4609 = vpop.f32.mrb[0].mxu0
        %v4610 = vadd.f32 0.0, %v4609
        %v4611 = vpop.f32.mrb[0].mxu0
        %4612 = vdwg.mxu0
        %v4613 = vrcp.pop %v4445
        %v4614 = vrcp.pop %v4447
        %v4615 = vrcp.pop %v4449
        %v4616 = vrcp.pop %v4451
        %v4617 = vrcp.pop %v4453
        %v4618 = vrcp.pop %v4455
        %v4619 = vrcp.pop %v4457
        %v4620 = vrcp.pop %v4459
        %v4621 = vrcp.pop %v4461
        %v4622 = vrcp.pop %v4463
        %v4623 = vrcp.pop %v4465
        %v4624 = vrcp.pop %v4467
        %v4625 = vrcp.pop %v4469
        %v4626 = vrcp.pop %v4471
        %v4627 = vrcp.pop %v4473
        %v4628 = vrcp.pop %v4475
        %v4629 = vmul.f32 %v4551, %v4613
        %v4630 = vmul.f32 %v4554, %v4614
        %v4631 = vmul.f32 %v4559, %v4615
        %v4632 = vmul.f32 %v4562, %v4616
        %v4633 = vmul.f32 %v4567, %v4617
        %v4634 = vmul.f32 %v4570, %v4618
        %v4635 = vmul.f32 %v4575, %v4619
        %v4636 = vmul.f32 %v4578, %v4620
        %v4637 = vmul.f32 %v4583, %v4621
        %v4638 = vmul.f32 %v4586, %v4622
        %v4639 = vmul.f32 %v4591, %v4623
        %v4640 = vmul.f32 %v4594, %v4624
        %v4641 = vmul.f32 %v4599, %v4625
        %v4642 = vmul.f32 %v4602, %v4626
        %v4643 = vmul.f32 %v4607, %v4627
        %v4644 = vmul.f32 %v4610, %v4628
        %v4645 = vpack.c.bf16 %v4630, %v4629
        %v4646 = vpack.c.bf16 %v4632, %v4631
        %v4647 = vpack.c.bf16 %v4634, %v4633
        %v4648 = vpack.c.bf16 %v4636, %v4635
        %v4649 = vpack.c.bf16 %v4638, %v4637
        %v4650 = vpack.c.bf16 %v4640, %v4639
        %v4651 = vpack.c.bf16 %v4642, %v4641
        %v4652 = vpack.c.bf16 %v4644, %v4643
        %4661 = vrot.lane.b32.xlu0 %v4645, 64
        %v4662 = vpop.permute.xlu0 %4661
        %4663 = vrot.lane.b32.xlu0 %v4646, 64
        %v4664 = vpop.permute.xlu0 %4663
        %4665 = vrot.lane.b32.xlu0 %v4647, 64
        %v4666 = vpop.permute.xlu0 %4665
        %4667 = vrot.lane.b32.xlu0 %v4648, 64
        %v4668 = vpop.permute.xlu0 %4667
        %4669 = vrot.lane.b32.xlu0 %v4649, 64
        %v4670 = vpop.permute.xlu0 %4669
        %4671 = vrot.lane.b32.xlu0 %v4650, 64
        %v4672 = vpop.permute.xlu0 %4671
        %4673 = vrot.lane.b32.xlu0 %v4651, 64
        %v4674 = vpop.permute.xlu0 %4673
        %4675 = vrot.lane.b32.xlu0 %v4652, 64
        %v4676 = vpop.permute.xlu0 %4675
        %4685 = vst.msk [vmem:[#allocation3 + $0x80] sm:$0xff] %vm2724, %v4662
        %4686 = vst.msk [vmem:[#allocation3 + $0x90] sm:$0xff] %vm2724, %v4664
        %4687 = vst.msk [vmem:[#allocation3 + $0xa0] sm:$0xff] %vm2724, %v4666
        %4688 = vst.msk [vmem:[#allocation3 + $0xb0] sm:$0xff] %vm2724, %v4668
        %4689 = vst.msk [vmem:[#allocation3 + $0xc0] sm:$0xff] %vm2724, %v4670
        %4690 = vst.msk [vmem:[#allocation3 + $0xd0] sm:$0xff] %vm2724, %v4672
        %4691 = vst.msk [vmem:[#allocation3 + $0xe0] sm:$0xff] %vm2724, %v4674
        %4692 = vst.msk [vmem:[#allocation3 + $0xf0] sm:$0xff] %vm2724, %v4676
        %v4693 = vld [vmem:[#allocation2 + $0x188] sm:$0xff]
        %v4694 = vld [vmem:[#allocation2 + $0x1b8] sm:$0xff]
        %v4695 = vld [vmem:[#allocation2 + $0x1e8] sm:$0xff]
        %v4696 = vld [vmem:[#allocation2 + $0x218] sm:$0xff]
        %v4697 = vld [vmem:[#allocation2 + $0x248] sm:$0xff]
        %v4698 = vld [vmem:[#allocation2 + $0x278] sm:$0xff]
        %v4699 = vld [vmem:[#allocation2 + $0x2a8] sm:$0xff]
        %v4700 = vld [vmem:[#allocation2 + $0x2d8] sm:$0xff]
        %v4701 = vld [vmem:[#allocation2 + $0x198] sm:$0xff]
        %v4702 = vld [vmem:[#allocation2 + $0x1c8] sm:$0xff]
        %v4703 = vld [vmem:[#allocation2 + $0x1f8] sm:$0xff]
        %v4704 = vld [vmem:[#allocation2 + $0x228] sm:$0xff]
        %v4705 = vld [vmem:[#allocation2 + $0x258] sm:$0xff]
        %v4706 = vld [vmem:[#allocation2 + $0x288] sm:$0xff]
        %v4707 = vld [vmem:[#allocation2 + $0x2b8] sm:$0xff]
        %v4708 = vld [vmem:[#allocation2 + $0x2e8] sm:$0xff]
        %v4709 = vld [vmem:[#allocation2 + $0x1a8] sm:$0xff]
        %v4710 = vld [vmem:[#allocation2 + $0x1d8] sm:$0xff]
        %v4711 = vld [vmem:[#allocation2 + $0x208] sm:$0xff]
        %v4712 = vld [vmem:[#allocation2 + $0x238] sm:$0xff]
        %v4713 = vld [vmem:[#allocation2 + $0x268] sm:$0xff]
        %v4714 = vld [vmem:[#allocation2 + $0x298] sm:$0xff]
        %v4715 = vld [vmem:[#allocation2 + $0x2c8] sm:$0xff]
        %v4716 = vld [vmem:[#allocation2 + $0x2f8] sm:$0xff]
        %v4718 = vsel %vm1775, %v4693, 0
        %v4721 = vsel %vm1775, %v4694, 0
        %v4724 = vsel %vm1775, %v4695, 0
        %v4727 = vsel %vm1775, %v4696, 0
        %v4730 = vsel %vm1775, %v4697, 0
        %v4733 = vsel %vm1775, %v4698, 0
        %v4736 = vsel %vm1775, %v4699, 0
        %v4739 = vsel %vm1775, %v4700, 0
        %v4742 = vsel %vm1775, %v4701, 0
        %v4745 = vsel %vm1775, %v4702, 0
        %v4748 = vsel %vm1775, %v4703, 0
        %v4751 = vsel %vm1775, %v4704, 0
        %v4754 = vsel %vm1775, %v4705, 0
        %v4757 = vsel %vm1775, %v4706, 0
        %v4760 = vsel %vm1775, %v4707, 0
        %v4763 = vsel %vm1775, %v4708, 0
        %4765 = vmatprep.subr.bf16.mxu0 0
        %4766 = vmatpush1.bf16.xpose.msra.mxu0 %v4742
        %4767 = vmatprep.subr.bf16.mxu0 0
        %4768 = vmatpush1.bf16.xpose.msra.mxu0 %v4745
        %4769 = vmatprep.subr.bf16.mxu0 0
        %4770 = vmatpush1.bf16.xpose.msra.mxu0 %v4748
        %4771 = vmatprep.subr.bf16.mxu0 0
        %4772 = vmatpush1.bf16.xpose.msra.mxu0 %v4751
        %4773 = vmatprep.subr.bf16.mxu0 0
        %4774 = vmatpush1.bf16.xpose.msra.mxu0 %v4754
        %4775 = vmatprep.subr.bf16.mxu0 0
        %4776 = vmatpush1.bf16.xpose.msra.mxu0 %v4757
        %4777 = vmatprep.subr.bf16.mxu0 0
        %4778 = vmatpush1.bf16.xpose.msra.mxu0 %v4760
        %4779 = vmatprep.subr.bf16.mxu0 0
        %4780 = vmatpush1.bf16.xpose.msra.mxu0 %v4763
        %4781 = vmatprep.subr.bf16.mxu0 0
        %4782 = vmatpush1.bf16.xpose.msra.mxu0 0
        %4783 = vmatprep.subr.bf16.mxu0 0
        %4784 = vmatpush1.bf16.xpose.msra.mxu0 0
        %4785 = vmatprep.subr.bf16.mxu0 0
        %4786 = vmatpush1.bf16.xpose.msra.mxu0 0
        %4787 = vmatprep.subr.bf16.mxu0 0
        %4788 = vmatpush1.bf16.xpose.msra.mxu0 0
        %4789 = vmatprep.subr.bf16.mxu0 0
        %4790 = vmatpush1.bf16.xpose.msra.mxu0 0
        %4791 = vmatprep.subr.bf16.mxu0 0
        %4792 = vmatpush1.bf16.xpose.msra.mxu0 0
        %4793 = vmatprep.subr.bf16.mxu0 0
        %4794 = vmatpush1.bf16.xpose.msra.mxu0 0
        %4795 = vmatprep.subr.bf16.mxu0 0
        %4796 = vmatpush1.bf16.xpose.msra.mxu0 0
        %4797 = vmatprep.mubr.bf16.mxu0 0
        %4798 = vmatmul.mubr.bf16.gmra.mrb[0].mxu0 %v4718
        %v4799 = vpop.f32.mrb[0].mxu0
        %v4800 = vadd.f32 0.0, %v4799
        %v4801 = vpop.f32.mrb[0].mxu0
        %v4802 = vpop.f32.mrb[0].mxu0
        %v4803 = vadd.f32 0.0, %v4802
        %v4804 = vpop.f32.mrb[0].mxu0
        %4805 = vmatprep.mubr.bf16.mxu0 0
        %4806 = vmatmul.mubr.bf16.gmra.mrb[0].mxu0 %v4721
        %v4807 = vpop.f32.mrb[0].mxu0
        %v4808 = vadd.f32 0.0, %v4807
        %v4809 = vpop.f32.mrb[0].mxu0
        %v4810 = vpop.f32.mrb[0].mxu0
        %v4811 = vadd.f32 0.0, %v4810
        %v4812 = vpop.f32.mrb[0].mxu0
        %4813 = vmatprep.mubr.bf16.mxu0 0
        %4814 = vmatmul.mubr.bf16.gmra.mrb[0].mxu0 %v4724
        %v4815 = vpop.f32.mrb[0].mxu0
        %v4816 = vadd.f32 0.0, %v4815
        %v4817 = vpop.f32.mrb[0].mxu0
        %v4818 = vpop.f32.mrb[0].mxu0
        %v4819 = vadd.f32 0.0, %v4818
        %v4820 = vpop.f32.mrb[0].mxu0
        %4821 = vmatprep.mubr.bf16.mxu0 0
        %4822 = vmatmul.mubr.bf16.gmra.mrb[0].mxu0 %v4727
        %v4823 = vpop.f32.mrb[0].mxu0
        %v4824 = vadd.f32 0.0, %v4823
        %v4825 = vpop.f32.mrb[0].mxu0
        %v4826 = vpop.f32.mrb[0].mxu0
        %v4827 = vadd.f32 0.0, %v4826
        %v4828 = vpop.f32.mrb[0].mxu0
        %4829 = vmatprep.mubr.bf16.mxu0 0
        %4830 = vmatmul.mubr.bf16.gmra.mrb[0].mxu0 %v4730
        %v4831 = vpop.f32.mrb[0].mxu0
        %v4832 = vadd.f32 0.0, %v4831
        %v4833 = vpop.f32.mrb[0].mxu0
        %v4834 = vpop.f32.mrb[0].mxu0
        %v4835 = vadd.f32 0.0, %v4834
        %v4836 = vpop.f32.mrb[0].mxu0
        %4837 = vmatprep.mubr.bf16.mxu0 0
        %4838 = vmatmul.mubr.bf16.gmra.mrb[0].mxu0 %v4733
        %v4839 = vpop.f32.mrb[0].mxu0
        %v4840 = vadd.f32 0.0, %v4839
        %v4841 = vpop.f32.mrb[0].mxu0
        %v4842 = vpop.f32.mrb[0].mxu0
        %v4843 = vadd.f32 0.0, %v4842
        %v4844 = vpop.f32.mrb[0].mxu0
        %4845 = vmatprep.mubr.bf16.mxu0 0
        %4846 = vmatmul.mubr.bf16.gmra.mrb[0].mxu0 %v4736
        %v4847 = vpop.f32.mrb[0].mxu0
        %v4848 = vadd.f32 0.0, %v4847
        %v4849 = vpop.f32.mrb[0].mxu0
        %v4850 = vpop.f32.mrb[0].mxu0
        %v4851 = vadd.f32 0.0, %v4850
        %v4852 = vpop.f32.mrb[0].mxu0
        %4853 = vmatprep.mubr.bf16.mxu0 0
        %4854 = vmatmul.mubr.bf16.gmra.mrb[0].mxu0 %v4739
        %v4855 = vpop.f32.mrb[0].mxu0
        %v4856 = vadd.f32 0.0, %v4855
        %v4857 = vpop.f32.mrb[0].mxu0
        %v4858 = vpop.f32.mrb[0].mxu0
        %v4859 = vadd.f32 0.0, %v4858
        %v4860 = vpop.f32.mrb[0].mxu0
        %4861 = vdwg.mxu0
        %4862 = vmax.xlane.f32.xlu0 %v4800
        %v4863 = vpop.xlane.xlu0 %4862
        %4864 = vmax.xlane.f32.xlu0 %v4803
        %v4865 = vpop.xlane.xlu0 %4864
        %4866 = vmax.xlane.f32.xlu0 %v4808
        %v4867 = vpop.xlane.xlu0 %4866
        %4868 = vmax.xlane.f32.xlu0 %v4811
        %v4869 = vpop.xlane.xlu0 %4868
        %4870 = vmax.xlane.f32.xlu0 %v4816
        %v4871 = vpop.xlane.xlu0 %4870
        %4872 = vmax.xlane.f32.xlu0 %v4819
        %v4873 = vpop.xlane.xlu0 %4872
        %4874 = vmax.xlane.f32.xlu0 %v4824
        %v4875 = vpop.xlane.xlu0 %4874
        %4876 = vmax.xlane.f32.xlu0 %v4827
        %v4877 = vpop.xlane.xlu0 %4876
        %4878 = vmax.xlane.f32.xlu0 %v4832
        %v4879 = vpop.xlane.xlu0 %4878
        %4880 = vmax.xlane.f32.xlu0 %v4835
        %v4881 = vpop.xlane.xlu0 %4880
        %4882 = vmax.xlane.f32.xlu0 %v4840
        %v4883 = vpop.xlane.xlu0 %4882
        %4884 = vmax.xlane.f32.xlu0 %v4843
        %v4885 = vpop.xlane.xlu0 %4884
        %4886 = vmax.xlane.f32.xlu0 %v4848
        %v4887 = vpop.xlane.xlu0 %4886
        %4888 = vmax.xlane.f32.xlu0 %v4851
        %v4889 = vpop.xlane.xlu0 %4888
        %4890 = vmax.xlane.f32.xlu0 %v4856
        %v4891 = vpop.xlane.xlu0 %4890
        %4892 = vmax.xlane.f32.xlu0 %v4859
        %v4893 = vpop.xlane.xlu0 %4892
        %v4894 = vsub.f32 %v4800, %v4863
        %v4895 = vsub.f32 %v4803, %v4865
        %v4896 = vsub.f32 %v4808, %v4867
        %v4897 = vsub.f32 %v4811, %v4869
        %v4898 = vsub.f32 %v4816, %v4871
        %v4899 = vsub.f32 %v4819, %v4873
        %v4900 = vsub.f32 %v4824, %v4875
        %v4901 = vsub.f32 %v4827, %v4877
        %v4902 = vsub.f32 %v4832, %v4879
        %v4903 = vsub.f32 %v4835, %v4881
        %v4904 = vsub.f32 %v4840, %v4883
        %v4905 = vsub.f32 %v4843, %v4885
        %v4906 = vsub.f32 %v4848, %v4887
        %v4907 = vsub.f32 %v4851, %v4889
        %v4908 = vsub.f32 %v4856, %v4891
        %v4909 = vsub.f32 %v4859, %v4893
        %v4910 = vmul.f32 %v4894, 1.442695
        %v4911 = vpow.pop %v4910
        %v4912 = vmul.f32 %v4895, 1.442695
        %v4913 = vpow.pop %v4912
        %v4914 = vmul.f32 %v4896, 1.442695
        %v4915 = vpow.pop %v4914
        %v4916 = vmul.f32 %v4897, 1.442695
        %v4917 = vpow.pop %v4916
        %v4918 = vmul.f32 %v4898, 1.442695
        %v4919 = vpow.pop %v4918
        %v4920 = vmul.f32 %v4899, 1.442695
        %v4921 = vpow.pop %v4920
        %v4922 = vmul.f32 %v4900, 1.442695
        %v4923 = vpow.pop %v4922
        %v4924 = vmul.f32 %v4901, 1.442695
        %v4925 = vpow.pop %v4924
        %v4926 = vmul.f32 %v4902, 1.442695
        %v4927 = vpow.pop %v4926
        %v4928 = vmul.f32 %v4903, 1.442695
        %v4929 = vpow.pop %v4928
        %v4930 = vmul.f32 %v4904, 1.442695
        %v4931 = vpow.pop %v4930
        %v4932 = vmul.f32 %v4905, 1.442695
        %v4933 = vpow.pop %v4932
        %v4934 = vmul.f32 %v4906, 1.442695
        %v4935 = vpow.pop %v4934
        %v4936 = vmul.f32 %v4907, 1.442695
        %v4937 = vpow.pop %v4936
        %v4938 = vmul.f32 %v4908, 1.442695
        %v4939 = vpow.pop %v4938
        %v4940 = vmul.f32 %v4909, 1.442695
        %v4941 = vpow.pop %v4940
        %4942 = vadd.xlane.f32.xlu0 %v4911
        %v4943 = vpop.xlane.xlu0 %4942
        %4944 = vadd.xlane.f32.xlu0 %v4913
        %v4945 = vpop.xlane.xlu0 %4944
        %4946 = vadd.xlane.f32.xlu0 %v4915
        %v4947 = vpop.xlane.xlu0 %4946
        %4948 = vadd.xlane.f32.xlu0 %v4917
        %v4949 = vpop.xlane.xlu0 %4948
        %4950 = vadd.xlane.f32.xlu0 %v4919
        %v4951 = vpop.xlane.xlu0 %4950
        %4952 = vadd.xlane.f32.xlu0 %v4921
        %v4953 = vpop.xlane.xlu0 %4952
        %4954 = vadd.xlane.f32.xlu0 %v4923
        %v4955 = vpop.xlane.xlu0 %4954
        %4956 = vadd.xlane.f32.xlu0 %v4925
        %v4957 = vpop.xlane.xlu0 %4956
        %4958 = vadd.xlane.f32.xlu0 %v4927
        %v4959 = vpop.xlane.xlu0 %4958
        %4960 = vadd.xlane.f32.xlu0 %v4929
        %v4961 = vpop.xlane.xlu0 %4960
        %4962 = vadd.xlane.f32.xlu0 %v4931
        %v4963 = vpop.xlane.xlu0 %4962
        %4964 = vadd.xlane.f32.xlu0 %v4933
        %v4965 = vpop.xlane.xlu0 %4964
        %4966 = vadd.xlane.f32.xlu0 %v4935
        %v4967 = vpop.xlane.xlu0 %4966
        %4968 = vadd.xlane.f32.xlu0 %v4937
        %v4969 = vpop.xlane.xlu0 %4968
        %4970 = vadd.xlane.f32.xlu0 %v4939
        %v4971 = vpop.xlane.xlu0 %4970
        %4972 = vadd.xlane.f32.xlu0 %v4941
        %v4973 = vpop.xlane.xlu0 %4972
        %v4974 = vpack.c.bf16 %v4913, %v4911
        %v4975 = vpack.c.bf16 %v4917, %v4915
        %v4976 = vpack.c.bf16 %v4921, %v4919
        %v4977 = vpack.c.bf16 %v4925, %v4923
        %v4978 = vpack.c.bf16 %v4929, %v4927
        %v4979 = vpack.c.bf16 %v4933, %v4931
        %v4980 = vpack.c.bf16 %v4937, %v4935
        %v4981 = vpack.c.bf16 %v4941, %v4939
        %4982 = vmatprep.subr.bf16.mxu0 0
        %4983 = vmatpush1.bf16.msra.mxu0 %v4709
        %4984 = vmatprep.subr.bf16.mxu0 0
        %4985 = vmatpush1.bf16.msra.mxu0 %v4710
        %4986 = vmatprep.subr.bf16.mxu0 0
        %4987 = vmatpush1.bf16.msra.mxu0 %v4711
        %4988 = vmatprep.subr.bf16.mxu0 0
        %4989 = vmatpush1.bf16.msra.mxu0 %v4712
        %4990 = vmatprep.subr.bf16.mxu0 0
        %4991 = vmatpush1.bf16.msra.mxu0 %v4713
        %4992 = vmatprep.subr.bf16.mxu0 0
        %4993 = vmatpush1.bf16.msra.mxu0 %v4714
        %4994 = vmatprep.subr.bf16.mxu0 0
        %4995 = vmatpush1.bf16.msra.mxu0 %v4715
        %4996 = vmatprep.subr.bf16.mxu0 0
        %4997 = vmatpush1.bf16.msra.mxu0 %v4716
        %4998 = vmatprep.subr.bf16.mxu0 0
        %4999 = vmatpush1.bf16.msra.mxu0 0
        %5000 = vmatprep.subr.bf16.mxu0 0
        %5001 = vmatpush1.bf16.msra.mxu0 0
        %5002 = vmatprep.subr.bf16.mxu0 0
        %5003 = vmatpush1.bf16.msra.mxu0 0
        %5004 = vmatprep.subr.bf16.mxu0 0
        %5005 = vmatpush1.bf16.msra.mxu0 0
        %5006 = vmatprep.subr.bf16.mxu0 0
        %5007 = vmatpush1.bf16.msra.mxu0 0
        %5008 = vmatprep.subr.bf16.mxu0 0
        %5009 = vmatpush1.bf16.msra.mxu0 0
        %5010 = vmatprep.subr.bf16.mxu0 0
        %5011 = vmatpush1.bf16.msra.mxu0 0
        %5012 = vmatprep.subr.bf16.mxu0 0
        %5013 = vmatpush1.bf16.msra.mxu0 0
        %5014 = vmatprep.mubr.bf16.mxu0 0
        %5015 = vmatmul.mubr.bf16.gmra.mrb[0].mxu0 %v4974
        %v5016 = vpop.f32.mrb[0].mxu0
        %v5017 = vadd.f32 0.0, %v5016
        %v5018 = vpop.f32.mrb[0].mxu0
        %v5019 = vpop.f32.mrb[0].mxu0
        %v5020 = vadd.f32 0.0, %v5019
        %v5021 = vpop.f32.mrb[0].mxu0
        %5022 = vmatprep.mubr.bf16.mxu0 0
        %5023 = vmatmul.mubr.bf16.gmra.mrb[0].mxu0 %v4975
        %v5024 = vpop.f32.mrb[0].mxu0
        %v5025 = vadd.f32 0.0, %v5024
        %v5026 = vpop.f32.mrb[0].mxu0
        %v5027 = vpop.f32.mrb[0].mxu0
        %v5028 = vadd.f32 0.0, %v5027
        %v5029 = vpop.f32.mrb[0].mxu0
        %5030 = vmatprep.mubr.bf16.mxu0 0
        %5031 = vmatmul.mubr.bf16.gmra.mrb[0].mxu0 %v4976
        %v5032 = vpop.f32.mrb[0].mxu0
        %v5033 = vadd.f32 0.0, %v5032
        %v5034 = vpop.f32.mrb[0].mxu0
        %v5035 = vpop.f32.mrb[0].mxu0
        %v5036 = vadd.f32 0.0, %v5035
        %v5037 = vpop.f32.mrb[0].mxu0
        %5038 = vmatprep.mubr.bf16.mxu0 0
        %5039 = vmatmul.mubr.bf16.gmra.mrb[0].mxu0 %v4977
        %v5040 = vpop.f32.mrb[0].mxu0
        %v5041 = vadd.f32 0.0, %v5040
        %v5042 = vpop.f32.mrb[0].mxu0
        %v5043 = vpop.f32.mrb[0].mxu0
        %v5044 = vadd.f32 0.0, %v5043
        %v5045 = vpop.f32.mrb[0].mxu0
        %5046 = vmatprep.mubr.bf16.mxu0 0
        %5047 = vmatmul.mubr.bf16.gmra.mrb[0].mxu0 %v4978
        %v5048 = vpop.f32.mrb[0].mxu0
        %v5049 = vadd.f32 0.0, %v5048
        %v5050 = vpop.f32.mrb[0].mxu0
        %v5051 = vpop.f32.mrb[0].mxu0
        %v5052 = vadd.f32 0.0, %v5051
        %v5053 = vpop.f32.mrb[0].mxu0
        %5054 = vmatprep.mubr.bf16.mxu0 0
        %5055 = vmatmul.mubr.bf16.gmra.mrb[0].mxu0 %v4979
        %v5056 = vpop.f32.mrb[0].mxu0
        %v5057 = vadd.f32 0.0, %v5056
        %v5058 = vpop.f32.mrb[0].mxu0
        %v5059 = vpop.f32.mrb[0].mxu0
        %v5060 = vadd.f32 0.0, %v5059
        %v5061 = vpop.f32.mrb[0].mxu0
        %5062 = vmatprep.mubr.bf16.mxu0 0
        %5063 = vmatmul.mubr.bf16.gmra.mrb[0].mxu0 %v4980
        %v5064 = vpop.f32.mrb[0].mxu0
        %v5065 = vadd.f32 0.0, %v5064
        %v5066 = vpop.f32.mrb[0].mxu0
        %v5067 = vpop.f32.mrb[0].mxu0
        %v5068 = vadd.f32 0.0, %v5067
        %v5069 = vpop.f32.mrb[0].mxu0
        %5070 = vmatprep.mubr.bf16.mxu0 0
        %5071 = vmatmul.mubr.bf16.gmra.mrb[0].mxu0 %v4981
        %v5072 = vpop.f32.mrb[0].mxu0
        %v5073 = vadd.f32 0.0, %v5072
        %v5074 = vpop.f32.mrb[0].mxu0
        %v5075 = vpop.f32.mrb[0].mxu0
        %v5076 = vadd.f32 0.0, %v5075
        %v5077 = vpop.f32.mrb[0].mxu0
        %5078 = vdwg.mxu0
        %v5079 = vrcp.pop %v4943
        %v5080 = vrcp.pop %v4945
        %v5081 = vrcp.pop %v4947
        %v5082 = vrcp.pop %v4949
        %v5083 = vrcp.pop %v4951
        %v5084 = vrcp.pop %v4953
        %v5085 = vrcp.pop %v4955
        %v5086 = vrcp.pop %v4957
        %v5087 = vrcp.pop %v4959
        %v5088 = vrcp.pop %v4961
        %v5089 = vrcp.pop %v4963
        %v5090 = vrcp.pop %v4965
        %v5091 = vrcp.pop %v4967
        %v5092 = vrcp.pop %v4969
        %v5093 = vrcp.pop %v4971
        %v5094 = vrcp.pop %v4973
        %v5095 = vmul.f32 %v5017, %v5079
        %v5096 = vmul.f32 %v5020, %v5080
        %v5097 = vmul.f32 %v5025, %v5081
        %v5098 = vmul.f32 %v5028, %v5082
        %v5099 = vmul.f32 %v5033, %v5083
        %v5100 = vmul.f32 %v5036, %v5084
        %v5101 = vmul.f32 %v5041, %v5085
        %v5102 = vmul.f32 %v5044, %v5086
        %v5103 = vmul.f32 %v5049, %v5087
        %v5104 = vmul.f32 %v5052, %v5088
        %v5105 = vmul.f32 %v5057, %v5089
        %v5106 = vmul.f32 %v5060, %v5090
        %v5107 = vmul.f32 %v5065, %v5091
        %v5108 = vmul.f32 %v5068, %v5092
        %v5109 = vmul.f32 %v5073, %v5093
        %v5110 = vmul.f32 %v5076, %v5094
        %v5111 = vpack.c.bf16 %v5096, %v5095
        %v5112 = vpack.c.bf16 %v5098, %v5097
        %v5113 = vpack.c.bf16 %v5100, %v5099
        %v5114 = vpack.c.bf16 %v5102, %v5101
        %v5115 = vpack.c.bf16 %v5104, %v5103
        %v5116 = vpack.c.bf16 %v5106, %v5105
        %v5117 = vpack.c.bf16 %v5108, %v5107
        %v5118 = vpack.c.bf16 %v5110, %v5109
        %5119 = vst.msk [vmem:[#allocation3 + $0x88] sm:$0xff] %vm1775, %v5111
        %5120 = vst.msk [vmem:[#allocation3 + $0x98] sm:$0xff] %vm1775, %v5112
        %5121 = vst.msk [vmem:[#allocation3 + $0xa8] sm:$0xff] %vm1775, %v5113
        %5122 = vst.msk [vmem:[#allocation3 + $0xb8] sm:$0xff] %vm1775, %v5114
        %5123 = vst.msk [vmem:[#allocation3 + $0xc8] sm:$0xff] %vm1775, %v5115
        %5124 = vst.msk [vmem:[#allocation3 + $0xd8] sm:$0xff] %vm1775, %v5116
        %5125 = vst.msk [vmem:[#allocation3 + $0xe8] sm:$0xff] %vm1775, %v5117
        %5126 = vst.msk [vmem:[#allocation3 + $0xf8] sm:$0xff] %vm1775, %v5118
        %v5127 = vld [vmem:[#allocation2 + $0x188] sm:$0xff]
        %v5128 = vld [vmem:[#allocation2 + $0x1b8] sm:$0xff]
        %v5129 = vld [vmem:[#allocation2 + $0x1e8] sm:$0xff]
        %v5130 = vld [vmem:[#allocation2 + $0x218] sm:$0xff]
        %v5131 = vld [vmem:[#allocation2 + $0x248] sm:$0xff]
        %v5132 = vld [vmem:[#allocation2 + $0x278] sm:$0xff]
        %v5133 = vld [vmem:[#allocation2 + $0x2a8] sm:$0xff]
        %v5134 = vld [vmem:[#allocation2 + $0x2d8] sm:$0xff]
        %v5135 = vld [vmem:[#allocation2 + $0x198] sm:$0xff]
        %v5136 = vld [vmem:[#allocation2 + $0x1c8] sm:$0xff]
        %v5137 = vld [vmem:[#allocation2 + $0x1f8] sm:$0xff]
        %v5138 = vld [vmem:[#allocation2 + $0x228] sm:$0xff]
        %v5139 = vld [vmem:[#allocation2 + $0x258] sm:$0xff]
        %v5140 = vld [vmem:[#allocation2 + $0x288] sm:$0xff]
        %v5141 = vld [vmem:[#allocation2 + $0x2b8] sm:$0xff]
        %v5142 = vld [vmem:[#allocation2 + $0x2e8] sm:$0xff]
        %v5143 = vld [vmem:[#allocation2 + $0x1a8] sm:$0xff]
        %v5144 = vld [vmem:[#allocation2 + $0x1d8] sm:$0xff]
        %v5145 = vld [vmem:[#allocation2 + $0x208] sm:$0xff]
        %v5146 = vld [vmem:[#allocation2 + $0x238] sm:$0xff]
        %v5147 = vld [vmem:[#allocation2 + $0x268] sm:$0xff]
        %v5148 = vld [vmem:[#allocation2 + $0x298] sm:$0xff]
        %v5149 = vld [vmem:[#allocation2 + $0x2c8] sm:$0xff]
        %v5150 = vld [vmem:[#allocation2 + $0x2f8] sm:$0xff]
        %5159 = vrot.lane.b32.xlu0 %v5127, 64
        %v5160 = vpop.permute.xlu0 %5159
        %5161 = vrot.lane.b32.xlu0 %v5128, 64
        %v5162 = vpop.permute.xlu0 %5161
        %5163 = vrot.lane.b32.xlu0 %v5129, 64
        %v5164 = vpop.permute.xlu0 %5163
        %5165 = vrot.lane.b32.xlu0 %v5130, 64
        %v5166 = vpop.permute.xlu0 %5165
        %5167 = vrot.lane.b32.xlu0 %v5131, 64
        %v5168 = vpop.permute.xlu0 %5167
        %5169 = vrot.lane.b32.xlu0 %v5132, 64
        %v5170 = vpop.permute.xlu0 %5169
        %5171 = vrot.lane.b32.xlu0 %v5133, 64
        %v5172 = vpop.permute.xlu0 %5171
        %5173 = vrot.lane.b32.xlu0 %v5134, 64
        %v5174 = vpop.permute.xlu0 %5173
        %5183 = vrot.lane.b32.xlu0 %v5135, 64
        %v5184 = vpop.permute.xlu0 %5183
        %5185 = vrot.lane.b32.xlu0 %v5136, 64
        %v5186 = vpop.permute.xlu0 %5185
        %5187 = vrot.lane.b32.xlu0 %v5137, 64
        %v5188 = vpop.permute.xlu0 %5187
        %5189 = vrot.lane.b32.xlu0 %v5138, 64
        %v5190 = vpop.permute.xlu0 %5189
        %5191 = vrot.lane.b32.xlu0 %v5139, 64
        %v5192 = vpop.permute.xlu0 %5191
        %5193 = vrot.lane.b32.xlu0 %v5140, 64
        %v5194 = vpop.permute.xlu0 %5193
        %5195 = vrot.lane.b32.xlu0 %v5141, 64
        %v5196 = vpop.permute.xlu0 %5195
        %5197 = vrot.lane.b32.xlu0 %v5142, 64
        %v5198 = vpop.permute.xlu0 %5197
        %v5200 = vsel %vm1775, %v5160, 0
        %v5203 = vsel %vm1775, %v5162, 0
        %v5206 = vsel %vm1775, %v5164, 0
        %v5209 = vsel %vm1775, %v5166, 0
        %v5212 = vsel %vm1775, %v5168, 0
        %v5215 = vsel %vm1775, %v5170, 0
        %v5218 = vsel %vm1775, %v5172, 0
        %v5221 = vsel %vm1775, %v5174, 0
        %v5224 = vsel %vm1775, %v5184, 0
        %v5227 = vsel %vm1775, %v5186, 0
        %v5230 = vsel %vm1775, %v5188, 0
        %v5233 = vsel %vm1775, %v5190, 0
        %v5236 = vsel %vm1775, %v5192, 0
        %v5239 = vsel %vm1775, %v5194, 0
        %v5242 = vsel %vm1775, %v5196, 0
        %v5245 = vsel %vm1775, %v5198, 0
        %5247 = vmatprep.subr.bf16.mxu0 0
        %5248 = vmatpush1.bf16.xpose.msra.mxu0 %v5224
        %5249 = vmatprep.subr.bf16.mxu0 0
        %5250 = vmatpush1.bf16.xpose.msra.mxu0 %v5227
        %5251 = vmatprep.subr.bf16.mxu0 0
        %5252 = vmatpush1.bf16.xpose.msra.mxu0 %v5230
        %5253 = vmatprep.subr.bf16.mxu0 0
        %5254 = vmatpush1.bf16.xpose.msra.mxu0 %v5233
        %5255 = vmatprep.subr.bf16.mxu0 0
        %5256 = vmatpush1.bf16.xpose.msra.mxu0 %v5236
        %5257 = vmatprep.subr.bf16.mxu0 0
        %5258 = vmatpush1.bf16.xpose.msra.mxu0 %v5239
        %5259 = vmatprep.subr.bf16.mxu0 0
        %5260 = vmatpush1.bf16.xpose.msra.mxu0 %v5242
        %5261 = vmatprep.subr.bf16.mxu0 0
        %5262 = vmatpush1.bf16.xpose.msra.mxu0 %v5245
        %5263 = vmatprep.subr.bf16.mxu0 0
        %5264 = vmatpush1.bf16.xpose.msra.mxu0 0
        %5265 = vmatprep.subr.bf16.mxu0 0
        %5266 = vmatpush1.bf16.xpose.msra.mxu0 0
        %5267 = vmatprep.subr.bf16.mxu0 0
        %5268 = vmatpush1.bf16.xpose.msra.mxu0 0
        %5269 = vmatprep.subr.bf16.mxu0 0
        %5270 = vmatpush1.bf16.xpose.msra.mxu0 0
        %5271 = vmatprep.subr.bf16.mxu0 0
        %5272 = vmatpush1.bf16.xpose.msra.mxu0 0
        %5273 = vmatprep.subr.bf16.mxu0 0
        %5274 = vmatpush1.bf16.xpose.msra.mxu0 0
        %5275 = vmatprep.subr.bf16.mxu0 0
        %5276 = vmatpush1.bf16.xpose.msra.mxu0 0
        %5277 = vmatprep.subr.bf16.mxu0 0
        %5278 = vmatpush1.bf16.xpose.msra.mxu0 0
        %5279 = vmatprep.mubr.bf16.mxu0 0
        %5280 = vmatmul.mubr.bf16.gmra.mrb[0].mxu0 %v5200
        %v5281 = vpop.f32.mrb[0].mxu0
        %v5282 = vadd.f32 0.0, %v5281
        %v5283 = vpop.f32.mrb[0].mxu0
        %v5284 = vpop.f32.mrb[0].mxu0
        %v5285 = vadd.f32 0.0, %v5284
        %v5286 = vpop.f32.mrb[0].mxu0
        %5287 = vmatprep.mubr.bf16.mxu0 0
        %5288 = vmatmul.mubr.bf16.gmra.mrb[0].mxu0 %v5203
        %v5289 = vpop.f32.mrb[0].mxu0
        %v5290 = vadd.f32 0.0, %v5289
        %v5291 = vpop.f32.mrb[0].mxu0
        %v5292 = vpop.f32.mrb[0].mxu0
        %v5293 = vadd.f32 0.0, %v5292
        %v5294 = vpop.f32.mrb[0].mxu0
        %5295 = vmatprep.mubr.bf16.mxu0 0
        %5296 = vmatmul.mubr.bf16.gmra.mrb[0].mxu0 %v5206
        %v5297 = vpop.f32.mrb[0].mxu0
        %v5298 = vadd.f32 0.0, %v5297
        %v5299 = vpop.f32.mrb[0].mxu0
        %v5300 = vpop.f32.mrb[0].mxu0
        %v5301 = vadd.f32 0.0, %v5300
        %v5302 = vpop.f32.mrb[0].mxu0
        %5303 = vmatprep.mubr.bf16.mxu0 0
        %5304 = vmatmul.mubr.bf16.gmra.mrb[0].mxu0 %v5209
        %v5305 = vpop.f32.mrb[0].mxu0
        %v5306 = vadd.f32 0.0, %v5305
        %v5307 = vpop.f32.mrb[0].mxu0
        %v5308 = vpop.f32.mrb[0].mxu0
        %v5309 = vadd.f32 0.0, %v5308
        %v5310 = vpop.f32.mrb[0].mxu0
        %5311 = vmatprep.mubr.bf16.mxu0 0
        %5312 = vmatmul.mubr.bf16.gmra.mrb[0].mxu0 %v5212
        %v5313 = vpop.f32.mrb[0].mxu0
        %v5314 = vadd.f32 0.0, %v5313
        %v5315 = vpop.f32.mrb[0].mxu0
        %v5316 = vpop.f32.mrb[0].mxu0
        %v5317 = vadd.f32 0.0, %v5316
        %v5318 = vpop.f32.mrb[0].mxu0
        %5319 = vmatprep.mubr.bf16.mxu0 0
        %5320 = vmatmul.mubr.bf16.gmra.mrb[0].mxu0 %v5215
        %v5321 = vpop.f32.mrb[0].mxu0
        %v5322 = vadd.f32 0.0, %v5321
        %v5323 = vpop.f32.mrb[0].mxu0
        %v5324 = vpop.f32.mrb[0].mxu0
        %v5325 = vadd.f32 0.0, %v5324
        %v5326 = vpop.f32.mrb[0].mxu0
        %5327 = vmatprep.mubr.bf16.mxu0 0
        %5328 = vmatmul.mubr.bf16.gmra.mrb[0].mxu0 %v5218
        %v5329 = vpop.f32.mrb[0].mxu0
        %v5330 = vadd.f32 0.0, %v5329
        %v5331 = vpop.f32.mrb[0].mxu0
        %v5332 = vpop.f32.mrb[0].mxu0
        %v5333 = vadd.f32 0.0, %v5332
        %v5334 = vpop.f32.mrb[0].mxu0
        %5335 = vmatprep.mubr.bf16.mxu0 0
        %5336 = vmatmul.mubr.bf16.gmra.mrb[0].mxu0 %v5221
        %v5337 = vpop.f32.mrb[0].mxu0
        %v5338 = vadd.f32 0.0, %v5337
        %v5339 = vpop.f32.mrb[0].mxu0
        %v5340 = vpop.f32.mrb[0].mxu0
        %v5341 = vadd.f32 0.0, %v5340
        %v5342 = vpop.f32.mrb[0].mxu0
        %5343 = vdwg.mxu0
        %5344 = vmax.xlane.f32.xlu0 %v5282
        %v5345 = vpop.xlane.xlu0 %5344
        %5346 = vmax.xlane.f32.xlu0 %v5285
        %v5347 = vpop.xlane.xlu0 %5346
        %5348 = vmax.xlane.f32.xlu0 %v5290
        %v5349 = vpop.xlane.xlu0 %5348
        %5350 = vmax.xlane.f32.xlu0 %v5293
        %v5351 = vpop.xlane.xlu0 %5350
        %5352 = vmax.xlane.f32.xlu0 %v5298
        %v5353 = vpop.xlane.xlu0 %5352
        %5354 = vmax.xlane.f32.xlu0 %v5301
        %v5355 = vpop.xlane.xlu0 %5354
        %5356 = vmax.xlane.f32.xlu0 %v5306
        %v5357 = vpop.xlane.xlu0 %5356
        %5358 = vmax.xlane.f32.xlu0 %v5309
        %v5359 = vpop.xlane.xlu0 %5358
        %5360 = vmax.xlane.f32.xlu0 %v5314
        %v5361 = vpop.xlane.xlu0 %5360
        %5362 = vmax.xlane.f32.xlu0 %v5317
        %v5363 = vpop.xlane.xlu0 %5362
        %5364 = vmax.xlane.f32.xlu0 %v5322
        %v5365 = vpop.xlane.xlu0 %5364
        %5366 = vmax.xlane.f32.xlu0 %v5325
        %v5367 = vpop.xlane.xlu0 %5366
        %5368 = vmax.xlane.f32.xlu0 %v5330
        %v5369 = vpop.xlane.xlu0 %5368
        %5370 = vmax.xlane.f32.xlu0 %v5333
        %v5371 = vpop.xlane.xlu0 %5370
        %5372 = vmax.xlane.f32.xlu0 %v5338
        %v5373 = vpop.xlane.xlu0 %5372
        %5374 = vmax.xlane.f32.xlu0 %v5341
        %v5375 = vpop.xlane.xlu0 %5374
        %v5376 = vsub.f32 %v5282, %v5345
        %v5377 = vsub.f32 %v5285, %v5347
        %v5378 = vsub.f32 %v5290, %v5349
        %v5379 = vsub.f32 %v5293, %v5351
        %v5380 = vsub.f32 %v5298, %v5353
        %v5381 = vsub.f32 %v5301, %v5355
        %v5382 = vsub.f32 %v5306, %v5357
        %v5383 = vsub.f32 %v5309, %v5359
        %v5384 = vsub.f32 %v5314, %v5361
        %v5385 = vsub.f32 %v5317, %v5363
        %v5386 = vsub.f32 %v5322, %v5365
        %v5387 = vsub.f32 %v5325, %v5367
        %v5388 = vsub.f32 %v5330, %v5369
        %v5389 = vsub.f32 %v5333, %v5371
        %v5390 = vsub.f32 %v5338, %v5373
        %v5391 = vsub.f32 %v5341, %v5375
        %v5392 = vmul.f32 %v5376, 1.442695
        %v5393 = vpow.pop %v5392
        %v5394 = vmul.f32 %v5377, 1.442695
        %v5395 = vpow.pop %v5394
        %v5396 = vmul.f32 %v5378, 1.442695
        %v5397 = vpow.pop %v5396
        %v5398 = vmul.f32 %v5379, 1.442695
        %v5399 = vpow.pop %v5398
        %v5400 = vmul.f32 %v5380, 1.442695
        %v5401 = vpow.pop %v5400
        %v5402 = vmul.f32 %v5381, 1.442695
        %v5403 = vpow.pop %v5402
        %v5404 = vmul.f32 %v5382, 1.442695
        %v5405 = vpow.pop %v5404
        %v5406 = vmul.f32 %v5383, 1.442695
        %v5407 = vpow.pop %v5406
        %v5408 = vmul.f32 %v5384, 1.442695
        %v5409 = vpow.pop %v5408
        %v5410 = vmul.f32 %v5385, 1.442695
        %v5411 = vpow.pop %v5410
        %v5412 = vmul.f32 %v5386, 1.442695
        %v5413 = vpow.pop %v5412
        %v5414 = vmul.f32 %v5387, 1.442695
        %v5415 = vpow.pop %v5414
        %v5416 = vmul.f32 %v5388, 1.442695
        %v5417 = vpow.pop %v5416
        %v5418 = vmul.f32 %v5389, 1.442695
        %v5419 = vpow.pop %v5418
        %v5420 = vmul.f32 %v5390, 1.442695
        %v5421 = vpow.pop %v5420
        %v5422 = vmul.f32 %v5391, 1.442695
        %v5423 = vpow.pop %v5422
        %5424 = vadd.xlane.f32.xlu0 %v5393
        %v5425 = vpop.xlane.xlu0 %5424
        %5426 = vadd.xlane.f32.xlu0 %v5395
        %v5427 = vpop.xlane.xlu0 %5426
        %5428 = vadd.xlane.f32.xlu0 %v5397
        %v5429 = vpop.xlane.xlu0 %5428
        %5430 = vadd.xlane.f32.xlu0 %v5399
        %v5431 = vpop.xlane.xlu0 %5430
        %5432 = vadd.xlane.f32.xlu0 %v5401
        %v5433 = vpop.xlane.xlu0 %5432
        %5434 = vadd.xlane.f32.xlu0 %v5403
        %v5435 = vpop.xlane.xlu0 %5434
        %5436 = vadd.xlane.f32.xlu0 %v5405
        %v5437 = vpop.xlane.xlu0 %5436
        %5438 = vadd.xlane.f32.xlu0 %v5407
        %v5439 = vpop.xlane.xlu0 %5438
        %5440 = vadd.xlane.f32.xlu0 %v5409
        %v5441 = vpop.xlane.xlu0 %5440
        %5442 = vadd.xlane.f32.xlu0 %v5411
        %v5443 = vpop.xlane.xlu0 %5442
        %5444 = vadd.xlane.f32.xlu0 %v5413
        %v5445 = vpop.xlane.xlu0 %5444
        %5446 = vadd.xlane.f32.xlu0 %v5415
        %v5447 = vpop.xlane.xlu0 %5446
        %5448 = vadd.xlane.f32.xlu0 %v5417
        %v5449 = vpop.xlane.xlu0 %5448
        %5450 = vadd.xlane.f32.xlu0 %v5419
        %v5451 = vpop.xlane.xlu0 %5450
        %5452 = vadd.xlane.f32.xlu0 %v5421
        %v5453 = vpop.xlane.xlu0 %5452
        %5454 = vadd.xlane.f32.xlu0 %v5423
        %v5455 = vpop.xlane.xlu0 %5454
        %v5456 = vpack.c.bf16 %v5395, %v5393
        %v5457 = vpack.c.bf16 %v5399, %v5397
        %v5458 = vpack.c.bf16 %v5403, %v5401
        %v5459 = vpack.c.bf16 %v5407, %v5405
        %v5460 = vpack.c.bf16 %v5411, %v5409
        %v5461 = vpack.c.bf16 %v5415, %v5413
        %v5462 = vpack.c.bf16 %v5419, %v5417
        %v5463 = vpack.c.bf16 %v5423, %v5421
        %5472 = vrot.lane.b32.xlu0 %v5143, 64
        %v5473 = vpop.permute.xlu0 %5472
        %5474 = vrot.lane.b32.xlu0 %v5144, 64
        %v5475 = vpop.permute.xlu0 %5474
        %5476 = vrot.lane.b32.xlu0 %v5145, 64
        %v5477 = vpop.permute.xlu0 %5476
        %5478 = vrot.lane.b32.xlu0 %v5146, 64
        %v5479 = vpop.permute.xlu0 %5478
        %5480 = vrot.lane.b32.xlu0 %v5147, 64
        %v5481 = vpop.permute.xlu0 %5480
        %5482 = vrot.lane.b32.xlu0 %v5148, 64
        %v5483 = vpop.permute.xlu0 %5482
        %5484 = vrot.lane.b32.xlu0 %v5149, 64
        %v5485 = vpop.permute.xlu0 %5484
        %5486 = vrot.lane.b32.xlu0 %v5150, 64
        %v5487 = vpop.permute.xlu0 %5486
        %5496 = vmatprep.subr.bf16.mxu0 0
        %5497 = vmatpush1.bf16.msra.mxu0 %v5473
        %5498 = vmatprep.subr.bf16.mxu0 0
        %5499 = vmatpush1.bf16.msra.mxu0 %v5475
        %5500 = vmatprep.subr.bf16.mxu0 0
        %5501 = vmatpush1.bf16.msra.mxu0 %v5477
        %5502 = vmatprep.subr.bf16.mxu0 0
        %5503 = vmatpush1.bf16.msra.mxu0 %v5479
        %5504 = vmatprep.subr.bf16.mxu0 0
        %5505 = vmatpush1.bf16.msra.mxu0 %v5481
        %5506 = vmatprep.subr.bf16.mxu0 0
        %5507 = vmatpush1.bf16.msra.mxu0 %v5483
        %5508 = vmatprep.subr.bf16.mxu0 0
        %5509 = vmatpush1.bf16.msra.mxu0 %v5485
        %5510 = vmatprep.subr.bf16.mxu0 0
        %5511 = vmatpush1.bf16.msra.mxu0 %v5487
        %5512 = vmatprep.subr.bf16.mxu0 0
        %5513 = vmatpush1.bf16.msra.mxu0 0
        %5514 = vmatprep.subr.bf16.mxu0 0
        %5515 = vmatpush1.bf16.msra.mxu0 0
        %5516 = vmatprep.subr.bf16.mxu0 0
        %5517 = vmatpush1.bf16.msra.mxu0 0
        %5518 = vmatprep.subr.bf16.mxu0 0
        %5519 = vmatpush1.bf16.msra.mxu0 0
        %5520 = vmatprep.subr.bf16.mxu0 0
        %5521 = vmatpush1.bf16.msra.mxu0 0
        %5522 = vmatprep.subr.bf16.mxu0 0
        %5523 = vmatpush1.bf16.msra.mxu0 0
        %5524 = vmatprep.subr.bf16.mxu0 0
        %5525 = vmatpush1.bf16.msra.mxu0 0
        %5526 = vmatprep.subr.bf16.mxu0 0
        %5527 = vmatpush1.bf16.msra.mxu0 0
        %5528 = vmatprep.mubr.bf16.mxu0 0
        %5529 = vmatmul.mubr.bf16.gmra.mrb[0].mxu0 %v5456
        %v5530 = vpop.f32.mrb[0].mxu0
        %v5531 = vadd.f32 0.0, %v5530
        %v5532 = vpop.f32.mrb[0].mxu0
        %v5533 = vpop.f32.mrb[0].mxu0
        %v5534 = vadd.f32 0.0, %v5533
        %v5535 = vpop.f32.mrb[0].mxu0
        %5536 = vmatprep.mubr.bf16.mxu0 0
        %5537 = vmatmul.mubr.bf16.gmra.mrb[0].mxu0 %v5457
        %v5538 = vpop.f32.mrb[0].mxu0
        %v5539 = vadd.f32 0.0, %v5538
        %v5540 = vpop.f32.mrb[0].mxu0
        %v5541 = vpop.f32.mrb[0].mxu0
        %v5542 = vadd.f32 0.0, %v5541
        %v5543 = vpop.f32.mrb[0].mxu0
        %5544 = vmatprep.mubr.bf16.mxu0 0
        %5545 = vmatmul.mubr.bf16.gmra.mrb[0].mxu0 %v5458
        %v5546 = vpop.f32.mrb[0].mxu0
        %v5547 = vadd.f32 0.0, %v5546
        %v5548 = vpop.f32.mrb[0].mxu0
        %v5549 = vpop.f32.mrb[0].mxu0
        %v5550 = vadd.f32 0.0, %v5549
        %v5551 = vpop.f32.mrb[0].mxu0
        %5552 = vmatprep.mubr.bf16.mxu0 0
        %5553 = vmatmul.mubr.bf16.gmra.mrb[0].mxu0 %v5459
        %v5554 = vpop.f32.mrb[0].mxu0
        %v5555 = vadd.f32 0.0, %v5554
        %v5556 = vpop.f32.mrb[0].mxu0
        %v5557 = vpop.f32.mrb[0].mxu0
        %v5558 = vadd.f32 0.0, %v5557
        %v5559 = vpop.f32.mrb[0].mxu0
        %5560 = vmatprep.mubr.bf16.mxu0 0
        %5561 = vmatmul.mubr.bf16.gmra.mrb[0].mxu0 %v5460
        %v5562 = vpop.f32.mrb[0].mxu0
        %v5563 = vadd.f32 0.0, %v5562
        %v5564 = vpop.f32.mrb[0].mxu0
        %v5565 = vpop.f32.mrb[0].mxu0
        %v5566 = vadd.f32 0.0, %v5565
        %v5567 = vpop.f32.mrb[0].mxu0
        %5568 = vmatprep.mubr.bf16.mxu0 0
        %5569 = vmatmul.mubr.bf16.gmra.mrb[0].mxu0 %v5461
        %v5570 = vpop.f32.mrb[0].mxu0
        %v5571 = vadd.f32 0.0, %v5570
        %v5572 = vpop.f32.mrb[0].mxu0
        %v5573 = vpop.f32.mrb[0].mxu0
        %v5574 = vadd.f32 0.0, %v5573
        %v5575 = vpop.f32.mrb[0].mxu0
        %5576 = vmatprep.mubr.bf16.mxu0 0
        %5577 = vmatmul.mubr.bf16.gmra.mrb[0].mxu0 %v5462
        %v5578 = vpop.f32.mrb[0].mxu0
        %v5579 = vadd.f32 0.0, %v5578
        %v5580 = vpop.f32.mrb[0].mxu0
        %v5581 = vpop.f32.mrb[0].mxu0
        %v5582 = vadd.f32 0.0, %v5581
        %v5583 = vpop.f32.mrb[0].mxu0
        %5584 = vmatprep.mubr.bf16.mxu0 0
        %5585 = vmatmul.mubr.bf16.gmra.mrb[0].mxu0 %v5463
        %v5586 = vpop.f32.mrb[0].mxu0
        %v5587 = vadd.f32 0.0, %v5586
        %v5588 = vpop.f32.mrb[0].mxu0
        %v5589 = vpop.f32.mrb[0].mxu0
        %v5590 = vadd.f32 0.0, %v5589
        %v5591 = vpop.f32.mrb[0].mxu0
        %5592 = vdwg.mxu0
        %v5593 = vrcp.pop %v5425
        %v5594 = vrcp.pop %v5427
        %v5595 = vrcp.pop %v5429
        %v5596 = vrcp.pop %v5431
        %v5597 = vrcp.pop %v5433
        %v5598 = vrcp.pop %v5435
        %v5599 = vrcp.pop %v5437
        %v5600 = vrcp.pop %v5439
        %v5601 = vrcp.pop %v5441
        %v5602 = vrcp.pop %v5443
        %v5603 = vrcp.pop %v5445
        %v5604 = vrcp.pop %v5447
        %v5605 = vrcp.pop %v5449
        %v5606 = vrcp.pop %v5451
        %v5607 = vrcp.pop %v5453
        %v5608 = vrcp.pop %v5455
        %v5609 = vmul.f32 %v5531, %v5593
        %v5610 = vmul.f32 %v5534, %v5594
        %v5611 = vmul.f32 %v5539, %v5595
        %v5612 = vmul.f32 %v5542, %v5596
        %v5613 = vmul.f32 %v5547, %v5597
        %v5614 = vmul.f32 %v5550, %v5598
        %v5615 = vmul.f32 %v5555, %v5599
        %v5616 = vmul.f32 %v5558, %v5600
        %v5617 = vmul.f32 %v5563, %v5601
        %v5618 = vmul.f32 %v5566, %v5602
        %v5619 = vmul.f32 %v5571, %v5603
        %v5620 = vmul.f32 %v5574, %v5604
        %v5621 = vmul.f32 %v5579, %v5605
        %v5622 = vmul.f32 %v5582, %v5606
        %v5623 = vmul.f32 %v5587, %v5607
        %v5624 = vmul.f32 %v5590, %v5608
        %v5625 = vpack.c.bf16 %v5610, %v5609
        %v5626 = vpack.c.bf16 %v5612, %v5611
        %v5627 = vpack.c.bf16 %v5614, %v5613
        %v5628 = vpack.c.bf16 %v5616, %v5615
        %v5629 = vpack.c.bf16 %v5618, %v5617
        %v5630 = vpack.c.bf16 %v5620, %v5619
        %v5631 = vpack.c.bf16 %v5622, %v5621
        %v5632 = vpack.c.bf16 %v5624, %v5623
        %5641 = vrot.lane.b32.xlu0 %v5625, 64
        %v5642 = vpop.permute.xlu0 %5641
        %5643 = vrot.lane.b32.xlu0 %v5626, 64
        %v5644 = vpop.permute.xlu0 %5643
        %5645 = vrot.lane.b32.xlu0 %v5627, 64
        %v5646 = vpop.permute.xlu0 %5645
        %5647 = vrot.lane.b32.xlu0 %v5628, 64
        %v5648 = vpop.permute.xlu0 %5647
        %5649 = vrot.lane.b32.xlu0 %v5629, 64
        %v5650 = vpop.permute.xlu0 %5649
        %5651 = vrot.lane.b32.xlu0 %v5630, 64
        %v5652 = vpop.permute.xlu0 %5651
        %5653 = vrot.lane.b32.xlu0 %v5631, 64
        %v5654 = vpop.permute.xlu0 %5653
        %5655 = vrot.lane.b32.xlu0 %v5632, 64
        %v5656 = vpop.permute.xlu0 %5655
        %5665 = vst.msk [vmem:[#allocation3 + $0x88] sm:$0xff] %vm2724, %v5642
        %5666 = vst.msk [vmem:[#allocation3 + $0x98] sm:$0xff] %vm2724, %v5644
        %5667 = vst.msk [vmem:[#allocation3 + $0xa8] sm:$0xff] %vm2724, %v5646
        %5668 = vst.msk [vmem:[#allocation3 + $0xb8] sm:$0xff] %vm2724, %v5648
        %5669 = vst.msk [vmem:[#allocation3 + $0xc8] sm:$0xff] %vm2724, %v5650
        %5670 = vst.msk [vmem:[#allocation3 + $0xd8] sm:$0xff] %vm2724, %v5652
        %5671 = vst.msk [vmem:[#allocation3 + $0xe8] sm:$0xff] %vm2724, %v5654
        %5672 = vst.msk [vmem:[#allocation3 + $0xf8] sm:$0xff] %vm2724, %v5656
        %v5673 = vld [vmem:[#allocation3] sm:$0xff]
        %v5674 = vld [vmem:[#allocation3 + $0x8] sm:$0xff]
        %v5675 = vld [vmem:[#allocation3 + $0x10] sm:$0xff]
        %v5676 = vld [vmem:[#allocation3 + $0x18] sm:$0xff]
        %v5677 = vld [vmem:[#allocation3 + $0x20] sm:$0xff]
        %v5678 = vld [vmem:[#allocation3 + $0x28] sm:$0xff]
        %v5679 = vld [vmem:[#allocation3 + $0x30] sm:$0xff]
        %v5680 = vld [vmem:[#allocation3 + $0x38] sm:$0xff]
        %v5681 = vld [vmem:[#allocation3 + $0x40] sm:$0xff]
        %v5682 = vld [vmem:[#allocation3 + $0x48] sm:$0xff]
        %v5683 = vld [vmem:[#allocation3 + $0x50] sm:$0xff]
        %v5684 = vld [vmem:[#allocation3 + $0x58] sm:$0xff]
        %v5685 = vld [vmem:[#allocation3 + $0x60] sm:$0xff]
        %v5686 = vld [vmem:[#allocation3 + $0x68] sm:$0xff]
        %v5687 = vld [vmem:[#allocation3 + $0x70] sm:$0xff]
        %v5688 = vld [vmem:[#allocation3 + $0x78] sm:$0xff]
        %v5689 = vld [vmem:[#allocation3 + $0x80] sm:$0xff]
        %v5690 = vld [vmem:[#allocation3 + $0x88] sm:$0xff]
        %v5691 = vld [vmem:[#allocation3 + $0x90] sm:$0xff]
        %v5692 = vld [vmem:[#allocation3 + $0x98] sm:$0xff]
        %v5693 = vld [vmem:[#allocation3 + $0xa0] sm:$0xff]
        %v5694 = vld [vmem:[#allocation3 + $0xa8] sm:$0xff]
        %v5695 = vld [vmem:[#allocation3 + $0xb0] sm:$0xff]
        %v5696 = vld [vmem:[#allocation3 + $0xb8] sm:$0xff]
        %v5697 = vld [vmem:[#allocation3 + $0xc0] sm:$0xff]
        %v5698 = vld [vmem:[#allocation3 + $0xc8] sm:$0xff]
        %v5699 = vld [vmem:[#allocation3 + $0xd0] sm:$0xff]
        %v5700 = vld [vmem:[#allocation3 + $0xd8] sm:$0xff]
        %v5701 = vld [vmem:[#allocation3 + $0xe0] sm:$0xff]
        %v5702 = vld [vmem:[#allocation3 + $0xe8] sm:$0xff]
        %v5703 = vld [vmem:[#allocation3 + $0xf0] sm:$0xff]
        %v5704 = vld [vmem:[#allocation3 + $0xf8] sm:$0xff]
        %v5705 = vld [vmem:[#allocation9] sm:$0xff]
        %v5706 = vld [vmem:[#allocation9 + $0x8] sm:$0xff]
        %v5707 = vld [vmem:[#allocation9 + $0x10] sm:$0xff]
        %v5708 = vld [vmem:[#allocation9 + $0x18] sm:$0xff]
        %v5709 = vld [vmem:[#allocation9 + $0x20] sm:$0xff]
        %v5710 = vld [vmem:[#allocation9 + $0x28] sm:$0xff]
        %v5711 = vld [vmem:[#allocation9 + $0x30] sm:$0xff]
        %v5712 = vld [vmem:[#allocation9 + $0x38] sm:$0xff]
        %v5713 = vld [vmem:[#allocation9 + $0x40] sm:$0xff]
        %v5714 = vld [vmem:[#allocation9 + $0x48] sm:$0xff]
        %v5715 = vld [vmem:[#allocation9 + $0x50] sm:$0xff]
        %v5716 = vld [vmem:[#allocation9 + $0x58] sm:$0xff]
        %v5717 = vld [vmem:[#allocation9 + $0x60] sm:$0xff]
        %v5718 = vld [vmem:[#allocation9 + $0x68] sm:$0xff]
        %v5719 = vld [vmem:[#allocation9 + $0x70] sm:$0xff]
        %v5720 = vld [vmem:[#allocation9 + $0x78] sm:$0xff]
        %v5721 = vld [vmem:[#allocation9 + $0x80] sm:$0xff]
        %v5722 = vld [vmem:[#allocation9 + $0x88] sm:$0xff]
        %v5723 = vld [vmem:[#allocation9 + $0x90] sm:$0xff]
        %v5724 = vld [vmem:[#allocation9 + $0x98] sm:$0xff]
        %v5725 = vld [vmem:[#allocation9 + $0xa0] sm:$0xff]
        %v5726 = vld [vmem:[#allocation9 + $0xa8] sm:$0xff]
        %v5727 = vld [vmem:[#allocation9 + $0xb0] sm:$0xff]
        %v5728 = vld [vmem:[#allocation9 + $0xb8] sm:$0xff]
        %v5729 = vld [vmem:[#allocation9 + $0xc0] sm:$0xff]
        %v5730 = vld [vmem:[#allocation9 + $0xc8] sm:$0xff]
        %v5731 = vld [vmem:[#allocation9 + $0xd0] sm:$0xff]
        %v5732 = vld [vmem:[#allocation9 + $0xd8] sm:$0xff]
        %v5733 = vld [vmem:[#allocation9 + $0xe0] sm:$0xff]
        %v5734 = vld [vmem:[#allocation9 + $0xe8] sm:$0xff]
        %v5735 = vld [vmem:[#allocation9 + $0xf0] sm:$0xff]
        %v5736 = vld [vmem:[#allocation9 + $0xf8] sm:$0xff]
        %v5737 = vld [vmem:[%s4] sm:$0x3]
        %v5739 = vlaneseq
        %v5740 = vshrl.u32 %v5739, 7
        %v5741 = vsub.s32 0, %v5740
        %v5742 = vrot.slane %v5737, %v5741
        %v5743 = vlaneseq
        %v5744 = vshrl.u32 %v5743, 7
        %v5745 = vsub.s32 1, %v5744
        %v5746 = vrot.slane %v5737, %v5745
        %v5781 = vunpack.c.l.b16 %v5705
        %v5782 = vunpack.c.h.b16 %v5705
        %v5783 = vunpack.c.l.b16 %v5706
        %v5784 = vunpack.c.h.b16 %v5706
        %v5785 = vunpack.c.l.b16 %v5707
        %v5786 = vunpack.c.h.b16 %v5707
        %v5787 = vunpack.c.l.b16 %v5708
        %v5788 = vunpack.c.h.b16 %v5708
        %v5789 = vunpack.c.l.b16 %v5709
        %v5790 = vunpack.c.h.b16 %v5709
        %v5791 = vunpack.c.l.b16 %v5710
        %v5792 = vunpack.c.h.b16 %v5710
        %v5793 = vunpack.c.l.b16 %v5711
        %v5794 = vunpack.c.h.b16 %v5711
        %v5795 = vunpack.c.l.b16 %v5712
        %v5796 = vunpack.c.h.b16 %v5712
        %v5797 = vunpack.c.l.b16 %v5713
        %v5798 = vunpack.c.h.b16 %v5713
        %v5799 = vunpack.c.l.b16 %v5714
        %v5800 = vunpack.c.h.b16 %v5714
        %v5801 = vunpack.c.l.b16 %v5715
        %v5802 = vunpack.c.h.b16 %v5715
        %v5803 = vunpack.c.l.b16 %v5716
        %v5804 = vunpack.c.h.b16 %v5716
        %v5805 = vunpack.c.l.b16 %v5717
        %v5806 = vunpack.c.h.b16 %v5717
        %v5807 = vunpack.c.l.b16 %v5718
        %v5808 = vunpack.c.h.b16 %v5718
        %v5809 = vunpack.c.l.b16 %v5719
        %v5810 = vunpack.c.h.b16 %v5719
        %v5811 = vunpack.c.l.b16 %v5720
        %v5812 = vunpack.c.h.b16 %v5720
        %v5813 = vunpack.c.l.b16 %v5721
        %v5814 = vunpack.c.h.b16 %v5721
        %v5815 = vunpack.c.l.b16 %v5722
        %v5816 = vunpack.c.h.b16 %v5722
        %v5817 = vunpack.c.l.b16 %v5723
        %v5818 = vunpack.c.h.b16 %v5723
        %v5819 = vunpack.c.l.b16 %v5724
        %v5820 = vunpack.c.h.b16 %v5724
        %v5821 = vunpack.c.l.b16 %v5725
        %v5822 = vunpack.c.h.b16 %v5725
        %v5823 = vunpack.c.l.b16 %v5726
        %v5824 = vunpack.c.h.b16 %v5726
        %v5825 = vunpack.c.l.b16 %v5727
        %v5826 = vunpack.c.h.b16 %v5727
        %v5827 = vunpack.c.l.b16 %v5728
        %v5828 = vunpack.c.h.b16 %v5728
        %v5829 = vunpack.c.l.b16 %v5729
        %v5830 = vunpack.c.h.b16 %v5729
        %v5831 = vunpack.c.l.b16 %v5730
        %v5832 = vunpack.c.h.b16 %v5730
        %v5833 = vunpack.c.l.b16 %v5731
        %v5834 = vunpack.c.h.b16 %v5731
        %v5835 = vunpack.c.l.b16 %v5732
        %v5836 = vunpack.c.h.b16 %v5732
        %v5837 = vunpack.c.l.b16 %v5733
        %v5838 = vunpack.c.h.b16 %v5733
        %v5839 = vunpack.c.l.b16 %v5734
        %v5840 = vunpack.c.h.b16 %v5734
        %v5841 = vunpack.c.l.b16 %v5735
        %v5842 = vunpack.c.h.b16 %v5735
        %v5843 = vunpack.c.l.b16 %v5736
        %v5844 = vunpack.c.h.b16 %v5736
        %v5845 = vpack.c.b16 %v5783, %v5781
        %v5846 = vpack.c.b16 %v5784, %v5782
        %v5847 = vpack.c.b16 %v5787, %v5785
        %v5848 = vpack.c.b16 %v5788, %v5786
        %v5849 = vpack.c.b16 %v5791, %v5789
        %v5850 = vpack.c.b16 %v5792, %v5790
        %v5851 = vpack.c.b16 %v5795, %v5793
        %v5852 = vpack.c.b16 %v5796, %v5794
        %v5853 = vpack.c.b16 %v5799, %v5797
        %v5854 = vpack.c.b16 %v5800, %v5798
        %v5855 = vpack.c.b16 %v5803, %v5801
        %v5856 = vpack.c.b16 %v5804, %v5802
        %v5857 = vpack.c.b16 %v5807, %v5805
        %v5858 = vpack.c.b16 %v5808, %v5806
        %v5859 = vpack.c.b16 %v5811, %v5809
        %v5860 = vpack.c.b16 %v5812, %v5810
        %v5861 = vpack.c.b16 %v5815, %v5813
        %v5862 = vpack.c.b16 %v5816, %v5814
        %v5863 = vpack.c.b16 %v5819, %v5817
        %v5864 = vpack.c.b16 %v5820, %v5818
        %v5865 = vpack.c.b16 %v5823, %v5821
        %v5866 = vpack.c.b16 %v5824, %v5822
        %v5867 = vpack.c.b16 %v5827, %v5825
        %v5868 = vpack.c.b16 %v5828, %v5826
        %v5869 = vpack.c.b16 %v5831, %v5829
        %v5870 = vpack.c.b16 %v5832, %v5830
        %v5871 = vpack.c.b16 %v5835, %v5833
        %v5872 = vpack.c.b16 %v5836, %v5834
        %v5873 = vpack.c.b16 %v5839, %v5837
        %v5874 = vpack.c.b16 %v5840, %v5838
        %v5875 = vpack.c.b16 %v5843, %v5841
        %v5876 = vpack.c.b16 %v5844, %v5842
        %5909 = vmatprep.subr.bf16.mxu0 %v5846
        %5910 = vmatpush1.bf16.msra.mxu0 %v5845
        %5911 = vmatprep.subr.bf16.mxu0 %v5848
        %5912 = vmatpush1.bf16.msra.mxu0 %v5847
        %5913 = vmatprep.subr.bf16.mxu0 %v5850
        %5914 = vmatpush1.bf16.msra.mxu0 %v5849
        %5915 = vmatprep.subr.bf16.mxu0 %v5852
        %5916 = vmatpush1.bf16.msra.mxu0 %v5851
        %5917 = vmatprep.subr.bf16.mxu0 %v5854
        %5918 = vmatpush1.bf16.msra.mxu0 %v5853
        %5919 = vmatprep.subr.bf16.mxu0 %v5856
        %5920 = vmatpush1.bf16.msra.mxu0 %v5855
        %5921 = vmatprep.subr.bf16.mxu0 %v5858
        %5922 = vmatpush1.bf16.msra.mxu0 %v5857
        %5923 = vmatprep.subr.bf16.mxu0 %v5860
        %5924 = vmatpush1.bf16.msra.mxu0 %v5859
        %5925 = vmatprep.subr.bf16.mxu0 %v5862
        %5926 = vmatpush1.bf16.msra.mxu0 %v5861
        %5927 = vmatprep.subr.bf16.mxu0 %v5864
        %5928 = vmatpush1.bf16.msra.mxu0 %v5863
        %5929 = vmatprep.subr.bf16.mxu0 %v5866
        %5930 = vmatpush1.bf16.msra.mxu0 %v5865
        %5931 = vmatprep.subr.bf16.mxu0 %v5868
        %5932 = vmatpush1.bf16.msra.mxu0 %v5867
        %5933 = vmatprep.subr.bf16.mxu0 %v5870
        %5934 = vmatpush1.bf16.msra.mxu0 %v5869
        %5935 = vmatprep.subr.bf16.mxu0 %v5872
        %5936 = vmatpush1.bf16.msra.mxu0 %v5871
        %5937 = vmatprep.subr.bf16.mxu0 %v5874
        %5938 = vmatpush1.bf16.msra.mxu0 %v5873
        %5939 = vmatprep.subr.bf16.mxu0 %v5876
        %5940 = vmatpush1.bf16.msra.mxu0 %v5875
        %5941 = vmatprep.mubr.bf16.mxu0 %v5674
        %5942 = vmatmul.mubr.bf16.gmra.mrb[0].mxu0 %v5673
        %v5943 = vpop.f32.mrb[0].mxu0
        %v5944 = vadd.f32 %v5742, %v5943
        %v5945 = vpop.f32.mrb[0].mxu0
        %v5946 = vadd.f32 %v5746, %v5945
        %v5947 = vpop.f32.mrb[0].mxu0
        %v5948 = vadd.f32 %v5742, %v5947
        %v5949 = vpop.f32.mrb[0].mxu0
        %v5950 = vadd.f32 %v5746, %v5949
        %5951 = vmatprep.mubr.bf16.mxu0 %v5676
        %5952 = vmatmul.mubr.bf16.gmra.mrb[0].mxu0 %v5675
        %v5953 = vpop.f32.mrb[0].mxu0
        %v5954 = vadd.f32 %v5742, %v5953
        %v5955 = vpop.f32.mrb[0].mxu0
        %v5956 = vadd.f32 %v5746, %v5955
        %v5957 = vpop.f32.mrb[0].mxu0
        %v5958 = vadd.f32 %v5742, %v5957
        %v5959 = vpop.f32.mrb[0].mxu0
        %v5960 = vadd.f32 %v5746, %v5959
        %5961 = vmatprep.mubr.bf16.mxu0 %v5678
        %5962 = vmatmul.mubr.bf16.gmra.mrb[0].mxu0 %v5677
        %v5963 = vpop.f32.mrb[0].mxu0
        %v5964 = vadd.f32 %v5742, %v5963
        %v5965 = vpop.f32.mrb[0].mxu0
        %v5966 = vadd.f32 %v5746, %v5965
        %v5967 = vpop.f32.mrb[0].mxu0
        %v5968 = vadd.f32 %v5742, %v5967
        %v5969 = vpop.f32.mrb[0].mxu0
        %v5970 = vadd.f32 %v5746, %v5969
        %5971 = vmatprep.mubr.bf16.mxu0 %v5680
        %5972 = vmatmul.mubr.bf16.gmra.mrb[0].mxu0 %v5679
        %v5973 = vpop.f32.mrb[0].mxu0
        %v5974 = vadd.f32 %v5742, %v5973
        %v5975 = vpop.f32.mrb[0].mxu0
        %v5976 = vadd.f32 %v5746, %v5975
        %v5977 = vpop.f32.mrb[0].mxu0
        %v5978 = vadd.f32 %v5742, %v5977
        %v5979 = vpop.f32.mrb[0].mxu0
        %v5980 = vadd.f32 %v5746, %v5979
        %5981 = vmatprep.mubr.bf16.mxu0 %v5682
        %5982 = vmatmul.mubr.bf16.gmra.mrb[0].mxu0 %v5681
        %v5983 = vpop.f32.mrb[0].mxu0
        %v5984 = vadd.f32 %v5742, %v5983
        %v5985 = vpop.f32.mrb[0].mxu0
        %v5986 = vadd.f32 %v5746, %v5985
        %v5987 = vpop.f32.mrb[0].mxu0
        %v5988 = vadd.f32 %v5742, %v5987
        %v5989 = vpop.f32.mrb[0].mxu0
        %v5990 = vadd.f32 %v5746, %v5989
        %5991 = vmatprep.mubr.bf16.mxu0 %v5684
        %5992 = vmatmul.mubr.bf16.gmra.mrb[0].mxu0 %v5683
        %v5993 = vpop.f32.mrb[0].mxu0
        %v5994 = vadd.f32 %v5742, %v5993
        %v5995 = vpop.f32.mrb[0].mxu0
        %v5996 = vadd.f32 %v5746, %v5995
        %v5997 = vpop.f32.mrb[0].mxu0
        %v5998 = vadd.f32 %v5742, %v5997
        %v5999 = vpop.f32.mrb[0].mxu0
        %v6000 = vadd.f32 %v5746, %v5999
        %6001 = vmatprep.mubr.bf16.mxu0 %v5686
        %6002 = vmatmul.mubr.bf16.gmra.mrb[0].mxu0 %v5685
        %v6003 = vpop.f32.mrb[0].mxu0
        %v6004 = vadd.f32 %v5742, %v6003
        %v6005 = vpop.f32.mrb[0].mxu0
        %v6006 = vadd.f32 %v5746, %v6005
        %v6007 = vpop.f32.mrb[0].mxu0
        %v6008 = vadd.f32 %v5742, %v6007
        %v6009 = vpop.f32.mrb[0].mxu0
        %v6010 = vadd.f32 %v5746, %v6009
        %6011 = vmatprep.mubr.bf16.mxu0 %v5688
        %6012 = vmatmul.mubr.bf16.gmra.mrb[0].mxu0 %v5687
        %v6013 = vpop.f32.mrb[0].mxu0
        %v6014 = vadd.f32 %v5742, %v6013
        %v6015 = vpop.f32.mrb[0].mxu0
        %v6016 = vadd.f32 %v5746, %v6015
        %v6017 = vpop.f32.mrb[0].mxu0
        %v6018 = vadd.f32 %v5742, %v6017
        %v6019 = vpop.f32.mrb[0].mxu0
        %v6020 = vadd.f32 %v5746, %v6019
        %6021 = vmatprep.mubr.bf16.mxu0 %v5690
        %6022 = vmatmul.mubr.bf16.gmra.mrb[0].mxu0 %v5689
        %v6023 = vpop.f32.mrb[0].mxu0
        %v6024 = vadd.f32 %v5742, %v6023
        %v6025 = vpop.f32.mrb[0].mxu0
        %v6026 = vadd.f32 %v5746, %v6025
        %v6027 = vpop.f32.mrb[0].mxu0
        %v6028 = vadd.f32 %v5742, %v6027
        %v6029 = vpop.f32.mrb[0].mxu0
        %v6030 = vadd.f32 %v5746, %v6029
        %6031 = vmatprep.mubr.bf16.mxu0 %v5692
        %6032 = vmatmul.mubr.bf16.gmra.mrb[0].mxu0 %v5691
        %v6033 = vpop.f32.mrb[0].mxu0
        %v6034 = vadd.f32 %v5742, %v6033
        %v6035 = vpop.f32.mrb[0].mxu0
        %v6036 = vadd.f32 %v5746, %v6035
        %v6037 = vpop.f32.mrb[0].mxu0
        %v6038 = vadd.f32 %v5742, %v6037
        %v6039 = vpop.f32.mrb[0].mxu0
        %v6040 = vadd.f32 %v5746, %v6039
        %6041 = vmatprep.mubr.bf16.mxu0 %v5694
        %6042 = vmatmul.mubr.bf16.gmra.mrb[0].mxu0 %v5693
        %v6043 = vpop.f32.mrb[0].mxu0
        %v6044 = vadd.f32 %v5742, %v6043
        %v6045 = vpop.f32.mrb[0].mxu0
        %v6046 = vadd.f32 %v5746, %v6045
        %v6047 = vpop.f32.mrb[0].mxu0
        %v6048 = vadd.f32 %v5742, %v6047
        %v6049 = vpop.f32.mrb[0].mxu0
        %v6050 = vadd.f32 %v5746, %v6049
        %6051 = vmatprep.mubr.bf16.mxu0 %v5696
        %6052 = vmatmul.mubr.bf16.gmra.mrb[0].mxu0 %v5695
        %v6053 = vpop.f32.mrb[0].mxu0
        %v6054 = vadd.f32 %v5742, %v6053
        %v6055 = vpop.f32.mrb[0].mxu0
        %v6056 = vadd.f32 %v5746, %v6055
        %v6057 = vpop.f32.mrb[0].mxu0
        %v6058 = vadd.f32 %v5742, %v6057
        %v6059 = vpop.f32.mrb[0].mxu0
        %v6060 = vadd.f32 %v5746, %v6059
        %6061 = vmatprep.mubr.bf16.mxu0 %v5698
        %6062 = vmatmul.mubr.bf16.gmra.mrb[0].mxu0 %v5697
        %v6063 = vpop.f32.mrb[0].mxu0
        %v6064 = vadd.f32 %v5742, %v6063
        %v6065 = vpop.f32.mrb[0].mxu0
        %v6066 = vadd.f32 %v5746, %v6065
        %v6067 = vpop.f32.mrb[0].mxu0
        %v6068 = vadd.f32 %v5742, %v6067
        %v6069 = vpop.f32.mrb[0].mxu0
        %v6070 = vadd.f32 %v5746, %v6069
        %6071 = vmatprep.mubr.bf16.mxu0 %v5700
        %6072 = vmatmul.mubr.bf16.gmra.mrb[0].mxu0 %v5699
        %v6073 = vpop.f32.mrb[0].mxu0
        %v6074 = vadd.f32 %v5742, %v6073
        %v6075 = vpop.f32.mrb[0].mxu0
        %v6076 = vadd.f32 %v5746, %v6075
        %v6077 = vpop.f32.mrb[0].mxu0
        %v6078 = vadd.f32 %v5742, %v6077
        %v6079 = vpop.f32.mrb[0].mxu0
        %v6080 = vadd.f32 %v5746, %v6079
        %6081 = vmatprep.mubr.bf16.mxu0 %v5702
        %6082 = vmatmul.mubr.bf16.gmra.mrb[0].mxu0 %v5701
        %v6083 = vpop.f32.mrb[0].mxu0
        %v6084 = vadd.f32 %v5742, %v6083
        %v6085 = vpop.f32.mrb[0].mxu0
        %v6086 = vadd.f32 %v5746, %v6085
        %v6087 = vpop.f32.mrb[0].mxu0
        %v6088 = vadd.f32 %v5742, %v6087
        %v6089 = vpop.f32.mrb[0].mxu0
        %v6090 = vadd.f32 %v5746, %v6089
        %6091 = vmatprep.mubr.bf16.mxu0 %v5704
        %6092 = vmatmul.mubr.bf16.gmra.mrb[0].mxu0 %v5703
        %v6093 = vpop.f32.mrb[0].mxu0
        %v6094 = vadd.f32 %v5742, %v6093
        %v6095 = vpop.f32.mrb[0].mxu0
        %v6096 = vadd.f32 %v5746, %v6095
        %v6097 = vpop.f32.mrb[0].mxu0
        %v6098 = vadd.f32 %v5742, %v6097
        %v6099 = vpop.f32.mrb[0].mxu0
        %v6100 = vadd.f32 %v5746, %v6099
        %6101 = vdwg.mxu0
        %6102 = vst [vmem:[%s272] sm:$0xff] %v5944
        %6103 = vst [vmem:[%s272 + $0x8] sm:$0xff] %v5946
        %6104 = vst [vmem:[%s272 + $0x10] sm:$0xff] %v5948
        %6105 = vst [vmem:[%s272 + $0x18] sm:$0xff] %v5950
        %6106 = vst [vmem:[%s272 + $0x20] sm:$0xff] %v5954
        %6107 = vst [vmem:[%s272 + $0x28] sm:$0xff] %v5956
        %6108 = vst [vmem:[%s272 + $0x30] sm:$0xff] %v5958
        %6109 = vst [vmem:[%s272 + $0x38] sm:$0xff] %v5960
        %6110 = vst [vmem:[%s272 + $0x40] sm:$0xff] %v5964
        %6111 = vst [vmem:[%s272 + $0x48] sm:$0xff] %v5966
        %6112 = vst [vmem:[%s272 + $0x50] sm:$0xff] %v5968
        %6113 = vst [vmem:[%s272 + $0x58] sm:$0xff] %v5970
        %6114 = vst [vmem:[%s272 + $0x60] sm:$0xff] %v5974
        %6115 = vst [vmem:[%s272 + $0x68] sm:$0xff] %v5976
        %6116 = vst [vmem:[%s272 + $0x70] sm:$0xff] %v5978
        %6117 = vst [vmem:[%s272 + $0x78] sm:$0xff] %v5980
        %6118 = vst [vmem:[%s272 + $0x80] sm:$0xff] %v5984
        %6119 = vst [vmem:[%s272 + $0x88] sm:$0xff] %v5986
        %6120 = vst [vmem:[%s272 + $0x90] sm:$0xff] %v5988
        %6121 = vst [vmem:[%s272 + $0x98] sm:$0xff] %v5990
        %6122 = vst [vmem:[%s272 + $0xa0] sm:$0xff] %v5994
        %6123 = vst [vmem:[%s272 + $0xa8] sm:$0xff] %v5996
        %6124 = vst [vmem:[%s272 + $0xb0] sm:$0xff] %v5998
        %6125 = vst [vmem:[%s272 + $0xb8] sm:$0xff] %v6000
        %6126 = vst [vmem:[%s272 + $0xc0] sm:$0xff] %v6004
        %6127 = vst [vmem:[%s272 + $0xc8] sm:$0xff] %v6006
        %6128 = vst [vmem:[%s272 + $0xd0] sm:$0xff] %v6008
        %6129 = vst [vmem:[%s272 + $0xd8] sm:$0xff] %v6010
        %6130 = vst [vmem:[%s272 + $0xe0] sm:$0xff] %v6014
        %6131 = vst [vmem:[%s272 + $0xe8] sm:$0xff] %v6016
        %6132 = vst [vmem:[%s272 + $0xf0] sm:$0xff] %v6018
        %6133 = vst [vmem:[%s272 + $0xf8] sm:$0xff] %v6020
        %6134 = vst [vmem:[%s272 + $0x100] sm:$0xff] %v6024
        %6135 = vst [vmem:[%s272 + $0x108] sm:$0xff] %v6026
        %6136 = vst [vmem:[%s272 + $0x110] sm:$0xff] %v6028
        %6137 = vst [vmem:[%s272 + $0x118] sm:$0xff] %v6030
        %6138 = vst [vmem:[%s272 + $0x120] sm:$0xff] %v6034
        %6139 = vst [vmem:[%s272 + $0x128] sm:$0xff] %v6036
        %6140 = vst [vmem:[%s272 + $0x130] sm:$0xff] %v6038
        %6141 = vst [vmem:[%s272 + $0x138] sm:$0xff] %v6040
        %6142 = vst [vmem:[%s272 + $0x140] sm:$0xff] %v6044
        %6143 = vst [vmem:[%s272 + $0x148] sm:$0xff] %v6046
        %6144 = vst [vmem:[%s272 + $0x150] sm:$0xff] %v6048
        %6145 = vst [vmem:[%s272 + $0x158] sm:$0xff] %v6050
        %6146 = vst [vmem:[%s272 + $0x160] sm:$0xff] %v6054
        %6147 = vst [vmem:[%s272 + $0x168] sm:$0xff] %v6056
        %6148 = vst [vmem:[%s272 + $0x170] sm:$0xff] %v6058
        %6149 = vst [vmem:[%s272 + $0x178] sm:$0xff] %v6060
        %6150 = vst [vmem:[%s272 + $0x180] sm:$0xff] %v6064
        %6151 = vst [vmem:[%s272 + $0x188] sm:$0xff] %v6066
        %6152 = vst [vmem:[%s272 + $0x190] sm:$0xff] %v6068
        %6153 = vst [vmem:[%s272 + $0x198] sm:$0xff] %v6070
        %6154 = vst [vmem:[%s272 + $0x1a0] sm:$0xff] %v6074
        %6155 = vst [vmem:[%s272 + $0x1a8] sm:$0xff] %v6076
        %6156 = vst [vmem:[%s272 + $0x1b0] sm:$0xff] %v6078
        %6157 = vst [vmem:[%s272 + $0x1b8] sm:$0xff] %v6080
        %6158 = vst [vmem:[%s272 + $0x1c0] sm:$0xff] %v6084
        %6159 = vst [vmem:[%s272 + $0x1c8] sm:$0xff] %v6086
        %6160 = vst [vmem:[%s272 + $0x1d0] sm:$0xff] %v6088
        %6161 = vst [vmem:[%s272 + $0x1d8] sm:$0xff] %v6090
        %6162 = vst [vmem:[%s272 + $0x1e0] sm:$0xff] %v6094
        %6163 = vst [vmem:[%s272 + $0x1e8] sm:$0xff] %v6096
        %6164 = vst [vmem:[%s272 + $0x1f0] sm:$0xff] %v6098
        %6165 = vst [vmem:[%s272 + $0x1f8] sm:$0xff] %v6100
        %s6166 = sand.u32 %s141, 1
        %s6167 = scalar_lea.sflag [#allocation6], %s6166
        %s6168 = sand.u32 %s141, 1
        %s6169 = smul.addr %s6168, 512
        %s6170 = scalar_lea.vmem [#allocation10], %s6169
        // Predicated region
        $region53: #{tpu_custom_call.1} parent=39 // pred_check
          %p6171 = pneg %p151
        $region54: #{tpu_custom_call.1} parent=39 // pred_check_branch
          %6173 = sbr.rel (%p6171) target = $region56
        $region55: #{tpu_custom_call.1} parent=39 // pred_region
          %s6174 = smul.u32 2, %s23
          %s6176 = ssub.s32 8192, 8192
          %6177 = vsyncadd %s6167, %s6176
          %s6178 = smul.addr %s6174, 32
          %s6179 = smul.addr %s6178, 128
          %s6180 = scalar_lea.hbm %s5, %s6179
          %s6181 = sshll.u32 %s6170, 4
          %s6182 = int_to_ptr.vmem [resolvable:$true] %s6181
          %6187 = dma.vmem_to_hbm [thread:$0]  %s6182, 8192, %s6180, %s6167, 256, 256, 16
        $region56: #{tpu_custom_call.1} parent=39 // pred_fallthru
          _
      $region40: #{tpu_custom_call.1} parent=5 // pred_fallthru
        _
      %p6188 = scmp.le.s32.totalorder 2, %s18
      // Predicated region
      $region57: #{tpu_custom_call.1} parent=5 // pred_check
        %p6189 = pneg %p6188
      $region58: #{tpu_custom_call.1} parent=5 // pred_check_branch
        %6191 = sbr.rel (%p6189) target = $region60
      $region59: #{tpu_custom_call.1} parent=5 // pred_region
        %s6192 = ssub.s32 %s18, 2
        // Predicated region
        $region61: #{tpu_custom_call.1} parent=59 // pred_check
          %p6193 = pneg %p157
        $region62: #{tpu_custom_call.1} parent=59 // pred_check_branch
          %6195 = sbr.rel (%p6193) target = $region64
        $region63: #{tpu_custom_call.1} parent=59 // pred_region
          %s6196 = sand.u32 %s142, 1
          %s6197 = scalar_lea.sflag [#allocation6], %s6196
          %s6198 = sand.u32 %s142, 1
          %s6199 = smul.addr %s6198, 512
          %s6200 = scalar_lea.vmem [#allocation10], %s6199
          %6201 = dma.done %s6197, 8192
        $region64: #{tpu_custom_call.1} parent=59 // pred_fallthru
          _
      $region60: #{tpu_custom_call.1} parent=5 // pred_fallthru
        _
    $region6: #{tpu_custom_call.1} parent=1 // loop_footer
      %s22 = sadd.s32 1, %s18
    $region7: #{tpu_custom_call.1} parent=1 // loop_footer_branch
      %17 = sbr.rel target = $region3
    $region8: #{tpu_custom_call.1} parent=1 // loop_exit
      _
    %6202 = vsyncpa [#allocation5], 1
    %s6203 = scalar_lea.sflag [#allocation5], 1
    %6204 = vsyncpa %s6203, 1
    %6205 = vsyncpa [#allocation8], 1
    %6206 = vsyncpa [#allocation6], 1
    %s6207 = scalar_lea.sflag [#allocation6], 1
    %6208 = vsyncpa %s6207, 1

</llo_original>
